<compile_context>
chip_gen: v7x
topology: tpu7x:2x2x1
jax: 0.10.0
libtpu: 0.0.40
codegen_flags: <defaults>
</compile_context>

<pallas_src>
import numpy as np

import jax
import jax.numpy as jnp
from jax.experimental import pallas as pl
from jax.experimental.pallas import tpu as pltpu


def _round_up(x, m):
    return ((x + m - 1) // m) * m


# ---------------------------------------------------------------------------
# Fused forward-pass kernel (one batch tile per grid step)
# ---------------------------------------------------------------------------
def _mnist_net_kernel(x_ref, a1_ref, b1_ref, a2_ref, b2_ref, w3_ref, b3_ref,
                      w4_ref, b4_ref, o_ref, pool1_ref, pool2_ref):
    f32 = jnp.float32
    bf16 = jnp.bfloat16

    a1 = a1_ref[...]   # (140, 256) bf16  conv1 K-stacked banded weight
    a2 = a2_ref[...]   # (640, 256) bf16  conv2 K-stacked weight
    w3 = w3_ref[...]   # (512, 50)  bf16  fc1 (NCHW flatten folded in)
    w4 = w4_ref[...]   # (50, 128)  bf16  fc2 (lane-padded to 128)
    b1 = b1_ref[...]   # (1, 256) f32
    b2 = b2_ref[...]   # (1, 256) f32
    b3 = b3_ref[...]   # (1, 50)  f32
    b4 = b4_ref[...]   # (1, 128) f32   (padded lanes = -1e30)

    # ---- conv1 + bias, 2x2 max-pool, relu --------------------------------
    # Pooled conv1 row `pr` is stored at slab lanes [128*pr, 128*(pr+1)).
    # Column pooling = max of the two 128-lane halves of the matmul output.
    for pr in range(12):
        r0 = 2 * pr
        lhs0 = x_ref[:, 28 * r0: 28 * r0 + 140]           # conv1 row 2*pr
        lhs1 = x_ref[:, 28 * r0 + 28: 28 * r0 + 168]      # conv1 row 2*pr + 1
        y0 = jnp.dot(lhs0, a1, preferred_element_type=f32) + b1
        y1 = jnp.dot(lhs1, a1, preferred_element_type=f32) + b1
        p0 = jnp.maximum(y0[:, :128], y0[:, 128:])        # column pool
        p1 = jnp.maximum(y1[:, :128], y1[:, 128:])
        pool1_ref[:, 128 * pr: 128 * (pr + 1)] = (
            jnp.maximum(jnp.maximum(p0, p1), 0.0).astype(bf16))   # row pool + relu

    # ---- conv2 + bias, 2x2 max-pool, relu (Dropout2d = identity, eval) ----
    # Each conv2 output row reads a contiguous, 128-aligned 640-lane slice of
    # the pool1 slab (pooled rows j2 .. j2+4) in ONE K=640 matmul.
    for r2 in range(4):
        halves = []
        for e in range(2):
            j2 = 2 * r2 + e
            lhs = pool1_ref[:, 128 * j2: 128 * j2 + 640]
            y = jnp.dot(lhs, a2, preferred_element_type=f32) + b2
            halves.append(jnp.maximum(y[:, :128], y[:, 128:]))    # column pool
        pool2_ref[:, 128 * r2: 128 * (r2 + 1)] = (
            jnp.maximum(jnp.maximum(halves[0], halves[1]), 0.0).astype(bf16))

    # ---- fc1 + relu (single K=512 matmul; F.dropout(training=False) = id) --
    h1 = jnp.maximum(
        jnp.dot(pool2_ref[...], w3, preferred_element_type=f32) + b3, 0.0)

    # ---- fc2 + log_softmax (lane-dense 128-wide store) --------------------
    # Padded logits carry a -1e30 bias so the max / sum only "see" the 10 real
    # classes; the wrapper slices [:, :10].
    logits = jnp.dot(h1.astype(bf16), w4, preferred_element_type=f32) + b4
    mx = jnp.max(logits, axis=-1, keepdims=True)
    sh = logits - mx
    lse = jnp.log(jnp.sum(jnp.exp(sh), axis=-1, keepdims=True))
    o_ref[...] = (sh - lse).astype(o_ref.dtype)


def _net_pallas(x_flat, prep, block_n):
    n_pad = x_flat.shape[0]
    grid = (n_pad // block_n,)
    return pl.pallas_call(
        _mnist_net_kernel,
        out_shape=jax.ShapeDtypeStruct((n_pad, 128), jnp.float32),
        grid=grid,
        in_specs=[
            pl.BlockSpec((block_n, 784), lambda i: (i, 0)),   # image slab (bf16)
            pl.BlockSpec((140, 256), lambda i: (0, 0)),       # a1
            pl.BlockSpec((1, 256), lambda i: (0, 0)),         # b1
            pl.BlockSpec((640, 256), lambda i: (0, 0)),       # a2
            pl.BlockSpec((1, 256), lambda i: (0, 0)),         # b2
            pl.BlockSpec((512, 50), lambda i: (0, 0)),        # w3
            pl.BlockSpec((1, 50), lambda i: (0, 0)),          # b3
            pl.BlockSpec((50, 128), lambda i: (0, 0)),        # w4
            pl.BlockSpec((1, 128), lambda i: (0, 0)),         # b4
        ],
        out_specs=pl.BlockSpec((block_n, 128), lambda i: (i, 0)),
        scratch_shapes=[
            pltpu.VMEM((block_n, 12 * 128), jnp.bfloat16),    # pool1 slab
            pltpu.VMEM((block_n, 4 * 128), jnp.bfloat16),     # pool2 slab
        ],
        compiler_params=pltpu.CompilerParams(
            dimension_semantics=("parallel",),
            vmem_limit_bytes=32 * 1024 * 1024,
        ),
    )(x_flat, prep["a1"], prep["b1"], prep["a2"], prep["b2"],
      prep["w3"], prep["b3"], prep["w4"], prep["b4"])


# ---------------------------------------------------------------------------
# One-time parameter preparation: folds conv banding, pooling-phase layout,
# NCHW flatten and all transposes into K-stacked matrices; casts to bf16.
# ---------------------------------------------------------------------------
def prepare_params(params):
    w1 = np.asarray(jax.device_get(params["conv1_w"]), np.float32)   # (10, 1, 5, 5)
    b1 = np.asarray(jax.device_get(params["conv1_b"]), np.float32)
    w2 = np.asarray(jax.device_get(params["conv2_w"]), np.float32)   # (20, 10, 5, 5)
    b2 = np.asarray(jax.device_get(params["conv2_b"]), np.float32)
    wf1 = np.asarray(jax.device_get(params["fc1_w"]), np.float32)    # (50, 320)
    bf1 = np.asarray(jax.device_get(params["fc1_b"]), np.float32)
    wf2 = np.asarray(jax.device_get(params["fc2_w"]), np.float32)    # (10, 50)
    bf2 = np.asarray(jax.device_get(params["fc2_b"]), np.float32)

    # conv1: (140, 256).  LHS lane l = 28*ki + (jj+kj) inside the 5-row window
    # starting at conv1 row R (image lanes 28*R .. 28*R+139).  Output column
    # for conv1 col jj = 2v+f, channel c:  f*128 + v*10 + c  -> the two column
    # pooling phases are the two 128-lane halves.
    a1 = np.zeros((140, 256), np.float32)
    b1r = np.zeros((1, 256), np.float32)
    for jj in range(24):
        v, f = jj // 2, jj % 2
        col = f * 128 + v * 10
        b1r[0, col:col + 10] = b1
        for ki in range(5):
            for kj in range(5):
                a1[28 * ki + jj + kj, col:col + 10] = w1[:, 0, ki, kj]

    # conv2: (640, 256).  LHS lane = 128*ki + pc*10 + ic (pool1 slab layout:
    # pooled row offset 128*ki inside the 5-row window, pooled col pc, chan ic).
    # Output column for conv2 col jcol = 2*jh+par, channel oc: par*128+jh*20+oc.
    a2 = np.zeros((640, 256), np.float32)
    b2r = np.zeros((1, 256), np.float32)
    for jcol in range(8):
        jh, par = jcol // 2, jcol % 2
        col = par * 128 + jh * 20
        b2r[0, col:col + 20] = b2
        for ki in range(5):
            for kj in range(5):
                row = 128 * ki + (jcol + kj) * 10
                a2[row:row + 10, col:col + 20] = w2[:, :, ki, kj].T   # (ic, oc)

    # fc1: (512, 50).  pool2 slab lane = 128*r2 + jh*20 + oc; PyTorch NCHW
    # view(-1, 320) flat index = oc*16 + hh*4 + ww with hh = r2, ww = jh.
    w3 = np.zeros((512, 50), np.float32)
    for r2 in range(4):
        for jh in range(4):
            for oc in range(20):
                w3[128 * r2 + jh * 20 + oc, :] = wf1[:, oc * 16 + r2 * 4 + jh]

    # fc2: lane-pad to 128; padded logits biased to -1e30 (ignored by softmax).
    w4 = np.zeros((50, 128), np.float32)
    w4[:, :10] = wf2.T
    b4 = np.full((1, 128), -1e30, np.float32)
    b4[0, :10] = bf2

    return {
        "a1": jnp.asarray(a1, jnp.bfloat16),
        "b1": jnp.asarray(b1r, jnp.float32),
        "a2": jnp.asarray(a2, jnp.bfloat16),
        "b2": jnp.asarray(b2r, jnp.float32),
        "w3": jnp.asarray(w3, jnp.bfloat16),
        "b3": jnp.asarray(bf1.reshape(1, 50), jnp.float32),
        "w4": jnp.asarray(w4, jnp.bfloat16),
        "b4": jnp.asarray(b4, jnp.float32),
    }


# ---------------------------------------------------------------------------
# Forward pass (== Net.forward at inference)
# ---------------------------------------------------------------------------
def net_forward(prep, x_nchw, *, block_n=256):
    n = x_nchw.shape[0]
    # Batch tile: large enough to fill the MXU M dimension, but capped so the
    # 1-D grid has >=2 tiles when the batch allows it (v7x has 2 TensorCores).
    bn = min(block_n, max(8, _round_up(-(-n // 2), 8)))
    n_pad = _round_up(n, bn)
    # Lane-major (B, 784) bf16 slab: lane = 28*row + col (no wrapper transpose).
    x = x_nchw.reshape(n, 28 * 28).astype(jnp.bfloat16)
    if n_pad != n:
        x = jnp.pad(x, ((0, n_pad - n), (0, 0)))
    out = _net_pallas(x, prep, bn)
    return out[:n, :10]


# ---------------------------------------------------------------------------
# Parameters (deterministic, PyTorch-default-style uniform init)
# ---------------------------------------------------------------------------
def init_params(key):
    ks = jax.random.split(key, 8)

    def u(k, shape, fan_in):
        bound = 1.0 / jnp.sqrt(jnp.float32(fan_in))
        return jax.random.uniform(k, shape, jnp.float32, -bound, bound)

    return {
        "conv1_w": u(ks[0], (10, 1, 5, 5), 1 * 5 * 5),
        "conv1_b": u(ks[1], (10,), 1 * 5 * 5),
        "conv2_w": u(ks[2], (20, 10, 5, 5), 10 * 5 * 5),
        "conv2_b": u(ks[3], (20,), 10 * 5 * 5),
        "fc1_w": u(ks[4], (50, 320), 320),   # PyTorch Linear: (out, in)
        "fc1_b": u(ks[5], (50,), 320),
        "fc2_w": u(ks[6], (10, 50), 50),
        "fc2_b": u(ks[7], (10,), 50),
    }


# Pure-JAX reference (f32, XLA) used only for a correctness self-check.
def _reference_forward(params, x_nchw):
    dn = ("NCHW", "OIHW", "NCHW")
    y = jax.lax.conv_general_dilated(x_nchw.astype(jnp.float32), params["conv1_w"],
                                     (1, 1), "VALID", dimension_numbers=dn)
    y = y + params["conv1_b"][None, :, None, None]
    y = jax.lax.reduce_window(y, -jnp.inf, jax.lax.max, (1, 1, 2, 2), (1, 1, 2, 2), "VALID")
    y = jnp.maximum(y, 0.0)
    y = jax.lax.conv_general_dilated(y, params["conv2_w"], (1, 1), "VALID",
                                     dimension_numbers=dn)
    y = y + params["conv2_b"][None, :, None, None]
    y = jax.lax.reduce_window(y, -jnp.inf, jax.lax.max, (1, 1, 2, 2), (1, 1, 2, 2), "VALID")
    y = jnp.maximum(y, 0.0)
    y = y.reshape(y.shape[0], 320)
    y = jnp.maximum(y @ params["fc1_w"].T + params["fc1_b"], 0.0)
    y = y @ params["fc2_w"].T + params["fc2_b"]
    return jax.nn.log_softmax(y, axis=-1)


if __name__ == "__main__":
    key = jax.random.PRNGKey(0)
    pkey, xkey = jax.random.split(key)
    params = init_params(pkey)
    prep = prepare_params(params)

    fwd = jax.jit(net_forward)
    ref_fn = jax.jit(_reference_forward)

    # Small batch: single grid tile + batch-padding path.
    x_small = jax.random.normal(xkey, (2, 1, 28, 28), jnp.float32)
    out_small = jax.block_until_ready(fwd(prep, x_small))
    assert out_small.shape == (2, 10)
    assert bool(jnp.all(jnp.isfinite(out_small)))
    assert bool(jnp.allclose(jnp.exp(out_small).sum(-1), 1.0, atol=1e-3))
    ref_small = ref_fn(params, x_small)
    assert bool(jnp.max(jnp.abs(out_small - ref_small)) < 5e-2)

    # Multi-tile batch: exercises the batch index_map across >=2 grid steps.
    x_multi = jax.random.normal(jax.random.PRNGKey(1), (20, 1, 28, 28), jnp.float32)
    out_multi = jax.block_until_ready(fwd(prep, x_multi))
    ref_multi = ref_fn(params, x_multi)
    assert out_multi.shape == (20, 10)
    assert bool(jnp.all(jnp.isfinite(out_multi)))
    assert bool(jnp.max(jnp.abs(out_multi - ref_multi)) < 5e-2)

    print("KERNEL_OK")
</pallas_src>

<mosaic_0001>
module attributes {stable_mosaic.version = 11 : i64} {
  func.func @_mnist_net_kernel(%arg0: i32, %arg1: memref<8x784xbf16, #tpu.memory_space<vmem>>, %arg2: memref<140x256xbf16, #tpu.memory_space<vmem>>, %arg3: memref<1x256xf32, #tpu.memory_space<vmem>>, %arg4: memref<640x256xbf16, #tpu.memory_space<vmem>>, %arg5: memref<1x256xf32, #tpu.memory_space<vmem>>, %arg6: memref<512x50xbf16, #tpu.memory_space<vmem>>, %arg7: memref<1x50xf32, #tpu.memory_space<vmem>>, %arg8: memref<50x128xbf16, #tpu.memory_space<vmem>>, %arg9: memref<1x128xf32, #tpu.memory_space<vmem>>, %arg10: memref<8x128xf32, #tpu.memory_space<vmem>>, %arg11: memref<8x1536xbf16, #tpu.memory_space<vmem>>, %arg12: memref<8x512xbf16, #tpu.memory_space<vmem>>) attributes {dimension_semantics = [#tpu.dimension_semantics<parallel>], iteration_bounds = array<i64: 1>, scalar_prefetch = 0 : i64, scratch_operands = 2 : i64, tpu.core_type = #tpu.core_type<tc>, window_params = [{transform_indices = @transform_0, window_bounds = array<i64: 8, 784>}, {pipeline_mode = #tpu.pipeline_mode<synchronous>, transform_indices = @transform_1, window_bounds = array<i64: 140, 256>}, {pipeline_mode = #tpu.pipeline_mode<synchronous>, transform_indices = @transform_2, window_bounds = array<i64: 1, 256>}, {pipeline_mode = #tpu.pipeline_mode<synchronous>, transform_indices = @transform_3, window_bounds = array<i64: 640, 256>}, {pipeline_mode = #tpu.pipeline_mode<synchronous>, transform_indices = @transform_4, window_bounds = array<i64: 1, 256>}, {pipeline_mode = #tpu.pipeline_mode<synchronous>, transform_indices = @transform_5, window_bounds = array<i64: 512, 50>}, {pipeline_mode = #tpu.pipeline_mode<synchronous>, transform_indices = @transform_6, window_bounds = array<i64: 1, 50>}, {pipeline_mode = #tpu.pipeline_mode<synchronous>, transform_indices = @transform_7, window_bounds = array<i64: 50, 128>}, {pipeline_mode = #tpu.pipeline_mode<synchronous>, transform_indices = @transform_8, window_bounds = array<i64: 1, 128>}, {transform_indices = @transform_9, window_bounds = array<i64: 8, 128>}]} {
    %c0 = arith.constant 0 : index
    %c0_0 = arith.constant 0 : index
    %0 = vector.load %arg2[%c0, %c0_0] : memref<140x256xbf16, #tpu.memory_space<vmem>>, vector<140x256xbf16>
    %c0_1 = arith.constant 0 : index
    %c0_2 = arith.constant 0 : index
    %1 = vector.load %arg4[%c0_1, %c0_2] : memref<640x256xbf16, #tpu.memory_space<vmem>>, vector<640x256xbf16>
    %c0_3 = arith.constant 0 : index
    %c0_4 = arith.constant 0 : index
    %2 = vector.load %arg6[%c0_3, %c0_4] : memref<512x50xbf16, #tpu.memory_space<vmem>>, vector<512x50xbf16>
    %c0_5 = arith.constant 0 : index
    %c0_6 = arith.constant 0 : index
    %3 = vector.load %arg8[%c0_5, %c0_6] : memref<50x128xbf16, #tpu.memory_space<vmem>>, vector<50x128xbf16>
    %c0_7 = arith.constant 0 : index
    %c0_8 = arith.constant 0 : index
    %4 = vector.load %arg3[%c0_7, %c0_8] : memref<1x256xf32, #tpu.memory_space<vmem>>, vector<1x256xf32>
    %c0_9 = arith.constant 0 : index
    %c0_10 = arith.constant 0 : index
    %5 = vector.load %arg5[%c0_9, %c0_10] : memref<1x256xf32, #tpu.memory_space<vmem>>, vector<1x256xf32>
    %c0_11 = arith.constant 0 : index
    %c0_12 = arith.constant 0 : index
    %6 = vector.load %arg7[%c0_11, %c0_12] : memref<1x50xf32, #tpu.memory_space<vmem>>, vector<1x50xf32>
    %c0_13 = arith.constant 0 : index
    %c0_14 = arith.constant 0 : index
    %7 = vector.load %arg9[%c0_13, %c0_14] : memref<1x128xf32, #tpu.memory_space<vmem>>, vector<1x128xf32>
    %c0_15 = arith.constant 0 : index
    %c0_16 = arith.constant 0 : index
    %8 = vector.load %arg1[%c0_15, %c0_16] : memref<8x784xbf16, #tpu.memory_space<vmem>>, vector<8x140xbf16>
    %c0_17 = arith.constant 0 : index
    %c28 = arith.constant 28 : index
    %9 = vector.load %arg1[%c0_17, %c28] : memref<8x784xbf16, #tpu.memory_space<vmem>>, vector<8x140xbf16>
    %cst = arith.constant dense<0.000000e+00> : vector<8x256xf32>
    %10 = tpu.matmul %8, %0, %cst {dimension_numbers = #tpu.dot_dimension_numbers<[1], [0], [0], [1], [0, 0, 1, 1], [], []>} : vector<8x140xbf16>, vector<140x256xbf16>, vector<8x256xf32> -> vector<8x256xf32>
    %11 = vector.broadcast %4 : vector<1x256xf32> to vector<8x256xf32>
    %12 = arith.addf %10, %11 : vector<8x256xf32>
    %cst_18 = arith.constant dense<0.000000e+00> : vector<8x256xf32>
    %13 = tpu.matmul %9, %0, %cst_18 {dimension_numbers = #tpu.dot_dimension_numbers<[1], [0], [0], [1], [0, 0, 1, 1], [], []>} : vector<8x140xbf16>, vector<140x256xbf16>, vector<8x256xf32> -> vector<8x256xf32>
    %14 = vector.broadcast %4 : vector<1x256xf32> to vector<8x256xf32>
    %15 = arith.addf %13, %14 : vector<8x256xf32>
    %16 = vector.extract_strided_slice %12 {offsets = [0, 0], sizes = [8, 128], strides = [1, 1]} : vector<8x256xf32> to vector<8x128xf32>
    %17 = vector.extract_strided_slice %12 {offsets = [0, 128], sizes = [8, 128], strides = [1, 1]} : vector<8x256xf32> to vector<8x128xf32>
    %18 = arith.maximumf %16, %17 : vector<8x128xf32>
    %19 = vector.extract_strided_slice %15 {offsets = [0, 0], sizes = [8, 128], strides = [1, 1]} : vector<8x256xf32> to vector<8x128xf32>
    %20 = vector.extract_strided_slice %15 {offsets = [0, 128], sizes = [8, 128], strides = [1, 1]} : vector<8x256xf32> to vector<8x128xf32>
    %21 = arith.maximumf %19, %20 : vector<8x128xf32>
    %22 = arith.maximumf %18, %21 : vector<8x128xf32>
    %cst_19 = arith.constant 0.000000e+00 : f32
    %23 = vector.broadcast %cst_19 : f32 to vector<8x128xf32>
    %24 = arith.maximumf %22, %23 : vector<8x128xf32>
    %25 = arith.truncf %24 : vector<8x128xf32> to vector<8x128xbf16>
    %c0_20 = arith.constant 0 : index
    %c0_21 = arith.constant 0 : index
    %26 = vector.load %arg11[%c0_20, %c0_21] : memref<8x1536xbf16, #tpu.memory_space<vmem>>, vector<8x128xbf16>
    tpu.vector_store %arg11[%c0_20, %c0_21], %25 {strides = array<i32>} : memref<8x1536xbf16, #tpu.memory_space<vmem>>, vector<8x128xbf16>,
    %c0_22 = arith.constant 0 : index
    %c56 = arith.constant 56 : index
    %27 = vector.load %arg1[%c0_22, %c56] : memref<8x784xbf16, #tpu.memory_space<vmem>>, vector<8x140xbf16>
    %c0_23 = arith.constant 0 : index
    %c84 = arith.constant 84 : index
    %28 = vector.load %arg1[%c0_23, %c84] : memref<8x784xbf16, #tpu.memory_space<vmem>>, vector<8x140xbf16>
    %cst_24 = arith.constant dense<0.000000e+00> : vector<8x256xf32>
    %29 = tpu.matmul %27, %0, %cst_24 {dimension_numbers = #tpu.dot_dimension_numbers<[1], [0], [0], [1], [0, 0, 1, 1], [], []>} : vector<8x140xbf16>, vector<140x256xbf16>, vector<8x256xf32> -> vector<8x256xf32>
    %30 = vector.broadcast %4 : vector<1x256xf32> to vector<8x256xf32>
    %31 = arith.addf %29, %30 : vector<8x256xf32>
    %cst_25 = arith.constant dense<0.000000e+00> : vector<8x256xf32>
    %32 = tpu.matmul %28, %0, %cst_25 {dimension_numbers = #tpu.dot_dimension_numbers<[1], [0], [0], [1], [0, 0, 1, 1], [], []>} : vector<8x140xbf16>, vector<140x256xbf16>, vector<8x256xf32> -> vector<8x256xf32>
    %33 = vector.broadcast %4 : vector<1x256xf32> to vector<8x256xf32>
    %34 = arith.addf %32, %33 : vector<8x256xf32>
    %35 = vector.extract_strided_slice %31 {offsets = [0, 0], sizes = [8, 128], strides = [1, 1]} : vector<8x256xf32> to vector<8x128xf32>
    %36 = vector.extract_strided_slice %31 {offsets = [0, 128], sizes = [8, 128], strides = [1, 1]} : vector<8x256xf32> to vector<8x128xf32>
    %37 = arith.maximumf %35, %36 : vector<8x128xf32>
    %38 = vector.extract_strided_slice %34 {offsets = [0, 0], sizes = [8, 128], strides = [1, 1]} : vector<8x256xf32> to vector<8x128xf32>
    %39 = vector.extract_strided_slice %34 {offsets = [0, 128], sizes = [8, 128], strides = [1, 1]} : vector<8x256xf32> to vector<8x128xf32>
    %40 = arith.maximumf %38, %39 : vector<8x128xf32>
    %41 = arith.maximumf %37, %40 : vector<8x128xf32>
    %cst_26 = arith.constant 0.000000e+00 : f32
    %42 = vector.broadcast %cst_26 : f32 to vector<8x128xf32>
    %43 = arith.maximumf %41, %42 : vector<8x128xf32>
    %44 = arith.truncf %43 : vector<8x128xf32> to vector<8x128xbf16>
    %c0_27 = arith.constant 0 : index
    %c128 = arith.constant 128 : index
    %45 = vector.load %arg11[%c0_27, %c128] : memref<8x1536xbf16, #tpu.memory_space<vmem>>, vector<8x128xbf16>
    tpu.vector_store %arg11[%c0_27, %c128], %44 {strides = array<i32>} : memref<8x1536xbf16, #tpu.memory_space<vmem>>, vector<8x128xbf16>,
    %c0_28 = arith.constant 0 : index
    %c112 = arith.constant 112 : index
    %46 = vector.load %arg1[%c0_28, %c112] : memref<8x784xbf16, #tpu.memory_space<vmem>>, vector<8x140xbf16>
    %c0_29 = arith.constant 0 : index
    %c140 = arith.constant 140 : index
    %47 = vector.load %arg1[%c0_29, %c140] : memref<8x784xbf16, #tpu.memory_space<vmem>>, vector<8x140xbf16>
    %cst_30 = arith.constant dense<0.000000e+00> : vector<8x256xf32>
    %48 = tpu.matmul %46, %0, %cst_30 {dimension_numbers = #tpu.dot_dimension_numbers<[1], [0], [0], [1], [0, 0, 1, 1], [], []>} : vector<8x140xbf16>, vector<140x256xbf16>, vector<8x256xf32> -> vector<8x256xf32>
    %49 = vector.broadcast %4 : vector<1x256xf32> to vector<8x256xf32>
    %50 = arith.addf %48, %49 : vector<8x256xf32>
    %cst_31 = arith.constant dense<0.000000e+00> : vector<8x256xf32>
    %51 = tpu.matmul %47, %0, %cst_31 {dimension_numbers = #tpu.dot_dimension_numbers<[1], [0], [0], [1], [0, 0, 1, 1], [], []>} : vector<8x140xbf16>, vector<140x256xbf16>, vector<8x256xf32> -> vector<8x256xf32>
    %52 = vector.broadcast %4 : vector<1x256xf32> to vector<8x256xf32>
    %53 = arith.addf %51, %52 : vector<8x256xf32>
    %54 = vector.extract_strided_slice %50 {offsets = [0, 0], sizes = [8, 128], strides = [1, 1]} : vector<8x256xf32> to vector<8x128xf32>
    %55 = vector.extract_strided_slice %50 {offsets = [0, 128], sizes = [8, 128], strides = [1, 1]} : vector<8x256xf32> to vector<8x128xf32>
    %56 = arith.maximumf %54, %55 : vector<8x128xf32>
    %57 = vector.extract_strided_slice %53 {offsets = [0, 0], sizes = [8, 128], strides = [1, 1]} : vector<8x256xf32> to vector<8x128xf32>
    %58 = vector.extract_strided_slice %53 {offsets = [0, 128], sizes = [8, 128], strides = [1, 1]} : vector<8x256xf32> to vector<8x128xf32>
    %59 = arith.maximumf %57, %58 : vector<8x128xf32>
    %60 = arith.maximumf %56, %59 : vector<8x128xf32>
    %cst_32 = arith.constant 0.000000e+00 : f32
    %61 = vector.broadcast %cst_32 : f32 to vector<8x128xf32>
    %62 = arith.maximumf %60, %61 : vector<8x128xf32>
    %63 = arith.truncf %62 : vector<8x128xf32> to vector<8x128xbf16>
    %c0_33 = arith.constant 0 : index
    %c256 = arith.constant 256 : index
    %64 = vector.load %arg11[%c0_33, %c256] : memref<8x1536xbf16, #tpu.memory_space<vmem>>, vector<8x128xbf16>
    tpu.vector_store %arg11[%c0_33, %c256], %63 {strides = array<i32>} : memref<8x1536xbf16, #tpu.memory_space<vmem>>, vector<8x128xbf16>,
    %c0_34 = arith.constant 0 : index
    %c168 = arith.constant 168 : index
    %65 = vector.load %arg1[%c0_34, %c168] : memref<8x784xbf16, #tpu.memory_space<vmem>>, vector<8x140xbf16>
    %c0_35 = arith.constant 0 : index
    %c196 = arith.constant 196 : index
    %66 = vector.load %arg1[%c0_35, %c196] : memref<8x784xbf16, #tpu.memory_space<vmem>>, vector<8x140xbf16>
    %cst_36 = arith.constant dense<0.000000e+00> : vector<8x256xf32>
    %67 = tpu.matmul %65, %0, %cst_36 {dimension_numbers = #tpu.dot_dimension_numbers<[1], [0], [0], [1], [0, 0, 1, 1], [], []>} : vector<8x140xbf16>, vector<140x256xbf16>, vector<8x256xf32> -> vector<8x256xf32>
    %68 = vector.broadcast %4 : vector<1x256xf32> to vector<8x256xf32>
    %69 = arith.addf %67, %68 : vector<8x256xf32>
    %cst_37 = arith.constant dense<0.000000e+00> : vector<8x256xf32>
    %70 = tpu.matmul %66, %0, %cst_37 {dimension_numbers = #tpu.dot_dimension_numbers<[1], [0], [0], [1], [0, 0, 1, 1], [], []>} : vector<8x140xbf16>, vector<140x256xbf16>, vector<8x256xf32> -> vector<8x256xf32>
    %71 = vector.broadcast %4 : vector<1x256xf32> to vector<8x256xf32>
    %72 = arith.addf %70, %71 : vector<8x256xf32>
    %73 = vector.extract_strided_slice %69 {offsets = [0, 0], sizes = [8, 128], strides = [1, 1]} : vector<8x256xf32> to vector<8x128xf32>
    %74 = vector.extract_strided_slice %69 {offsets = [0, 128], sizes = [8, 128], strides = [1, 1]} : vector<8x256xf32> to vector<8x128xf32>
    %75 = arith.maximumf %73, %74 : vector<8x128xf32>
    %76 = vector.extract_strided_slice %72 {offsets = [0, 0], sizes = [8, 128], strides = [1, 1]} : vector<8x256xf32> to vector<8x128xf32>
    %77 = vector.extract_strided_slice %72 {offsets = [0, 128], sizes = [8, 128], strides = [1, 1]} : vector<8x256xf32> to vector<8x128xf32>
    %78 = arith.maximumf %76, %77 : vector<8x128xf32>
    %79 = arith.maximumf %75, %78 : vector<8x128xf32>
    %cst_38 = arith.constant 0.000000e+00 : f32
    %80 = vector.broadcast %cst_38 : f32 to vector<8x128xf32>
    %81 = arith.maximumf %79, %80 : vector<8x128xf32>
    %82 = arith.truncf %81 : vector<8x128xf32> to vector<8x128xbf16>
    %c0_39 = arith.constant 0 : index
    %c384 = arith.constant 384 : index
    %83 = vector.load %arg11[%c0_39, %c384] : memref<8x1536xbf16, #tpu.memory_space<vmem>>, vector<8x128xbf16>
    tpu.vector_store %arg11[%c0_39, %c384], %82 {strides = array<i32>} : memref<8x1536xbf16, #tpu.memory_space<vmem>>, vector<8x128xbf16>,
    %c0_40 = arith.constant 0 : index
    %c224 = arith.constant 224 : index
    %84 = vector.load %arg1[%c0_40, %c224] : memref<8x784xbf16, #tpu.memory_space<vmem>>, vector<8x140xbf16>
    %c0_41 = arith.constant 0 : index
    %c252 = arith.constant 252 : index
    %85 = vector.load %arg1[%c0_41, %c252] : memref<8x784xbf16, #tpu.memory_space<vmem>>, vector<8x140xbf16>
    %cst_42 = arith.constant dense<0.000000e+00> : vector<8x256xf32>
    %86 = tpu.matmul %84, %0, %cst_42 {dimension_numbers = #tpu.dot_dimension_numbers<[1], [0], [0], [1], [0, 0, 1, 1], [], []>} : vector<8x140xbf16>, vector<140x256xbf16>, vector<8x256xf32> -> vector<8x256xf32>
    %87 = vector.broadcast %4 : vector<1x256xf32> to vector<8x256xf32>
    %88 = arith.addf %86, %87 : vector<8x256xf32>
    %cst_43 = arith.constant dense<0.000000e+00> : vector<8x256xf32>
    %89 = tpu.matmul %85, %0, %cst_43 {dimension_numbers = #tpu.dot_dimension_numbers<[1], [0], [0], [1], [0, 0, 1, 1], [], []>} : vector<8x140xbf16>, vector<140x256xbf16>, vector<8x256xf32> -> vector<8x256xf32>
    %90 = vector.broadcast %4 : vector<1x256xf32> to vector<8x256xf32>
    %91 = arith.addf %89, %90 : vector<8x256xf32>
    %92 = vector.extract_strided_slice %88 {offsets = [0, 0], sizes = [8, 128], strides = [1, 1]} : vector<8x256xf32> to vector<8x128xf32>
    %93 = vector.extract_strided_slice %88 {offsets = [0, 128], sizes = [8, 128], strides = [1, 1]} : vector<8x256xf32> to vector<8x128xf32>
    %94 = arith.maximumf %92, %93 : vector<8x128xf32>
    %95 = vector.extract_strided_slice %91 {offsets = [0, 0], sizes = [8, 128], strides = [1, 1]} : vector<8x256xf32> to vector<8x128xf32>
    %96 = vector.extract_strided_slice %91 {offsets = [0, 128], sizes = [8, 128], strides = [1, 1]} : vector<8x256xf32> to vector<8x128xf32>
    %97 = arith.maximumf %95, %96 : vector<8x128xf32>
    %98 = arith.maximumf %94, %97 : vector<8x128xf32>
    %cst_44 = arith.constant 0.000000e+00 : f32
    %99 = vector.broadcast %cst_44 : f32 to vector<8x128xf32>
    %100 = arith.maximumf %98, %99 : vector<8x128xf32>
    %101 = arith.truncf %100 : vector<8x128xf32> to vector<8x128xbf16>
    %c0_45 = arith.constant 0 : index
    %c512 = arith.constant 512 : index
    %102 = vector.load %arg11[%c0_45, %c512] : memref<8x1536xbf16, #tpu.memory_space<vmem>>, vector<8x128xbf16>
    tpu.vector_store %arg11[%c0_45, %c512], %101 {strides = array<i32>} : memref<8x1536xbf16, #tpu.memory_space<vmem>>, vector<8x128xbf16>,
    %c0_46 = arith.constant 0 : index
    %c280 = arith.constant 280 : index
    %103 = vector.load %arg1[%c0_46, %c280] : memref<8x784xbf16, #tpu.memory_space<vmem>>, vector<8x140xbf16>
    %c0_47 = arith.constant 0 : index
    %c308 = arith.constant 308 : index
    %104 = vector.load %arg1[%c0_47, %c308] : memref<8x784xbf16, #tpu.memory_space<vmem>>, vector<8x140xbf16>
    %cst_48 = arith.constant dense<0.000000e+00> : vector<8x256xf32>
    %105 = tpu.matmul %103, %0, %cst_48 {dimension_numbers = #tpu.dot_dimension_numbers<[1], [0], [0], [1], [0, 0, 1, 1], [], []>} : vector<8x140xbf16>, vector<140x256xbf16>, vector<8x256xf32> -> vector<8x256xf32>
    %106 = vector.broadcast %4 : vector<1x256xf32> to vector<8x256xf32>
    %107 = arith.addf %105, %106 : vector<8x256xf32>
    %cst_49 = arith.constant dense<0.000000e+00> : vector<8x256xf32>
    %108 = tpu.matmul %104, %0, %cst_49 {dimension_numbers = #tpu.dot_dimension_numbers<[1], [0], [0], [1], [0, 0, 1, 1], [], []>} : vector<8x140xbf16>, vector<140x256xbf16>, vector<8x256xf32> -> vector<8x256xf32>
    %109 = vector.broadcast %4 : vector<1x256xf32> to vector<8x256xf32>
    %110 = arith.addf %108, %109 : vector<8x256xf32>
    %111 = vector.extract_strided_slice %107 {offsets = [0, 0], sizes = [8, 128], strides = [1, 1]} : vector<8x256xf32> to vector<8x128xf32>
    %112 = vector.extract_strided_slice %107 {offsets = [0, 128], sizes = [8, 128], strides = [1, 1]} : vector<8x256xf32> to vector<8x128xf32>
    %113 = arith.maximumf %111, %112 : vector<8x128xf32>
    %114 = vector.extract_strided_slice %110 {offsets = [0, 0], sizes = [8, 128], strides = [1, 1]} : vector<8x256xf32> to vector<8x128xf32>
    %115 = vector.extract_strided_slice %110 {offsets = [0, 128], sizes = [8, 128], strides = [1, 1]} : vector<8x256xf32> to vector<8x128xf32>
    %116 = arith.maximumf %114, %115 : vector<8x128xf32>
    %117 = arith.maximumf %113, %116 : vector<8x128xf32>
    %cst_50 = arith.constant 0.000000e+00 : f32
    %118 = vector.broadcast %cst_50 : f32 to vector<8x128xf32>
    %119 = arith.maximumf %117, %118 : vector<8x128xf32>
    %120 = arith.truncf %119 : vector<8x128xf32> to vector<8x128xbf16>
    %c0_51 = arith.constant 0 : index
    %c640 = arith.constant 640 : index
    %121 = vector.load %arg11[%c0_51, %c640] : memref<8x1536xbf16, #tpu.memory_space<vmem>>, vector<8x128xbf16>
    tpu.vector_store %arg11[%c0_51, %c640], %120 {strides = array<i32>} : memref<8x1536xbf16, #tpu.memory_space<vmem>>, vector<8x128xbf16>,
    %c0_52 = arith.constant 0 : index
    %c336 = arith.constant 336 : index
    %122 = vector.load %arg1[%c0_52, %c336] : memref<8x784xbf16, #tpu.memory_space<vmem>>, vector<8x140xbf16>
    %c0_53 = arith.constant 0 : index
    %c364 = arith.constant 364 : index
    %123 = vector.load %arg1[%c0_53, %c364] : memref<8x784xbf16, #tpu.memory_space<vmem>>, vector<8x140xbf16>
    %cst_54 = arith.constant dense<0.000000e+00> : vector<8x256xf32>
    %124 = tpu.matmul %122, %0, %cst_54 {dimension_numbers = #tpu.dot_dimension_numbers<[1], [0], [0], [1], [0, 0, 1, 1], [], []>} : vector<8x140xbf16>, vector<140x256xbf16>, vector<8x256xf32> -> vector<8x256xf32>
    %125 = vector.broadcast %4 : vector<1x256xf32> to vector<8x256xf32>
    %126 = arith.addf %124, %125 : vector<8x256xf32>
    %cst_55 = arith.constant dense<0.000000e+00> : vector<8x256xf32>
    %127 = tpu.matmul %123, %0, %cst_55 {dimension_numbers = #tpu.dot_dimension_numbers<[1], [0], [0], [1], [0, 0, 1, 1], [], []>} : vector<8x140xbf16>, vector<140x256xbf16>, vector<8x256xf32> -> vector<8x256xf32>
    %128 = vector.broadcast %4 : vector<1x256xf32> to vector<8x256xf32>
    %129 = arith.addf %127, %128 : vector<8x256xf32>
    %130 = vector.extract_strided_slice %126 {offsets = [0, 0], sizes = [8, 128], strides = [1, 1]} : vector<8x256xf32> to vector<8x128xf32>
    %131 = vector.extract_strided_slice %126 {offsets = [0, 128], sizes = [8, 128], strides = [1, 1]} : vector<8x256xf32> to vector<8x128xf32>
    %132 = arith.maximumf %130, %131 : vector<8x128xf32>
    %133 = vector.extract_strided_slice %129 {offsets = [0, 0], sizes = [8, 128], strides = [1, 1]} : vector<8x256xf32> to vector<8x128xf32>
    %134 = vector.extract_strided_slice %129 {offsets = [0, 128], sizes = [8, 128], strides = [1, 1]} : vector<8x256xf32> to vector<8x128xf32>
    %135 = arith.maximumf %133, %134 : vector<8x128xf32>
    %136 = arith.maximumf %132, %135 : vector<8x128xf32>
    %cst_56 = arith.constant 0.000000e+00 : f32
    %137 = vector.broadcast %cst_56 : f32 to vector<8x128xf32>
    %138 = arith.maximumf %136, %137 : vector<8x128xf32>
    %139 = arith.truncf %138 : vector<8x128xf32> to vector<8x128xbf16>
    %c0_57 = arith.constant 0 : index
    %c768 = arith.constant 768 : index
    %140 = vector.load %arg11[%c0_57, %c768] : memref<8x1536xbf16, #tpu.memory_space<vmem>>, vector<8x128xbf16>
    tpu.vector_store %arg11[%c0_57, %c768], %139 {strides = array<i32>} : memref<8x1536xbf16, #tpu.memory_space<vmem>>, vector<8x128xbf16>,
    %c0_58 = arith.constant 0 : index
    %c392 = arith.constant 392 : index
    %141 = vector.load %arg1[%c0_58, %c392] : memref<8x784xbf16, #tpu.memory_space<vmem>>, vector<8x140xbf16>
    %c0_59 = arith.constant 0 : index
    %c420 = arith.constant 420 : index
    %142 = vector.load %arg1[%c0_59, %c420] : memref<8x784xbf16, #tpu.memory_space<vmem>>, vector<8x140xbf16>
    %cst_60 = arith.constant dense<0.000000e+00> : vector<8x256xf32>
    %143 = tpu.matmul %141, %0, %cst_60 {dimension_numbers = #tpu.dot_dimension_numbers<[1], [0], [0], [1], [0, 0, 1, 1], [], []>} : vector<8x140xbf16>, vector<140x256xbf16>, vector<8x256xf32> -> vector<8x256xf32>
    %144 = vector.broadcast %4 : vector<1x256xf32> to vector<8x256xf32>
    %145 = arith.addf %143, %144 : vector<8x256xf32>
    %cst_61 = arith.constant dense<0.000000e+00> : vector<8x256xf32>
    %146 = tpu.matmul %142, %0, %cst_61 {dimension_numbers = #tpu.dot_dimension_numbers<[1], [0], [0], [1], [0, 0, 1, 1], [], []>} : vector<8x140xbf16>, vector<140x256xbf16>, vector<8x256xf32> -> vector<8x256xf32>
    %147 = vector.broadcast %4 : vector<1x256xf32> to vector<8x256xf32>
    %148 = arith.addf %146, %147 : vector<8x256xf32>
    %149 = vector.extract_strided_slice %145 {offsets = [0, 0], sizes = [8, 128], strides = [1, 1]} : vector<8x256xf32> to vector<8x128xf32>
    %150 = vector.extract_strided_slice %145 {offsets = [0, 128], sizes = [8, 128], strides = [1, 1]} : vector<8x256xf32> to vector<8x128xf32>
    %151 = arith.maximumf %149, %150 : vector<8x128xf32>
    %152 = vector.extract_strided_slice %148 {offsets = [0, 0], sizes = [8, 128], strides = [1, 1]} : vector<8x256xf32> to vector<8x128xf32>
    %153 = vector.extract_strided_slice %148 {offsets = [0, 128], sizes = [8, 128], strides = [1, 1]} : vector<8x256xf32> to vector<8x128xf32>
    %154 = arith.maximumf %152, %153 : vector<8x128xf32>
    %155 = arith.maximumf %151, %154 : vector<8x128xf32>
    %cst_62 = arith.constant 0.000000e+00 : f32
    %156 = vector.broadcast %cst_62 : f32 to vector<8x128xf32>
    %157 = arith.maximumf %155, %156 : vector<8x128xf32>
    %158 = arith.truncf %157 : vector<8x128xf32> to vector<8x128xbf16>
    %c0_63 = arith.constant 0 : index
    %c896 = arith.constant 896 : index
    %159 = vector.load %arg11[%c0_63, %c896] : memref<8x1536xbf16, #tpu.memory_space<vmem>>, vector<8x128xbf16>
    tpu.vector_store %arg11[%c0_63, %c896], %158 {strides = array<i32>} : memref<8x1536xbf16, #tpu.memory_space<vmem>>, vector<8x128xbf16>,
    %c0_64 = arith.constant 0 : index
    %c448 = arith.constant 448 : index
    %160 = vector.load %arg1[%c0_64, %c448] : memref<8x784xbf16, #tpu.memory_space<vmem>>, vector<8x140xbf16>
    %c0_65 = arith.constant 0 : index
    %c476 = arith.constant 476 : index
    %161 = vector.load %arg1[%c0_65, %c476] : memref<8x784xbf16, #tpu.memory_space<vmem>>, vector<8x140xbf16>
    %cst_66 = arith.constant dense<0.000000e+00> : vector<8x256xf32>
    %162 = tpu.matmul %160, %0, %cst_66 {dimension_numbers = #tpu.dot_dimension_numbers<[1], [0], [0], [1], [0, 0, 1, 1], [], []>} : vector<8x140xbf16>, vector<140x256xbf16>, vector<8x256xf32> -> vector<8x256xf32>
    %163 = vector.broadcast %4 : vector<1x256xf32> to vector<8x256xf32>
    %164 = arith.addf %162, %163 : vector<8x256xf32>
    %cst_67 = arith.constant dense<0.000000e+00> : vector<8x256xf32>
    %165 = tpu.matmul %161, %0, %cst_67 {dimension_numbers = #tpu.dot_dimension_numbers<[1], [0], [0], [1], [0, 0, 1, 1], [], []>} : vector<8x140xbf16>, vector<140x256xbf16>, vector<8x256xf32> -> vector<8x256xf32>
    %166 = vector.broadcast %4 : vector<1x256xf32> to vector<8x256xf32>
    %167 = arith.addf %165, %166 : vector<8x256xf32>
    %168 = vector.extract_strided_slice %164 {offsets = [0, 0], sizes = [8, 128], strides = [1, 1]} : vector<8x256xf32> to vector<8x128xf32>
    %169 = vector.extract_strided_slice %164 {offsets = [0, 128], sizes = [8, 128], strides = [1, 1]} : vector<8x256xf32> to vector<8x128xf32>
    %170 = arith.maximumf %168, %169 : vector<8x128xf32>
    %171 = vector.extract_strided_slice %167 {offsets = [0, 0], sizes = [8, 128], strides = [1, 1]} : vector<8x256xf32> to vector<8x128xf32>
    %172 = vector.extract_strided_slice %167 {offsets = [0, 128], sizes = [8, 128], strides = [1, 1]} : vector<8x256xf32> to vector<8x128xf32>
    %173 = arith.maximumf %171, %172 : vector<8x128xf32>
    %174 = arith.maximumf %170, %173 : vector<8x128xf32>
    %cst_68 = arith.constant 0.000000e+00 : f32
    %175 = vector.broadcast %cst_68 : f32 to vector<8x128xf32>
    %176 = arith.maximumf %174, %175 : vector<8x128xf32>
    %177 = arith.truncf %176 : vector<8x128xf32> to vector<8x128xbf16>
    %c0_69 = arith.constant 0 : index
    %c1024 = arith.constant 1024 : index
    %178 = vector.load %arg11[%c0_69, %c1024] : memref<8x1536xbf16, #tpu.memory_space<vmem>>, vector<8x128xbf16>
    tpu.vector_store %arg11[%c0_69, %c1024], %177 {strides = array<i32>} : memref<8x1536xbf16, #tpu.memory_space<vmem>>, vector<8x128xbf16>,
    %c0_70 = arith.constant 0 : index
    %c504 = arith.constant 504 : index
    %179 = vector.load %arg1[%c0_70, %c504] : memref<8x784xbf16, #tpu.memory_space<vmem>>, vector<8x140xbf16>
    %c0_71 = arith.constant 0 : index
    %c532 = arith.constant 532 : index
    %180 = vector.load %arg1[%c0_71, %c532] : memref<8x784xbf16, #tpu.memory_space<vmem>>, vector<8x140xbf16>
    %cst_72 = arith.constant dense<0.000000e+00> : vector<8x256xf32>
    %181 = tpu.matmul %179, %0, %cst_72 {dimension_numbers = #tpu.dot_dimension_numbers<[1], [0], [0], [1], [0, 0, 1, 1], [], []>} : vector<8x140xbf16>, vector<140x256xbf16>, vector<8x256xf32> -> vector<8x256xf32>
    %182 = vector.broadcast %4 : vector<1x256xf32> to vector<8x256xf32>
    %183 = arith.addf %181, %182 : vector<8x256xf32>
    %cst_73 = arith.constant dense<0.000000e+00> : vector<8x256xf32>
    %184 = tpu.matmul %180, %0, %cst_73 {dimension_numbers = #tpu.dot_dimension_numbers<[1], [0], [0], [1], [0, 0, 1, 1], [], []>} : vector<8x140xbf16>, vector<140x256xbf16>, vector<8x256xf32> -> vector<8x256xf32>
    %185 = vector.broadcast %4 : vector<1x256xf32> to vector<8x256xf32>
    %186 = arith.addf %184, %185 : vector<8x256xf32>
    %187 = vector.extract_strided_slice %183 {offsets = [0, 0], sizes = [8, 128], strides = [1, 1]} : vector<8x256xf32> to vector<8x128xf32>
    %188 = vector.extract_strided_slice %183 {offsets = [0, 128], sizes = [8, 128], strides = [1, 1]} : vector<8x256xf32> to vector<8x128xf32>
    %189 = arith.maximumf %187, %188 : vector<8x128xf32>
    %190 = vector.extract_strided_slice %186 {offsets = [0, 0], sizes = [8, 128], strides = [1, 1]} : vector<8x256xf32> to vector<8x128xf32>
    %191 = vector.extract_strided_slice %186 {offsets = [0, 128], sizes = [8, 128], strides = [1, 1]} : vector<8x256xf32> to vector<8x128xf32>
    %192 = arith.maximumf %190, %191 : vector<8x128xf32>
    %193 = arith.maximumf %189, %192 : vector<8x128xf32>
    %cst_74 = arith.constant 0.000000e+00 : f32
    %194 = vector.broadcast %cst_74 : f32 to vector<8x128xf32>
    %195 = arith.maximumf %193, %194 : vector<8x128xf32>
    %196 = arith.truncf %195 : vector<8x128xf32> to vector<8x128xbf16>
    %c0_75 = arith.constant 0 : index
    %c1152 = arith.constant 1152 : index
    %197 = vector.load %arg11[%c0_75, %c1152] : memref<8x1536xbf16, #tpu.memory_space<vmem>>, vector<8x128xbf16>
    tpu.vector_store %arg11[%c0_75, %c1152], %196 {strides = array<i32>} : memref<8x1536xbf16, #tpu.memory_space<vmem>>, vector<8x128xbf16>,
    %c0_76 = arith.constant 0 : index
    %c560 = arith.constant 560 : index
    %198 = vector.load %arg1[%c0_76, %c560] : memref<8x784xbf16, #tpu.memory_space<vmem>>, vector<8x140xbf16>
    %c0_77 = arith.constant 0 : index
    %c588 = arith.constant 588 : index
    %199 = vector.load %arg1[%c0_77, %c588] : memref<8x784xbf16, #tpu.memory_space<vmem>>, vector<8x140xbf16>
    %cst_78 = arith.constant dense<0.000000e+00> : vector<8x256xf32>
    %200 = tpu.matmul %198, %0, %cst_78 {dimension_numbers = #tpu.dot_dimension_numbers<[1], [0], [0], [1], [0, 0, 1, 1], [], []>} : vector<8x140xbf16>, vector<140x256xbf16>, vector<8x256xf32> -> vector<8x256xf32>
    %201 = vector.broadcast %4 : vector<1x256xf32> to vector<8x256xf32>
    %202 = arith.addf %200, %201 : vector<8x256xf32>
    %cst_79 = arith.constant dense<0.000000e+00> : vector<8x256xf32>
    %203 = tpu.matmul %199, %0, %cst_79 {dimension_numbers = #tpu.dot_dimension_numbers<[1], [0], [0], [1], [0, 0, 1, 1], [], []>} : vector<8x140xbf16>, vector<140x256xbf16>, vector<8x256xf32> -> vector<8x256xf32>
    %204 = vector.broadcast %4 : vector<1x256xf32> to vector<8x256xf32>
    %205 = arith.addf %203, %204 : vector<8x256xf32>
    %206 = vector.extract_strided_slice %202 {offsets = [0, 0], sizes = [8, 128], strides = [1, 1]} : vector<8x256xf32> to vector<8x128xf32>
    %207 = vector.extract_strided_slice %202 {offsets = [0, 128], sizes = [8, 128], strides = [1, 1]} : vector<8x256xf32> to vector<8x128xf32>
    %208 = arith.maximumf %206, %207 : vector<8x128xf32>
    %209 = vector.extract_strided_slice %205 {offsets = [0, 0], sizes = [8, 128], strides = [1, 1]} : vector<8x256xf32> to vector<8x128xf32>
    %210 = vector.extract_strided_slice %205 {offsets = [0, 128], sizes = [8, 128], strides = [1, 1]} : vector<8x256xf32> to vector<8x128xf32>
    %211 = arith.maximumf %209, %210 : vector<8x128xf32>
    %212 = arith.maximumf %208, %211 : vector<8x128xf32>
    %cst_80 = arith.constant 0.000000e+00 : f32
    %213 = vector.broadcast %cst_80 : f32 to vector<8x128xf32>
    %214 = arith.maximumf %212, %213 : vector<8x128xf32>
    %215 = arith.truncf %214 : vector<8x128xf32> to vector<8x128xbf16>
    %c0_81 = arith.constant 0 : index
    %c1280 = arith.constant 1280 : index
    %216 = vector.load %arg11[%c0_81, %c1280] : memref<8x1536xbf16, #tpu.memory_space<vmem>>, vector<8x128xbf16>
    tpu.vector_store %arg11[%c0_81, %c1280], %215 {strides = array<i32>} : memref<8x1536xbf16, #tpu.memory_space<vmem>>, vector<8x128xbf16>,
    %c0_82 = arith.constant 0 : index
    %c616 = arith.constant 616 : index
    %217 = vector.load %arg1[%c0_82, %c616] : memref<8x784xbf16, #tpu.memory_space<vmem>>, vector<8x140xbf16>
    %c0_83 = arith.constant 0 : index
    %c644 = arith.constant 644 : index
    %218 = vector.load %arg1[%c0_83, %c644] : memref<8x784xbf16, #tpu.memory_space<vmem>>, vector<8x140xbf16>
    %cst_84 = arith.constant dense<0.000000e+00> : vector<8x256xf32>
    %219 = tpu.matmul %217, %0, %cst_84 {dimension_numbers = #tpu.dot_dimension_numbers<[1], [0], [0], [1], [0, 0, 1, 1], [], []>} : vector<8x140xbf16>, vector<140x256xbf16>, vector<8x256xf32> -> vector<8x256xf32>
    %220 = vector.broadcast %4 : vector<1x256xf32> to vector<8x256xf32>
    %221 = arith.addf %219, %220 : vector<8x256xf32>
    %cst_85 = arith.constant dense<0.000000e+00> : vector<8x256xf32>
    %222 = tpu.matmul %218, %0, %cst_85 {dimension_numbers = #tpu.dot_dimension_numbers<[1], [0], [0], [1], [0, 0, 1, 1], [], []>} : vector<8x140xbf16>, vector<140x256xbf16>, vector<8x256xf32> -> vector<8x256xf32>
    %223 = vector.broadcast %4 : vector<1x256xf32> to vector<8x256xf32>
    %224 = arith.addf %222, %223 : vector<8x256xf32>
    %225 = vector.extract_strided_slice %221 {offsets = [0, 0], sizes = [8, 128], strides = [1, 1]} : vector<8x256xf32> to vector<8x128xf32>
    %226 = vector.extract_strided_slice %221 {offsets = [0, 128], sizes = [8, 128], strides = [1, 1]} : vector<8x256xf32> to vector<8x128xf32>
    %227 = arith.maximumf %225, %226 : vector<8x128xf32>
    %228 = vector.extract_strided_slice %224 {offsets = [0, 0], sizes = [8, 128], strides = [1, 1]} : vector<8x256xf32> to vector<8x128xf32>
    %229 = vector.extract_strided_slice %224 {offsets = [0, 128], sizes = [8, 128], strides = [1, 1]} : vector<8x256xf32> to vector<8x128xf32>
    %230 = arith.maximumf %228, %229 : vector<8x128xf32>
    %231 = arith.maximumf %227, %230 : vector<8x128xf32>
    %cst_86 = arith.constant 0.000000e+00 : f32
    %232 = vector.broadcast %cst_86 : f32 to vector<8x128xf32>
    %233 = arith.maximumf %231, %232 : vector<8x128xf32>
    %234 = arith.truncf %233 : vector<8x128xf32> to vector<8x128xbf16>
    %c0_87 = arith.constant 0 : index
    %c1408 = arith.constant 1408 : index
    %235 = vector.load %arg11[%c0_87, %c1408] : memref<8x1536xbf16, #tpu.memory_space<vmem>>, vector<8x128xbf16>
    tpu.vector_store %arg11[%c0_87, %c1408], %234 {strides = array<i32>} : memref<8x1536xbf16, #tpu.memory_space<vmem>>, vector<8x128xbf16>,
    %c0_88 = arith.constant 0 : index
    %c0_89 = arith.constant 0 : index
    %236 = vector.load %arg11[%c0_88, %c0_89] : memref<8x1536xbf16, #tpu.memory_space<vmem>>, vector<8x640xbf16>
    %cst_90 = arith.constant dense<0.000000e+00> : vector<8x256xf32>
    %237 = tpu.matmul %236, %1, %cst_90 {dimension_numbers = #tpu.dot_dimension_numbers<[1], [0], [0], [1], [0, 0, 1, 1], [], []>} : vector<8x640xbf16>, vector<640x256xbf16>, vector<8x256xf32> -> vector<8x256xf32>
    %238 = vector.broadcast %5 : vector<1x256xf32> to vector<8x256xf32>
    %239 = arith.addf %237, %238 : vector<8x256xf32>
    %240 = vector.extract_strided_slice %239 {offsets = [0, 0], sizes = [8, 128], strides = [1, 1]} : vector<8x256xf32> to vector<8x128xf32>
    %241 = vector.extract_strided_slice %239 {offsets = [0, 128], sizes = [8, 128], strides = [1, 1]} : vector<8x256xf32> to vector<8x128xf32>
    %242 = arith.maximumf %240, %241 : vector<8x128xf32>
    %c0_91 = arith.constant 0 : index
    %c128_92 = arith.constant 128 : index
    %243 = vector.load %arg11[%c0_91, %c128_92] : memref<8x1536xbf16, #tpu.memory_space<vmem>>, vector<8x640xbf16>
    %cst_93 = arith.constant dense<0.000000e+00> : vector<8x256xf32>
    %244 = tpu.matmul %243, %1, %cst_93 {dimension_numbers = #tpu.dot_dimension_numbers<[1], [0], [0], [1], [0, 0, 1, 1], [], []>} : vector<8x640xbf16>, vector<640x256xbf16>, vector<8x256xf32> -> vector<8x256xf32>
    %245 = vector.broadcast %5 : vector<1x256xf32> to vector<8x256xf32>
    %246 = arith.addf %244, %245 : vector<8x256xf32>
    %247 = vector.extract_strided_slice %246 {offsets = [0, 0], sizes = [8, 128], strides = [1, 1]} : vector<8x256xf32> to vector<8x128xf32>
    %248 = vector.extract_strided_slice %246 {offsets = [0, 128], sizes = [8, 128], strides = [1, 1]} : vector<8x256xf32> to vector<8x128xf32>
    %249 = arith.maximumf %247, %248 : vector<8x128xf32>
    %250 = arith.maximumf %242, %249 : vector<8x128xf32>
    %cst_94 = arith.constant 0.000000e+00 : f32
    %251 = vector.broadcast %cst_94 : f32 to vector<8x128xf32>
    %252 = arith.maximumf %250, %251 : vector<8x128xf32>
    %253 = arith.truncf %252 : vector<8x128xf32> to vector<8x128xbf16>
    %c0_95 = arith.constant 0 : index
    %c0_96 = arith.constant 0 : index
    %254 = vector.load %arg12[%c0_95, %c0_96] : memref<8x512xbf16, #tpu.memory_space<vmem>>, vector<8x128xbf16>
    tpu.vector_store %arg12[%c0_95, %c0_96], %253 {strides = array<i32>} : memref<8x512xbf16, #tpu.memory_space<vmem>>, vector<8x128xbf16>,
    %c0_97 = arith.constant 0 : index
    %c256_98 = arith.constant 256 : index
    %255 = vector.load %arg11[%c0_97, %c256_98] : memref<8x1536xbf16, #tpu.memory_space<vmem>>, vector<8x640xbf16>
    %cst_99 = arith.constant dense<0.000000e+00> : vector<8x256xf32>
    %256 = tpu.matmul %255, %1, %cst_99 {dimension_numbers = #tpu.dot_dimension_numbers<[1], [0], [0], [1], [0, 0, 1, 1], [], []>} : vector<8x640xbf16>, vector<640x256xbf16>, vector<8x256xf32> -> vector<8x256xf32>
    %257 = vector.broadcast %5 : vector<1x256xf32> to vector<8x256xf32>
    %258 = arith.addf %256, %257 : vector<8x256xf32>
    %259 = vector.extract_strided_slice %258 {offsets = [0, 0], sizes = [8, 128], strides = [1, 1]} : vector<8x256xf32> to vector<8x128xf32>
    %260 = vector.extract_strided_slice %258 {offsets = [0, 128], sizes = [8, 128], strides = [1, 1]} : vector<8x256xf32> to vector<8x128xf32>
    %261 = arith.maximumf %259, %260 : vector<8x128xf32>
    %c0_100 = arith.constant 0 : index
    %c384_101 = arith.constant 384 : index
    %262 = vector.load %arg11[%c0_100, %c384_101] : memref<8x1536xbf16, #tpu.memory_space<vmem>>, vector<8x640xbf16>
    %cst_102 = arith.constant dense<0.000000e+00> : vector<8x256xf32>
    %263 = tpu.matmul %262, %1, %cst_102 {dimension_numbers = #tpu.dot_dimension_numbers<[1], [0], [0], [1], [0, 0, 1, 1], [], []>} : vector<8x640xbf16>, vector<640x256xbf16>, vector<8x256xf32> -> vector<8x256xf32>
    %264 = vector.broadcast %5 : vector<1x256xf32> to vector<8x256xf32>
    %265 = arith.addf %263, %264 : vector<8x256xf32>
    %266 = vector.extract_strided_slice %265 {offsets = [0, 0], sizes = [8, 128], strides = [1, 1]} : vector<8x256xf32> to vector<8x128xf32>
    %267 = vector.extract_strided_slice %265 {offsets = [0, 128], sizes = [8, 128], strides = [1, 1]} : vector<8x256xf32> to vector<8x128xf32>
    %268 = arith.maximumf %266, %267 : vector<8x128xf32>
    %269 = arith.maximumf %261, %268 : vector<8x128xf32>
    %cst_103 = arith.constant 0.000000e+00 : f32
    %270 = vector.broadcast %cst_103 : f32 to vector<8x128xf32>
    %271 = arith.maximumf %269, %270 : vector<8x128xf32>
    %272 = arith.truncf %271 : vector<8x128xf32> to vector<8x128xbf16>
    %c0_104 = arith.constant 0 : index
    %c128_105 = arith.constant 128 : index
    %273 = vector.load %arg12[%c0_104, %c128_105] : memref<8x512xbf16, #tpu.memory_space<vmem>>, vector<8x128xbf16>
    tpu.vector_store %arg12[%c0_104, %c128_105], %272 {strides = array<i32>} : memref<8x512xbf16, #tpu.memory_space<vmem>>, vector<8x128xbf16>,
    %c0_106 = arith.constant 0 : index
    %c512_107 = arith.constant 512 : index
    %274 = vector.load %arg11[%c0_106, %c512_107] : memref<8x1536xbf16, #tpu.memory_space<vmem>>, vector<8x640xbf16>
    %cst_108 = arith.constant dense<0.000000e+00> : vector<8x256xf32>
    %275 = tpu.matmul %274, %1, %cst_108 {dimension_numbers = #tpu.dot_dimension_numbers<[1], [0], [0], [1], [0, 0, 1, 1], [], []>} : vector<8x640xbf16>, vector<640x256xbf16>, vector<8x256xf32> -> vector<8x256xf32>
    %276 = vector.broadcast %5 : vector<1x256xf32> to vector<8x256xf32>
    %277 = arith.addf %275, %276 : vector<8x256xf32>
    %278 = vector.extract_strided_slice %277 {offsets = [0, 0], sizes = [8, 128], strides = [1, 1]} : vector<8x256xf32> to vector<8x128xf32>
    %279 = vector.extract_strided_slice %277 {offsets = [0, 128], sizes = [8, 128], strides = [1, 1]} : vector<8x256xf32> to vector<8x128xf32>
    %280 = arith.maximumf %278, %279 : vector<8x128xf32>
    %c0_109 = arith.constant 0 : index
    %c640_110 = arith.constant 640 : index
    %281 = vector.load %arg11[%c0_109, %c640_110] : memref<8x1536xbf16, #tpu.memory_space<vmem>>, vector<8x640xbf16>
    %cst_111 = arith.constant dense<0.000000e+00> : vector<8x256xf32>
    %282 = tpu.matmul %281, %1, %cst_111 {dimension_numbers = #tpu.dot_dimension_numbers<[1], [0], [0], [1], [0, 0, 1, 1], [], []>} : vector<8x640xbf16>, vector<640x256xbf16>, vector<8x256xf32> -> vector<8x256xf32>
    %283 = vector.broadcast %5 : vector<1x256xf32> to vector<8x256xf32>
    %284 = arith.addf %282, %283 : vector<8x256xf32>
    %285 = vector.extract_strided_slice %284 {offsets = [0, 0], sizes = [8, 128], strides = [1, 1]} : vector<8x256xf32> to vector<8x128xf32>
    %286 = vector.extract_strided_slice %284 {offsets = [0, 128], sizes = [8, 128], strides = [1, 1]} : vector<8x256xf32> to vector<8x128xf32>
    %287 = arith.maximumf %285, %286 : vector<8x128xf32>
    %288 = arith.maximumf %280, %287 : vector<8x128xf32>
    %cst_112 = arith.constant 0.000000e+00 : f32
    %289 = vector.broadcast %cst_112 : f32 to vector<8x128xf32>
    %290 = arith.maximumf %288, %289 : vector<8x128xf32>
    %291 = arith.truncf %290 : vector<8x128xf32> to vector<8x128xbf16>
    %c0_113 = arith.constant 0 : index
    %c256_114 = arith.constant 256 : index
    %292 = vector.load %arg12[%c0_113, %c256_114] : memref<8x512xbf16, #tpu.memory_space<vmem>>, vector<8x128xbf16>
    tpu.vector_store %arg12[%c0_113, %c256_114], %291 {strides = array<i32>} : memref<8x512xbf16, #tpu.memory_space<vmem>>, vector<8x128xbf16>,
    %c0_115 = arith.constant 0 : index
    %c768_116 = arith.constant 768 : index
    %293 = vector.load %arg11[%c0_115, %c768_116] : memref<8x1536xbf16, #tpu.memory_space<vmem>>, vector<8x640xbf16>
    %cst_117 = arith.constant dense<0.000000e+00> : vector<8x256xf32>
    %294 = tpu.matmul %293, %1, %cst_117 {dimension_numbers = #tpu.dot_dimension_numbers<[1], [0], [0], [1], [0, 0, 1, 1], [], []>} : vector<8x640xbf16>, vector<640x256xbf16>, vector<8x256xf32> -> vector<8x256xf32>
    %295 = vector.broadcast %5 : vector<1x256xf32> to vector<8x256xf32>
    %296 = arith.addf %294, %295 : vector<8x256xf32>
    %297 = vector.extract_strided_slice %296 {offsets = [0, 0], sizes = [8, 128], strides = [1, 1]} : vector<8x256xf32> to vector<8x128xf32>
    %298 = vector.extract_strided_slice %296 {offsets = [0, 128], sizes = [8, 128], strides = [1, 1]} : vector<8x256xf32> to vector<8x128xf32>
    %299 = arith.maximumf %297, %298 : vector<8x128xf32>
    %c0_118 = arith.constant 0 : index
    %c896_119 = arith.constant 896 : index
    %300 = vector.load %arg11[%c0_118, %c896_119] : memref<8x1536xbf16, #tpu.memory_space<vmem>>, vector<8x640xbf16>
    %cst_120 = arith.constant dense<0.000000e+00> : vector<8x256xf32>
    %301 = tpu.matmul %300, %1, %cst_120 {dimension_numbers = #tpu.dot_dimension_numbers<[1], [0], [0], [1], [0, 0, 1, 1], [], []>} : vector<8x640xbf16>, vector<640x256xbf16>, vector<8x256xf32> -> vector<8x256xf32>
    %302 = vector.broadcast %5 : vector<1x256xf32> to vector<8x256xf32>
    %303 = arith.addf %301, %302 : vector<8x256xf32>
    %304 = vector.extract_strided_slice %303 {offsets = [0, 0], sizes = [8, 128], strides = [1, 1]} : vector<8x256xf32> to vector<8x128xf32>
    %305 = vector.extract_strided_slice %303 {offsets = [0, 128], sizes = [8, 128], strides = [1, 1]} : vector<8x256xf32> to vector<8x128xf32>
    %306 = arith.maximumf %304, %305 : vector<8x128xf32>
    %307 = arith.maximumf %299, %306 : vector<8x128xf32>
    %cst_121 = arith.constant 0.000000e+00 : f32
    %308 = vector.broadcast %cst_121 : f32 to vector<8x128xf32>
    %309 = arith.maximumf %307, %308 : vector<8x128xf32>
    %310 = arith.truncf %309 : vector<8x128xf32> to vector<8x128xbf16>
    %c0_122 = arith.constant 0 : index
    %c384_123 = arith.constant 384 : index
    %311 = vector.load %arg12[%c0_122, %c384_123] : memref<8x512xbf16, #tpu.memory_space<vmem>>, vector<8x128xbf16>
    tpu.vector_store %arg12[%c0_122, %c384_123], %310 {strides = array<i32>} : memref<8x512xbf16, #tpu.memory_space<vmem>>, vector<8x128xbf16>,
    %c0_124 = arith.constant 0 : index
    %c0_125 = arith.constant 0 : index
    %312 = vector.load %arg12[%c0_124, %c0_125] : memref<8x512xbf16, #tpu.memory_space<vmem>>, vector<8x512xbf16>
    %cst_126 = arith.constant dense<0.000000e+00> : vector<8x50xf32>
    %313 = tpu.matmul %312, %2, %cst_126 {dimension_numbers = #tpu.dot_dimension_numbers<[1], [0], [0], [1], [0, 0, 1, 1], [], []>} : vector<8x512xbf16>, vector<512x50xbf16>, vector<8x50xf32> -> vector<8x50xf32>
    %314 = vector.broadcast %6 : vector<1x50xf32> to vector<8x50xf32>
    %315 = arith.addf %313, %314 : vector<8x50xf32>
    %cst_127 = arith.constant 0.000000e+00 : f32
    %316 = vector.broadcast %cst_127 : f32 to vector<8x50xf32>
    %317 = arith.maximumf %315, %316 : vector<8x50xf32>
    %318 = arith.truncf %317 : vector<8x50xf32> to vector<8x50xbf16>
    %cst_128 = arith.constant dense<0.000000e+00> : vector<8x128xf32>
    %319 = tpu.matmul %318, %3, %cst_128 {dimension_numbers = #tpu.dot_dimension_numbers<[1], [0], [0], [1], [0, 0, 1, 1], [], []>} : vector<8x50xbf16>, vector<50x128xbf16>, vector<8x128xf32> -> vector<8x128xf32>
    %320 = vector.broadcast %7 : vector<1x128xf32> to vector<8x128xf32>
    %321 = arith.addf %319, %320 : vector<8x128xf32>
    %cst_129 = arith.constant dense<0xFF800000> : vector<8xf32>
    %322 = vector.multi_reduction <maximumf>, %321, %cst_129 [1] : vector<8x128xf32> to vector<8xf32>
    %323 = vector.shape_cast %322 : vector<8xf32> to vector<8x1xf32>
    %324 = vector.broadcast %323 : vector<8x1xf32> to vector<8x128xf32>
    %325 = arith.subf %321, %324 : vector<8x128xf32>
    %326 = math.exp %325 : vector<8x128xf32>
    %cst_130 = arith.constant dense<0.000000e+00> : vector<8xf32>
    %327 = vector.multi_reduction <add>, %326, %cst_130 [1] : vector<8x128xf32> to vector<8xf32>
    %328 = vector.shape_cast %327 : vector<8xf32> to vector<8x1xf32>
    %329 = math.log %328 : vector<8x1xf32>
    %330 = vector.broadcast %329 : vector<8x1xf32> to vector<8x128xf32>
    %331 = arith.subf %325, %330 : vector<8x128xf32>
    %c0_131 = arith.constant 0 : index
    %c0_132 = arith.constant 0 : index
    %332 = vector.load %arg10[%c0_131, %c0_132] : memref<8x128xf32, #tpu.memory_space<vmem>>, vector<8x128xf32>
    tpu.vector_store %arg10[%c0_131, %c0_132], %331 {strides = array<i32>} : memref<8x128xf32, #tpu.memory_space<vmem>>, vector<8x128xf32>,
    return
  }
  func.func @transform_0(%arg0: i32) -> (i32, i32) {
    %c0_i32 = arith.constant 0 : i32
    %c0_i32_0 = arith.constant 0 : i32
    return %arg0, %c0_i32 : i32, i32
  }
  func.func @transform_1(%arg0: i32) -> (i32, i32) {
    %c0_i32 = arith.constant 0 : i32
    %c0_i32_0 = arith.constant 0 : i32
    %c0_i32_1 = arith.constant 0 : i32
    return %c0_i32, %c0_i32_0 : i32, i32
  }
  func.func @transform_2(%arg0: i32) -> (i32, i32) {
    %c0_i32 = arith.constant 0 : i32
    %c0_i32_0 = arith.constant 0 : i32
    %c0_i32_1 = arith.constant 0 : i32
    return %c0_i32, %c0_i32_0 : i32, i32
  }
  func.func @transform_3(%arg0: i32) -> (i32, i32) {
    %c0_i32 = arith.constant 0 : i32
    %c0_i32_0 = arith.constant 0 : i32
    %c0_i32_1 = arith.constant 0 : i32
    return %c0_i32, %c0_i32_0 : i32, i32
  }
  func.func @transform_4(%arg0: i32) -> (i32, i32) {
    %c0_i32 = arith.constant 0 : i32
    %c0_i32_0 = arith.constant 0 : i32
    %c0_i32_1 = arith.constant 0 : i32
    return %c0_i32, %c0_i32_0 : i32, i32
  }
  func.func @transform_5(%arg0: i32) -> (i32, i32) {
    %c0_i32 = arith.constant 0 : i32
    %c0_i32_0 = arith.constant 0 : i32
    %c0_i32_1 = arith.constant 0 : i32
    return %c0_i32, %c0_i32_0 : i32, i32
  }
  func.func @transform_6(%arg0: i32) -> (i32, i32) {
    %c0_i32 = arith.constant 0 : i32
    %c0_i32_0 = arith.constant 0 : i32
    %c0_i32_1 = arith.constant 0 : i32
    return %c0_i32, %c0_i32_0 : i32, i32
  }
  func.func @transform_7(%arg0: i32) -> (i32, i32) {
    %c0_i32 = arith.constant 0 : i32
    %c0_i32_0 = arith.constant 0 : i32
    %c0_i32_1 = arith.constant 0 : i32
    return %c0_i32, %c0_i32_0 : i32, i32
  }
  func.func @transform_8(%arg0: i32) -> (i32, i32) {
    %c0_i32 = arith.constant 0 : i32
    %c0_i32_0 = arith.constant 0 : i32
    %c0_i32_1 = arith.constant 0 : i32
    return %c0_i32, %c0_i32_0 : i32, i32
  }
  func.func @transform_9(%arg0: i32) -> (i32, i32) {
    %c0_i32 = arith.constant 0 : i32
    %c0_i32_0 = arith.constant 0 : i32
    return %arg0, %c0_i32 : i32, i32
  }
}

</mosaic_0001>

<llo_original>
// kernel: net_forward.1
$region0: #{net_forward.1}
  #allocation0 [shape = 'u32[]', space=smem, size = 0x4, offset = 0x4, fixed_abs, tag = 'smem constant byte address 0x4 - core index']
  #allocation1 [shape = 'u32[144,128]{1,0:T(1,128)}', space=vmem, size = 0x12000, scoped, tag = 'internal scratch']
  #allocation2 [shape = 'bf16[8,1536]{1,0:T(8,128)(2,1)}', space=vmem, size = 0x6000, scoped, tag = 'scratch operand']
  #allocation3 [shape = 'bf16[8,512]{1,0:T(8,128)(2,1)}', space=vmem, size = 0x2000, scoped, tag = 'scratch operand']
  %s0 = inlined_call_operand.vmem [shape: bf16[8,784], index: 0, kind: input, shape index: {}]
  %s1 = inlined_call_operand.vmem [shape: bf16[140,256], index: 1, kind: input, shape index: {}]
  %s2 = inlined_call_operand.vmem [shape: f32[1,256], index: 2, kind: input, shape index: {}]
  %s3 = inlined_call_operand.hbm [shape: bf16[640,256], index: 3, kind: input, shape index: {}]
  %s4 = inlined_call_operand.vmem [shape: f32[1,256], index: 4, kind: input, shape index: {}]
  %s5 = inlined_call_operand.vmem [shape: bf16[512,50], index: 5, kind: input, shape index: {}]
  %s6 = inlined_call_operand.vmem [shape: f32[1,50], index: 6, kind: input, shape index: {}]
  %s7 = inlined_call_operand.vmem [shape: bf16[50,128], index: 7, kind: input, shape index: {}]
  %s8 = inlined_call_operand.vmem [shape: f32[1,128], index: 8, kind: input, shape index: {}]
  %s9 = inlined_call_operand.vmem [shape: f32[8,128], index: 9, kind: output, shape index: {}]
  %s10 = sld [smem:[#allocation0]]
  $region50: #{net_forward.1} parent=0
    _
  %s12 = ssub.s32 1, %s10
  %s13 = scalar_select 0, %s12, %s10
  $region1: #{net_forward.1} parent=0
    #allocation4 [shape = 'u8[327680]{0}', space=vmem, size = 0x50000, scoped, tag = 'input window, operand 3, single buffered']
    #allocation5 [shape = 's32[1]{0}', space=sflag, size = 0x4, scoped, tag = 'scoped memory for net_forward.1']
    %14 = vsyncpa [#allocation5], 0
    // Predicated region
    $region2: #{net_forward.1} parent=1 // pred_check
      _
    $region3: #{net_forward.1} parent=1 // pred_check_branch
      %16 = sbr.rel (0) target = $region5
    $region4: #{net_forward.1} parent=1 // pred_region
      _
    $region5: #{net_forward.1} parent=1 // pred_fallthru
      _
    // Predicated region
    $region6: #{net_forward.1} parent=1 // pred_check
      _
    $region7: #{net_forward.1} parent=1 // pred_check_branch
      %18 = sbr.rel (0) target = $region9
    $region8: #{net_forward.1} parent=1 // pred_region
      _
    $region9: #{net_forward.1} parent=1 // pred_fallthru
      _
    // Predicated region
    $region10: #{net_forward.1} parent=1 // pred_check
      _
    $region11: #{net_forward.1} parent=1 // pred_check_branch
      %20 = sbr.rel (0) target = $region13
    $region12: #{net_forward.1} parent=1 // pred_region
      _
    $region13: #{net_forward.1} parent=1 // pred_fallthru
      _
    // Predicated region
    $region14: #{net_forward.1} parent=1 // pred_check
      _
    $region15: #{net_forward.1} parent=1 // pred_check_branch
      %22 = sbr.rel (0) target = $region17
    $region16: #{net_forward.1} parent=1 // pred_region
      %s24 = ssub.s32 10240, 10240
      %25 = vsyncadd [#allocation5], %s24
      %s26 = sshll.u32 [#allocation4], 4
      %s27 = int_to_ptr.vmem [resolvable:$true] %s26
      %32 = dma.hbm_to_vmem [thread:$0]  %s3, 10240, %s27, [#allocation5], 128, 128, 8
    $region17: #{net_forward.1} parent=1 // pred_fallthru
      _
    // Predicated region
    $region18: #{net_forward.1} parent=1 // pred_check
      _
    $region19: #{net_forward.1} parent=1 // pred_check_branch
      %34 = sbr.rel (0) target = $region21
    $region20: #{net_forward.1} parent=1 // pred_region
      _
    $region21: #{net_forward.1} parent=1 // pred_fallthru
      _
    // Predicated region
    $region22: #{net_forward.1} parent=1 // pred_check
      _
    $region23: #{net_forward.1} parent=1 // pred_check_branch
      %36 = sbr.rel (0) target = $region25
    $region24: #{net_forward.1} parent=1 // pred_region
      _
    $region25: #{net_forward.1} parent=1 // pred_fallthru
      _
    // Predicated region
    $region26: #{net_forward.1} parent=1 // pred_check
      _
    $region27: #{net_forward.1} parent=1 // pred_check_branch
      %38 = sbr.rel (0) target = $region29
    $region28: #{net_forward.1} parent=1 // pred_region
      _
    $region29: #{net_forward.1} parent=1 // pred_fallthru
      _
    // Predicated region
    $region30: #{net_forward.1} parent=1 // pred_check
      _
    $region31: #{net_forward.1} parent=1 // pred_check_branch
      %40 = sbr.rel (0) target = $region33
    $region32: #{net_forward.1} parent=1 // pred_region
      _
    $region33: #{net_forward.1} parent=1 // pred_fallthru
      _
    // Predicated region
    $region34: #{net_forward.1} parent=1 // pred_check
      _
    $region35: #{net_forward.1} parent=1 // pred_check_branch
      %42 = sbr.rel (0) target = $region37
    $region36: #{net_forward.1} parent=1 // pred_region
      _
    $region37: #{net_forward.1} parent=1 // pred_fallthru
      _
    // Predicated region
    $region38: #{net_forward.1} parent=1 // pred_check
      _
    $region39: #{net_forward.1} parent=1 // pred_check_branch
      %44 = sbr.rel (0) target = $region41
    $region40: #{net_forward.1} parent=1 // pred_region
      %45 = dma.done [#allocation5], 10240
    $region41: #{net_forward.1} parent=1 // pred_fallthru
      _
    %v47 = vld [vmem:[%s1] sm:$0xff]
    %v48 = vld [vmem:[%s1 + $0x8] sm:$0xff]
    %v49 = vld [vmem:[%s1 + $0x10] sm:$0xff]
    %v50 = vld [vmem:[%s1 + $0x18] sm:$0xff]
    %v51 = vld [vmem:[%s1 + $0x20] sm:$0xff]
    %v52 = vld [vmem:[%s1 + $0x28] sm:$0xff]
    %v53 = vld [vmem:[%s1 + $0x30] sm:$0xff]
    %v54 = vld [vmem:[%s1 + $0x38] sm:$0xff]
    %v55 = vld [vmem:[%s1 + $0x40] sm:$0xff]
    %v56 = vld [vmem:[%s1 + $0x48] sm:$0xff]
    %v57 = vld [vmem:[%s1 + $0x50] sm:$0xff]
    %v58 = vld [vmem:[%s1 + $0x58] sm:$0xff]
    %v59 = vld [vmem:[%s1 + $0x60] sm:$0xff]
    %v60 = vld [vmem:[%s1 + $0x68] sm:$0xff]
    %v61 = vld [vmem:[%s1 + $0x70] sm:$0xff]
    %v62 = vld [vmem:[%s1 + $0x78] sm:$0xff]
    %v63 = vld [vmem:[%s1 + $0x80] sm:$0xff]
    %v64 = vld [vmem:[%s1 + $0x88] sm:$0x33]
    %v65 = vld [vmem:[#allocation4] sm:$0xff]
    %v66 = vld [vmem:[#allocation4 + $0x8] sm:$0xff]
    %v67 = vld [vmem:[#allocation4 + $0x10] sm:$0xff]
    %v68 = vld [vmem:[#allocation4 + $0x18] sm:$0xff]
    %v69 = vld [vmem:[#allocation4 + $0x20] sm:$0xff]
    %v70 = vld [vmem:[#allocation4 + $0x28] sm:$0xff]
    %v71 = vld [vmem:[#allocation4 + $0x30] sm:$0xff]
    %v72 = vld [vmem:[#allocation4 + $0x38] sm:$0xff]
    %v73 = vld [vmem:[#allocation4 + $0x40] sm:$0xff]
    %v74 = vld [vmem:[#allocation4 + $0x48] sm:$0xff]
    %v75 = vld [vmem:[#allocation4 + $0x50] sm:$0xff]
    %v76 = vld [vmem:[#allocation4 + $0x58] sm:$0xff]
    %v77 = vld [vmem:[#allocation4 + $0x60] sm:$0xff]
    %v78 = vld [vmem:[#allocation4 + $0x68] sm:$0xff]
    %v79 = vld [vmem:[#allocation4 + $0x70] sm:$0xff]
    %v80 = vld [vmem:[#allocation4 + $0x78] sm:$0xff]
    %v81 = vld [vmem:[#allocation4 + $0x80] sm:$0xff]
    %v82 = vld [vmem:[#allocation4 + $0x88] sm:$0xff]
    %v83 = vld [vmem:[#allocation4 + $0x90] sm:$0xff]
    %v84 = vld [vmem:[#allocation4 + $0x98] sm:$0xff]
    %v85 = vld [vmem:[#allocation4 + $0xa0] sm:$0xff]
    %v86 = vld [vmem:[#allocation4 + $0xa8] sm:$0xff]
    %v87 = vld [vmem:[#allocation4 + $0xb0] sm:$0xff]
    %v88 = vld [vmem:[#allocation4 + $0xb8] sm:$0xff]
    %v89 = vld [vmem:[#allocation4 + $0xc0] sm:$0xff]
    %v90 = vld [vmem:[#allocation4 + $0xc8] sm:$0xff]
    %v91 = vld [vmem:[#allocation4 + $0xd0] sm:$0xff]
    %v92 = vld [vmem:[#allocation4 + $0xd8] sm:$0xff]
    %v93 = vld [vmem:[#allocation4 + $0xe0] sm:$0xff]
    %v94 = vld [vmem:[#allocation4 + $0xe8] sm:$0xff]
    %v95 = vld [vmem:[#allocation4 + $0xf0] sm:$0xff]
    %v96 = vld [vmem:[#allocation4 + $0xf8] sm:$0xff]
    %v97 = vld [vmem:[#allocation4 + $0x100] sm:$0xff]
    %v98 = vld [vmem:[#allocation4 + $0x108] sm:$0xff]
    %v99 = vld [vmem:[#allocation4 + $0x110] sm:$0xff]
    %v100 = vld [vmem:[#allocation4 + $0x118] sm:$0xff]
    %v101 = vld [vmem:[#allocation4 + $0x120] sm:$0xff]
    %v102 = vld [vmem:[#allocation4 + $0x128] sm:$0xff]
    %v103 = vld [vmem:[#allocation4 + $0x130] sm:$0xff]
    %v104 = vld [vmem:[#allocation4 + $0x138] sm:$0xff]
    %v105 = vld [vmem:[#allocation4 + $0x140] sm:$0xff]
    %v106 = vld [vmem:[#allocation4 + $0x148] sm:$0xff]
    %v107 = vld [vmem:[#allocation4 + $0x150] sm:$0xff]
    %v108 = vld [vmem:[#allocation4 + $0x158] sm:$0xff]
    %v109 = vld [vmem:[#allocation4 + $0x160] sm:$0xff]
    %v110 = vld [vmem:[#allocation4 + $0x168] sm:$0xff]
    %v111 = vld [vmem:[#allocation4 + $0x170] sm:$0xff]
    %v112 = vld [vmem:[#allocation4 + $0x178] sm:$0xff]
    %v113 = vld [vmem:[#allocation4 + $0x180] sm:$0xff]
    %v114 = vld [vmem:[#allocation4 + $0x188] sm:$0xff]
    %v115 = vld [vmem:[#allocation4 + $0x190] sm:$0xff]
    %v116 = vld [vmem:[#allocation4 + $0x198] sm:$0xff]
    %v117 = vld [vmem:[#allocation4 + $0x1a0] sm:$0xff]
    %v118 = vld [vmem:[#allocation4 + $0x1a8] sm:$0xff]
    %v119 = vld [vmem:[#allocation4 + $0x1b0] sm:$0xff]
    %v120 = vld [vmem:[#allocation4 + $0x1b8] sm:$0xff]
    %v121 = vld [vmem:[#allocation4 + $0x1c0] sm:$0xff]
    %v122 = vld [vmem:[#allocation4 + $0x1c8] sm:$0xff]
    %v123 = vld [vmem:[#allocation4 + $0x1d0] sm:$0xff]
    %v124 = vld [vmem:[#allocation4 + $0x1d8] sm:$0xff]
    %v125 = vld [vmem:[#allocation4 + $0x1e0] sm:$0xff]
    %v126 = vld [vmem:[#allocation4 + $0x1e8] sm:$0xff]
    %v127 = vld [vmem:[#allocation4 + $0x1f0] sm:$0xff]
    %v128 = vld [vmem:[#allocation4 + $0x1f8] sm:$0xff]
    %v129 = vld [vmem:[#allocation4 + $0x200] sm:$0xff]
    %v130 = vld [vmem:[#allocation4 + $0x208] sm:$0xff]
    %v131 = vld [vmem:[#allocation4 + $0x210] sm:$0xff]
    %v132 = vld [vmem:[#allocation4 + $0x218] sm:$0xff]
    %v133 = vld [vmem:[#allocation4 + $0x220] sm:$0xff]
    %v134 = vld [vmem:[#allocation4 + $0x228] sm:$0xff]
    %v135 = vld [vmem:[#allocation4 + $0x230] sm:$0xff]
    %v136 = vld [vmem:[#allocation4 + $0x238] sm:$0xff]
    %v137 = vld [vmem:[#allocation4 + $0x240] sm:$0xff]
    %v138 = vld [vmem:[#allocation4 + $0x248] sm:$0xff]
    %v139 = vld [vmem:[#allocation4 + $0x250] sm:$0xff]
    %v140 = vld [vmem:[#allocation4 + $0x258] sm:$0xff]
    %v141 = vld [vmem:[#allocation4 + $0x260] sm:$0xff]
    %v142 = vld [vmem:[#allocation4 + $0x268] sm:$0xff]
    %v143 = vld [vmem:[#allocation4 + $0x270] sm:$0xff]
    %v144 = vld [vmem:[#allocation4 + $0x278] sm:$0xff]
    %v145 = vld [vmem:[%s5] sm:$0xf]
    %v146 = vld [vmem:[%s5 + $0x4] sm:$0xf]
    %v147 = vld [vmem:[%s5 + $0x8] sm:$0xf]
    %v148 = vld [vmem:[%s5 + $0xc] sm:$0xf]
    %v149 = vld [vmem:[%s5 + $0x10] sm:$0xf]
    %v150 = vld [vmem:[%s5 + $0x14] sm:$0xf]
    %v151 = vld [vmem:[%s5 + $0x18] sm:$0xf]
    %v152 = vld [vmem:[%s5 + $0x1c] sm:$0xf]
    %v153 = vld [vmem:[%s5 + $0x20] sm:$0xf]
    %v154 = vld [vmem:[%s5 + $0x24] sm:$0xf]
    %v155 = vld [vmem:[%s5 + $0x28] sm:$0xf]
    %v156 = vld [vmem:[%s5 + $0x2c] sm:$0xf]
    %v157 = vld [vmem:[%s5 + $0x30] sm:$0xf]
    %v158 = vld [vmem:[%s5 + $0x34] sm:$0xf]
    %v159 = vld [vmem:[%s5 + $0x38] sm:$0xf]
    %v160 = vld [vmem:[%s5 + $0x3c] sm:$0xf]
    %v161 = vld [vmem:[%s5 + $0x40] sm:$0xf]
    %v162 = vld [vmem:[%s5 + $0x44] sm:$0xf]
    %v163 = vld [vmem:[%s5 + $0x48] sm:$0xf]
    %v164 = vld [vmem:[%s5 + $0x4c] sm:$0xf]
    %v165 = vld [vmem:[%s5 + $0x50] sm:$0xf]
    %v166 = vld [vmem:[%s5 + $0x54] sm:$0xf]
    %v167 = vld [vmem:[%s5 + $0x58] sm:$0xf]
    %v168 = vld [vmem:[%s5 + $0x5c] sm:$0xf]
    %v169 = vld [vmem:[%s5 + $0x60] sm:$0xf]
    %v170 = vld [vmem:[%s5 + $0x64] sm:$0xf]
    %v171 = vld [vmem:[%s5 + $0x68] sm:$0xf]
    %v172 = vld [vmem:[%s5 + $0x6c] sm:$0xf]
    %v173 = vld [vmem:[%s5 + $0x70] sm:$0xf]
    %v174 = vld [vmem:[%s5 + $0x74] sm:$0xf]
    %v175 = vld [vmem:[%s5 + $0x78] sm:$0xf]
    %v176 = vld [vmem:[%s5 + $0x7c] sm:$0xf]
    %v177 = vld [vmem:[%s5 + $0x80] sm:$0xf]
    %v178 = vld [vmem:[%s5 + $0x84] sm:$0xf]
    %v179 = vld [vmem:[%s5 + $0x88] sm:$0xf]
    %v180 = vld [vmem:[%s5 + $0x8c] sm:$0xf]
    %v181 = vld [vmem:[%s5 + $0x90] sm:$0xf]
    %v182 = vld [vmem:[%s5 + $0x94] sm:$0xf]
    %v183 = vld [vmem:[%s5 + $0x98] sm:$0xf]
    %v184 = vld [vmem:[%s5 + $0x9c] sm:$0xf]
    %v185 = vld [vmem:[%s5 + $0xa0] sm:$0xf]
    %v186 = vld [vmem:[%s5 + $0xa4] sm:$0xf]
    %v187 = vld [vmem:[%s5 + $0xa8] sm:$0xf]
    %v188 = vld [vmem:[%s5 + $0xac] sm:$0xf]
    %v189 = vld [vmem:[%s5 + $0xb0] sm:$0xf]
    %v190 = vld [vmem:[%s5 + $0xb4] sm:$0xf]
    %v191 = vld [vmem:[%s5 + $0xb8] sm:$0xf]
    %v192 = vld [vmem:[%s5 + $0xbc] sm:$0xf]
    %v193 = vld [vmem:[%s5 + $0xc0] sm:$0xf]
    %v194 = vld [vmem:[%s5 + $0xc4] sm:$0xf]
    %v195 = vld [vmem:[%s5 + $0xc8] sm:$0xf]
    %v196 = vld [vmem:[%s5 + $0xcc] sm:$0xf]
    %v197 = vld [vmem:[%s5 + $0xd0] sm:$0xf]
    %v198 = vld [vmem:[%s5 + $0xd4] sm:$0xf]
    %v199 = vld [vmem:[%s5 + $0xd8] sm:$0xf]
    %v200 = vld [vmem:[%s5 + $0xdc] sm:$0xf]
    %v201 = vld [vmem:[%s5 + $0xe0] sm:$0xf]
    %v202 = vld [vmem:[%s5 + $0xe4] sm:$0xf]
    %v203 = vld [vmem:[%s5 + $0xe8] sm:$0xf]
    %v204 = vld [vmem:[%s5 + $0xec] sm:$0xf]
    %v205 = vld [vmem:[%s5 + $0xf0] sm:$0xf]
    %v206 = vld [vmem:[%s5 + $0xf4] sm:$0xf]
    %v207 = vld [vmem:[%s5 + $0xf8] sm:$0xf]
    %v208 = vld [vmem:[%s5 + $0xfc] sm:$0xf]
    %v209 = vld [vmem:[%s7] sm:$0xf]
    %v210 = vld [vmem:[%s7 + $0x4] sm:$0xf]
    %v211 = vld [vmem:[%s7 + $0x8] sm:$0xf]
    %v212 = vld [vmem:[%s7 + $0xc] sm:$0xf]
    %v213 = vld [vmem:[%s7 + $0x10] sm:$0xf]
    %v214 = vld [vmem:[%s7 + $0x14] sm:$0xf]
    %v215 = vld [vmem:[%s7 + $0x18] sm:$0x1]
    %v216 = vld [vmem:[%s2] sm:$0x3]
    %v217 = vld [vmem:[%s4] sm:$0x3]
    %v218 = vld [vmem:[%s6] sm:$0x1]
    %v219 = vld [vmem:[%s8] sm:$0x1]
    %v220 = vld [vmem:[%s0] sm:$0xff]
    %v222 = vlaneseq
    %v223 = vshrl.u32 %v222, 7
    %v224 = vsub.s32 0, %v223
    %v225 = vrot.slane %v216, %v224
    %v226 = vlaneseq
    %v227 = vshrl.u32 %v226, 7
    %v228 = vsub.s32 1, %v227
    %v229 = vrot.slane %v216, %v228
    %v233 = vunpack.c.l.b16 %v220
    %v234 = vunpack.c.h.b16 %v220
    %v235 = vpack.c.b16 %v233, %v233
    %v236 = vpack.c.b16 %v234, %v234
    %v256 = vunpack.c.l.b16 %v47
    %v257 = vunpack.c.h.b16 %v47
    %v258 = vunpack.c.l.b16 %v48
    %v259 = vunpack.c.h.b16 %v48
    %v260 = vunpack.c.l.b16 %v49
    %v261 = vunpack.c.h.b16 %v49
    %v262 = vunpack.c.l.b16 %v50
    %v263 = vunpack.c.h.b16 %v50
    %v264 = vunpack.c.l.b16 %v51
    %v265 = vunpack.c.h.b16 %v51
    %v266 = vunpack.c.l.b16 %v52
    %v267 = vunpack.c.h.b16 %v52
    %v268 = vunpack.c.l.b16 %v53
    %v269 = vunpack.c.h.b16 %v53
    %v270 = vunpack.c.l.b16 %v54
    %v271 = vunpack.c.h.b16 %v54
    %v272 = vunpack.c.l.b16 %v55
    %v273 = vunpack.c.h.b16 %v55
    %v274 = vunpack.c.l.b16 %v56
    %v275 = vunpack.c.h.b16 %v56
    %v276 = vunpack.c.l.b16 %v57
    %v277 = vunpack.c.h.b16 %v57
    %v278 = vunpack.c.l.b16 %v58
    %v279 = vunpack.c.h.b16 %v58
    %v280 = vunpack.c.l.b16 %v59
    %v281 = vunpack.c.h.b16 %v59
    %v282 = vunpack.c.l.b16 %v60
    %v283 = vunpack.c.h.b16 %v60
    %v284 = vunpack.c.l.b16 %v61
    %v285 = vunpack.c.h.b16 %v61
    %v286 = vunpack.c.l.b16 %v62
    %v287 = vunpack.c.h.b16 %v62
    %v288 = vunpack.c.l.b16 %v63
    %v289 = vunpack.c.h.b16 %v63
    %v290 = vunpack.c.l.b16 %v64
    %v291 = vunpack.c.h.b16 %v64
    %v292 = vpack.c.b16 %v258, %v256
    %v293 = vpack.c.b16 %v259, %v257
    %v294 = vpack.c.b16 %v262, %v260
    %v295 = vpack.c.b16 %v263, %v261
    %v296 = vpack.c.b16 %v266, %v264
    %v297 = vpack.c.b16 %v267, %v265
    %v298 = vpack.c.b16 %v270, %v268
    %v299 = vpack.c.b16 %v271, %v269
    %v300 = vpack.c.b16 %v274, %v272
    %v301 = vpack.c.b16 %v275, %v273
    %v302 = vpack.c.b16 %v278, %v276
    %v303 = vpack.c.b16 %v279, %v277
    %v304 = vpack.c.b16 %v282, %v280
    %v305 = vpack.c.b16 %v283, %v281
    %v306 = vpack.c.b16 %v286, %v284
    %v307 = vpack.c.b16 %v287, %v285
    %v308 = vpack.c.b16 %v290, %v288
    %v309 = vpack.c.b16 %v291, %v289
    %vm326 = vcmask 97280
    %v328 = vsel %vm326, %v236, 0
    %vm330 = vcmask 1045504
    %v332 = vsel %vm330, %v308, 0
    %v335 = vsel %vm330, %v309, 0
    %337 = vmatprep.subr.bf16.mxu0 %v293
    %338 = vmatpush1.bf16.msra.mxu0 %v292
    %339 = vmatprep.subr.bf16.mxu0 %v295
    %340 = vmatpush1.bf16.msra.mxu0 %v294
    %341 = vmatprep.subr.bf16.mxu0 %v297
    %342 = vmatpush1.bf16.msra.mxu0 %v296
    %343 = vmatprep.subr.bf16.mxu0 %v299
    %344 = vmatpush1.bf16.msra.mxu0 %v298
    %345 = vmatprep.subr.bf16.mxu0 %v301
    %346 = vmatpush1.bf16.msra.mxu0 %v300
    %347 = vmatprep.subr.bf16.mxu0 %v303
    %348 = vmatpush1.bf16.msra.mxu0 %v302
    %349 = vmatprep.subr.bf16.mxu0 %v305
    %350 = vmatpush1.bf16.msra.mxu0 %v304
    %351 = vmatprep.subr.bf16.mxu0 %v307
    %352 = vmatpush1.bf16.msra.mxu0 %v306
    %353 = vmatprep.subr.bf16.mxu0 %v335
    %354 = vmatpush1.bf16.msra.mxu0 %v332
    %355 = vmatprep.subr.bf16.mxu0 0
    %356 = vmatpush1.bf16.msra.mxu0 0
    %357 = vmatprep.subr.bf16.mxu0 0
    %358 = vmatpush1.bf16.msra.mxu0 0
    %359 = vmatprep.subr.bf16.mxu0 0
    %360 = vmatpush1.bf16.msra.mxu0 0
    %361 = vmatprep.subr.bf16.mxu0 0
    %362 = vmatpush1.bf16.msra.mxu0 0
    %363 = vmatprep.subr.bf16.mxu0 0
    %364 = vmatpush1.bf16.msra.mxu0 0
    %365 = vmatprep.subr.bf16.mxu0 0
    %366 = vmatpush1.bf16.msra.mxu0 0
    %367 = vmatprep.subr.bf16.mxu0 0
    %368 = vmatpush1.bf16.msra.mxu0 0
    %369 = vmatprep.mubr.bf16.mxu0 %v328
    %370 = vmatmul.mubr.bf16.gmra.mrb[0].mxu0 %v235
    %v371 = vpop.f32.mrb[0].mxu0
    %v372 = vadd.f32 %v225, %v371
    %v373 = vpop.f32.mrb[0].mxu0
    %v374 = vadd.f32 %v229, %v373
    %v375 = vpop.f32.mrb[0].mxu0
    %v376 = vpop.f32.mrb[0].mxu0
    %377 = vdwg.mxu0
    %378 = vrot.lane.b32.xlu0 %v235, 100
    %v379 = vpop.permute.xlu0 %378
    %380 = vrot.lane.b32.xlu0 %v236, 100
    %v381 = vpop.permute.xlu0 %380
    %vm382 = vcmask 818176
    %v383 = vsel %vm382, %v379, %v381
    %v386 = vsel %vm326, %v381, 0
    %388 = vmatprep.subr.bf16.mxu0 %v293
    %389 = vmatpush1.bf16.msra.mxu0 %v292
    %390 = vmatprep.subr.bf16.mxu0 %v295
    %391 = vmatpush1.bf16.msra.mxu0 %v294
    %392 = vmatprep.subr.bf16.mxu0 %v297
    %393 = vmatpush1.bf16.msra.mxu0 %v296
    %394 = vmatprep.subr.bf16.mxu0 %v299
    %395 = vmatpush1.bf16.msra.mxu0 %v298
    %396 = vmatprep.subr.bf16.mxu0 %v301
    %397 = vmatpush1.bf16.msra.mxu0 %v300
    %398 = vmatprep.subr.bf16.mxu0 %v303
    %399 = vmatpush1.bf16.msra.mxu0 %v302
    %400 = vmatprep.subr.bf16.mxu0 %v305
    %401 = vmatpush1.bf16.msra.mxu0 %v304
    %402 = vmatprep.subr.bf16.mxu0 %v307
    %403 = vmatpush1.bf16.msra.mxu0 %v306
    %404 = vmatprep.subr.bf16.mxu0 %v335
    %405 = vmatpush1.bf16.msra.mxu0 %v332
    %406 = vmatprep.subr.bf16.mxu0 0
    %407 = vmatpush1.bf16.msra.mxu0 0
    %408 = vmatprep.subr.bf16.mxu0 0
    %409 = vmatpush1.bf16.msra.mxu0 0
    %410 = vmatprep.subr.bf16.mxu0 0
    %411 = vmatpush1.bf16.msra.mxu0 0
    %412 = vmatprep.subr.bf16.mxu0 0
    %413 = vmatpush1.bf16.msra.mxu0 0
    %414 = vmatprep.subr.bf16.mxu0 0
    %415 = vmatpush1.bf16.msra.mxu0 0
    %416 = vmatprep.subr.bf16.mxu0 0
    %417 = vmatpush1.bf16.msra.mxu0 0
    %418 = vmatprep.subr.bf16.mxu0 0
    %419 = vmatpush1.bf16.msra.mxu0 0
    %420 = vmatprep.mubr.bf16.mxu0 %v386
    %421 = vmatmul.mubr.bf16.gmra.mrb[0].mxu0 %v383
    %v422 = vpop.f32.mrb[0].mxu0
    %v423 = vadd.f32 %v225, %v422
    %v424 = vpop.f32.mrb[0].mxu0
    %v425 = vadd.f32 %v229, %v424
    %v426 = vpop.f32.mrb[0].mxu0
    %v427 = vpop.f32.mrb[0].mxu0
    %428 = vdwg.mxu0
    %v429 = vmax.f32 %v372, %v374
    %v430 = vmax.f32 %v423, %v425
    %v431 = vmax.f32 %v429, %v430
    %v432 = vmax.f32 %v431, 0.0
    %v433 = vpack.c.bf16 %v432, %v432
    %434 = vst [vmem:[#allocation2] sm:$0xf] %v433
    %v435 = vld [vmem:[%s0] sm:$0xff]
    %v437 = vunpack.c.l.b16 %v435
    %v438 = vunpack.c.h.b16 %v435
    %v439 = vpack.c.b16 %v437, %v437
    %v440 = vpack.c.b16 %v438, %v438
    %441 = vrot.lane.b32.xlu0 %v439, 72
    %v442 = vpop.permute.xlu0 %441
    %443 = vrot.lane.b32.xlu0 %v440, 72
    %v444 = vpop.permute.xlu0 %443
    %vm445 = vcmask 588800
    %v446 = vsel %vm445, %v442, %v444
    %v449 = vsel %vm326, %v444, 0
    %451 = vmatprep.subr.bf16.mxu0 %v293
    %452 = vmatpush1.bf16.msra.mxu0 %v292
    %453 = vmatprep.subr.bf16.mxu0 %v295
    %454 = vmatpush1.bf16.msra.mxu0 %v294
    %455 = vmatprep.subr.bf16.mxu0 %v297
    %456 = vmatpush1.bf16.msra.mxu0 %v296
    %457 = vmatprep.subr.bf16.mxu0 %v299
    %458 = vmatpush1.bf16.msra.mxu0 %v298
    %459 = vmatprep.subr.bf16.mxu0 %v301
    %460 = vmatpush1.bf16.msra.mxu0 %v300
    %461 = vmatprep.subr.bf16.mxu0 %v303
    %462 = vmatpush1.bf16.msra.mxu0 %v302
    %463 = vmatprep.subr.bf16.mxu0 %v305
    %464 = vmatpush1.bf16.msra.mxu0 %v304
    %465 = vmatprep.subr.bf16.mxu0 %v307
    %466 = vmatpush1.bf16.msra.mxu0 %v306
    %467 = vmatprep.subr.bf16.mxu0 %v335
    %468 = vmatpush1.bf16.msra.mxu0 %v332
    %469 = vmatprep.subr.bf16.mxu0 0
    %470 = vmatpush1.bf16.msra.mxu0 0
    %471 = vmatprep.subr.bf16.mxu0 0
    %472 = vmatpush1.bf16.msra.mxu0 0
    %473 = vmatprep.subr.bf16.mxu0 0
    %474 = vmatpush1.bf16.msra.mxu0 0
    %475 = vmatprep.subr.bf16.mxu0 0
    %476 = vmatpush1.bf16.msra.mxu0 0
    %477 = vmatprep.subr.bf16.mxu0 0
    %478 = vmatpush1.bf16.msra.mxu0 0
    %479 = vmatprep.subr.bf16.mxu0 0
    %480 = vmatpush1.bf16.msra.mxu0 0
    %481 = vmatprep.subr.bf16.mxu0 0
    %482 = vmatpush1.bf16.msra.mxu0 0
    %483 = vmatprep.mubr.bf16.mxu0 %v449
    %484 = vmatmul.mubr.bf16.gmra.mrb[0].mxu0 %v446
    %v485 = vpop.f32.mrb[0].mxu0
    %v486 = vadd.f32 %v225, %v485
    %v487 = vpop.f32.mrb[0].mxu0
    %v488 = vadd.f32 %v229, %v487
    %v489 = vpop.f32.mrb[0].mxu0
    %v490 = vpop.f32.mrb[0].mxu0
    %491 = vdwg.mxu0
    %492 = vrot.lane.b32.xlu0 %v439, 44
    %v493 = vpop.permute.xlu0 %492
    %494 = vrot.lane.b32.xlu0 %v440, 44
    %v495 = vpop.permute.xlu0 %494
    %vm496 = vcmask 359424
    %v497 = vsel %vm496, %v493, %v495
    %v500 = vsel %vm326, %v495, 0
    %502 = vmatprep.subr.bf16.mxu0 %v293
    %503 = vmatpush1.bf16.msra.mxu0 %v292
    %504 = vmatprep.subr.bf16.mxu0 %v295
    %505 = vmatpush1.bf16.msra.mxu0 %v294
    %506 = vmatprep.subr.bf16.mxu0 %v297
    %507 = vmatpush1.bf16.msra.mxu0 %v296
    %508 = vmatprep.subr.bf16.mxu0 %v299
    %509 = vmatpush1.bf16.msra.mxu0 %v298
    %510 = vmatprep.subr.bf16.mxu0 %v301
    %511 = vmatpush1.bf16.msra.mxu0 %v300
    %512 = vmatprep.subr.bf16.mxu0 %v303
    %513 = vmatpush1.bf16.msra.mxu0 %v302
    %514 = vmatprep.subr.bf16.mxu0 %v305
    %515 = vmatpush1.bf16.msra.mxu0 %v304
    %516 = vmatprep.subr.bf16.mxu0 %v307
    %517 = vmatpush1.bf16.msra.mxu0 %v306
    %518 = vmatprep.subr.bf16.mxu0 %v335
    %519 = vmatpush1.bf16.msra.mxu0 %v332
    %520 = vmatprep.subr.bf16.mxu0 0
    %521 = vmatpush1.bf16.msra.mxu0 0
    %522 = vmatprep.subr.bf16.mxu0 0
    %523 = vmatpush1.bf16.msra.mxu0 0
    %524 = vmatprep.subr.bf16.mxu0 0
    %525 = vmatpush1.bf16.msra.mxu0 0
    %526 = vmatprep.subr.bf16.mxu0 0
    %527 = vmatpush1.bf16.msra.mxu0 0
    %528 = vmatprep.subr.bf16.mxu0 0
    %529 = vmatpush1.bf16.msra.mxu0 0
    %530 = vmatprep.subr.bf16.mxu0 0
    %531 = vmatpush1.bf16.msra.mxu0 0
    %532 = vmatprep.subr.bf16.mxu0 0
    %533 = vmatpush1.bf16.msra.mxu0 0
    %534 = vmatprep.mubr.bf16.mxu0 %v500
    %535 = vmatmul.mubr.bf16.gmra.mrb[0].mxu0 %v497
    %v536 = vpop.f32.mrb[0].mxu0
    %v537 = vadd.f32 %v225, %v536
    %v538 = vpop.f32.mrb[0].mxu0
    %v539 = vadd.f32 %v229, %v538
    %v540 = vpop.f32.mrb[0].mxu0
    %v541 = vpop.f32.mrb[0].mxu0
    %542 = vdwg.mxu0
    %v543 = vmax.f32 %v486, %v488
    %v544 = vmax.f32 %v537, %v539
    %v545 = vmax.f32 %v543, %v544
    %v546 = vmax.f32 %v545, 0.0
    %v547 = vpack.c.bf16 %v546, %v546
    %548 = vst [vmem:[#allocation2 + $0x4] sm:$0xf] %v547
    %v549 = vld [vmem:[%s0] sm:$0xff]
    %v550 = vld [vmem:[%s0 + $0x4] sm:$0xff]
    %v552 = vunpack.c.l.b16 %v549
    %v553 = vunpack.c.h.b16 %v549
    %v554 = vpack.c.b16 %v552, %v552
    %v555 = vpack.c.b16 %v553, %v553
    %556 = vrot.lane.b32.xlu0 %v554, 16
    %v557 = vpop.permute.xlu0 %556
    %558 = vrot.lane.b32.xlu0 %v555, 16
    %v559 = vpop.permute.xlu0 %558
    %vm560 = vcmask 130048
    %v561 = vsel %vm560, %v557, %v559
    %v564 = vsel %vm326, %v559, 0
    %566 = vmatprep.subr.bf16.mxu0 %v293
    %567 = vmatpush1.bf16.msra.mxu0 %v292
    %568 = vmatprep.subr.bf16.mxu0 %v295
    %569 = vmatpush1.bf16.msra.mxu0 %v294
    %570 = vmatprep.subr.bf16.mxu0 %v297
    %571 = vmatpush1.bf16.msra.mxu0 %v296
    %572 = vmatprep.subr.bf16.mxu0 %v299
    %573 = vmatpush1.bf16.msra.mxu0 %v298
    %574 = vmatprep.subr.bf16.mxu0 %v301
    %575 = vmatpush1.bf16.msra.mxu0 %v300
    %576 = vmatprep.subr.bf16.mxu0 %v303
    %577 = vmatpush1.bf16.msra.mxu0 %v302
    %578 = vmatprep.subr.bf16.mxu0 %v305
    %579 = vmatpush1.bf16.msra.mxu0 %v304
    %580 = vmatprep.subr.bf16.mxu0 %v307
    %581 = vmatpush1.bf16.msra.mxu0 %v306
    %582 = vmatprep.subr.bf16.mxu0 %v335
    %583 = vmatpush1.bf16.msra.mxu0 %v332
    %584 = vmatprep.subr.bf16.mxu0 0
    %585 = vmatpush1.bf16.msra.mxu0 0
    %586 = vmatprep.subr.bf16.mxu0 0
    %587 = vmatpush1.bf16.msra.mxu0 0
    %588 = vmatprep.subr.bf16.mxu0 0
    %589 = vmatpush1.bf16.msra.mxu0 0
    %590 = vmatprep.subr.bf16.mxu0 0
    %591 = vmatpush1.bf16.msra.mxu0 0
    %592 = vmatprep.subr.bf16.mxu0 0
    %593 = vmatpush1.bf16.msra.mxu0 0
    %594 = vmatprep.subr.bf16.mxu0 0
    %595 = vmatpush1.bf16.msra.mxu0 0
    %596 = vmatprep.subr.bf16.mxu0 0
    %597 = vmatpush1.bf16.msra.mxu0 0
    %598 = vmatprep.mubr.bf16.mxu0 %v564
    %599 = vmatmul.mubr.bf16.gmra.mrb[0].mxu0 %v561
    %v600 = vpop.f32.mrb[0].mxu0
    %v601 = vadd.f32 %v225, %v600
    %v602 = vpop.f32.mrb[0].mxu0
    %v603 = vadd.f32 %v229, %v602
    %v604 = vpop.f32.mrb[0].mxu0
    %v605 = vpop.f32.mrb[0].mxu0
    %606 = vdwg.mxu0
    %v608 = vunpack.c.l.b16 %v550
    %v609 = vunpack.c.h.b16 %v550
    %v610 = vpack.c.b16 %v608, %v608
    %v611 = vpack.c.b16 %v609, %v609
    %612 = vrot.lane.b32.xlu0 %v610, 116
    %v613 = vpop.permute.xlu0 %612
    %614 = vrot.lane.b32.xlu0 %v611, 116
    %v615 = vpop.permute.xlu0 %614
    %vm616 = vcmask 949248
    %v617 = vsel %vm616, %v613, %v615
    %v620 = vsel %vm326, %v615, 0
    %622 = vmatprep.subr.bf16.mxu0 %v293
    %623 = vmatpush1.bf16.msra.mxu0 %v292
    %624 = vmatprep.subr.bf16.mxu0 %v295
    %625 = vmatpush1.bf16.msra.mxu0 %v294
    %626 = vmatprep.subr.bf16.mxu0 %v297
    %627 = vmatpush1.bf16.msra.mxu0 %v296
    %628 = vmatprep.subr.bf16.mxu0 %v299
    %629 = vmatpush1.bf16.msra.mxu0 %v298
    %630 = vmatprep.subr.bf16.mxu0 %v301
    %631 = vmatpush1.bf16.msra.mxu0 %v300
    %632 = vmatprep.subr.bf16.mxu0 %v303
    %633 = vmatpush1.bf16.msra.mxu0 %v302
    %634 = vmatprep.subr.bf16.mxu0 %v305
    %635 = vmatpush1.bf16.msra.mxu0 %v304
    %636 = vmatprep.subr.bf16.mxu0 %v307
    %637 = vmatpush1.bf16.msra.mxu0 %v306
    %638 = vmatprep.subr.bf16.mxu0 %v335
    %639 = vmatpush1.bf16.msra.mxu0 %v332
    %640 = vmatprep.subr.bf16.mxu0 0
    %641 = vmatpush1.bf16.msra.mxu0 0
    %642 = vmatprep.subr.bf16.mxu0 0
    %643 = vmatpush1.bf16.msra.mxu0 0
    %644 = vmatprep.subr.bf16.mxu0 0
    %645 = vmatpush1.bf16.msra.mxu0 0
    %646 = vmatprep.subr.bf16.mxu0 0
    %647 = vmatpush1.bf16.msra.mxu0 0
    %648 = vmatprep.subr.bf16.mxu0 0
    %649 = vmatpush1.bf16.msra.mxu0 0
    %650 = vmatprep.subr.bf16.mxu0 0
    %651 = vmatpush1.bf16.msra.mxu0 0
    %652 = vmatprep.subr.bf16.mxu0 0
    %653 = vmatpush1.bf16.msra.mxu0 0
    %654 = vmatprep.mubr.bf16.mxu0 %v620
    %655 = vmatmul.mubr.bf16.gmra.mrb[0].mxu0 %v617
    %v656 = vpop.f32.mrb[0].mxu0
    %v657 = vadd.f32 %v225, %v656
    %v658 = vpop.f32.mrb[0].mxu0
    %v659 = vadd.f32 %v229, %v658
    %v660 = vpop.f32.mrb[0].mxu0
    %v661 = vpop.f32.mrb[0].mxu0
    %662 = vdwg.mxu0
    %v663 = vmax.f32 %v601, %v603
    %v664 = vmax.f32 %v657, %v659
    %v665 = vmax.f32 %v663, %v664
    %v666 = vmax.f32 %v665, 0.0
    %v667 = vpack.c.bf16 %v666, %v666
    %668 = vst [vmem:[#allocation2 + $0x8] sm:$0xf] %v667
    %v669 = vld [vmem:[%s0 + $0x4] sm:$0xff]
    %v671 = vunpack.c.l.b16 %v669
    %v672 = vunpack.c.h.b16 %v669
    %v673 = vpack.c.b16 %v671, %v671
    %v674 = vpack.c.b16 %v672, %v672
    %675 = vrot.lane.b32.xlu0 %v673, 88
    %v676 = vpop.permute.xlu0 %675
    %677 = vrot.lane.b32.xlu0 %v674, 88
    %v678 = vpop.permute.xlu0 %677
    %vm679 = vcmask 719872
    %v680 = vsel %vm679, %v676, %v678
    %v683 = vsel %vm326, %v678, 0
    %685 = vmatprep.subr.bf16.mxu0 %v293
    %686 = vmatpush1.bf16.msra.mxu0 %v292
    %687 = vmatprep.subr.bf16.mxu0 %v295
    %688 = vmatpush1.bf16.msra.mxu0 %v294
    %689 = vmatprep.subr.bf16.mxu0 %v297
    %690 = vmatpush1.bf16.msra.mxu0 %v296
    %691 = vmatprep.subr.bf16.mxu0 %v299
    %692 = vmatpush1.bf16.msra.mxu0 %v298
    %693 = vmatprep.subr.bf16.mxu0 %v301
    %694 = vmatpush1.bf16.msra.mxu0 %v300
    %695 = vmatprep.subr.bf16.mxu0 %v303
    %696 = vmatpush1.bf16.msra.mxu0 %v302
    %697 = vmatprep.subr.bf16.mxu0 %v305
    %698 = vmatpush1.bf16.msra.mxu0 %v304
    %699 = vmatprep.subr.bf16.mxu0 %v307
    %700 = vmatpush1.bf16.msra.mxu0 %v306
    %701 = vmatprep.subr.bf16.mxu0 %v335
    %702 = vmatpush1.bf16.msra.mxu0 %v332
    %703 = vmatprep.subr.bf16.mxu0 0
    %704 = vmatpush1.bf16.msra.mxu0 0
    %705 = vmatprep.subr.bf16.mxu0 0
    %706 = vmatpush1.bf16.msra.mxu0 0
    %707 = vmatprep.subr.bf16.mxu0 0
    %708 = vmatpush1.bf16.msra.mxu0 0
    %709 = vmatprep.subr.bf16.mxu0 0
    %710 = vmatpush1.bf16.msra.mxu0 0
    %711 = vmatprep.subr.bf16.mxu0 0
    %712 = vmatpush1.bf16.msra.mxu0 0
    %713 = vmatprep.subr.bf16.mxu0 0
    %714 = vmatpush1.bf16.msra.mxu0 0
    %715 = vmatprep.subr.bf16.mxu0 0
    %716 = vmatpush1.bf16.msra.mxu0 0
    %717 = vmatprep.mubr.bf16.mxu0 %v683
    %718 = vmatmul.mubr.bf16.gmra.mrb[0].mxu0 %v680
    %v719 = vpop.f32.mrb[0].mxu0
    %v720 = vadd.f32 %v225, %v719
    %v721 = vpop.f32.mrb[0].mxu0
    %v722 = vadd.f32 %v229, %v721
    %v723 = vpop.f32.mrb[0].mxu0
    %v724 = vpop.f32.mrb[0].mxu0
    %725 = vdwg.mxu0
    %726 = vrot.lane.b32.xlu0 %v673, 60
    %v727 = vpop.permute.xlu0 %726
    %728 = vrot.lane.b32.xlu0 %v674, 60
    %v729 = vpop.permute.xlu0 %728
    %vm730 = vcmask 490496
    %v731 = vsel %vm730, %v727, %v729
    %v734 = vsel %vm326, %v729, 0
    %736 = vmatprep.subr.bf16.mxu0 %v293
    %737 = vmatpush1.bf16.msra.mxu0 %v292
    %738 = vmatprep.subr.bf16.mxu0 %v295
    %739 = vmatpush1.bf16.msra.mxu0 %v294
    %740 = vmatprep.subr.bf16.mxu0 %v297
    %741 = vmatpush1.bf16.msra.mxu0 %v296
    %742 = vmatprep.subr.bf16.mxu0 %v299
    %743 = vmatpush1.bf16.msra.mxu0 %v298
    %744 = vmatprep.subr.bf16.mxu0 %v301
    %745 = vmatpush1.bf16.msra.mxu0 %v300
    %746 = vmatprep.subr.bf16.mxu0 %v303
    %747 = vmatpush1.bf16.msra.mxu0 %v302
    %748 = vmatprep.subr.bf16.mxu0 %v305
    %749 = vmatpush1.bf16.msra.mxu0 %v304
    %750 = vmatprep.subr.bf16.mxu0 %v307
    %751 = vmatpush1.bf16.msra.mxu0 %v306
    %752 = vmatprep.subr.bf16.mxu0 %v335
    %753 = vmatpush1.bf16.msra.mxu0 %v332
    %754 = vmatprep.subr.bf16.mxu0 0
    %755 = vmatpush1.bf16.msra.mxu0 0
    %756 = vmatprep.subr.bf16.mxu0 0
    %757 = vmatpush1.bf16.msra.mxu0 0
    %758 = vmatprep.subr.bf16.mxu0 0
    %759 = vmatpush1.bf16.msra.mxu0 0
    %760 = vmatprep.subr.bf16.mxu0 0
    %761 = vmatpush1.bf16.msra.mxu0 0
    %762 = vmatprep.subr.bf16.mxu0 0
    %763 = vmatpush1.bf16.msra.mxu0 0
    %764 = vmatprep.subr.bf16.mxu0 0
    %765 = vmatpush1.bf16.msra.mxu0 0
    %766 = vmatprep.subr.bf16.mxu0 0
    %767 = vmatpush1.bf16.msra.mxu0 0
    %768 = vmatprep.mubr.bf16.mxu0 %v734
    %769 = vmatmul.mubr.bf16.gmra.mrb[0].mxu0 %v731
    %v770 = vpop.f32.mrb[0].mxu0
    %v771 = vadd.f32 %v225, %v770
    %v772 = vpop.f32.mrb[0].mxu0
    %v773 = vadd.f32 %v229, %v772
    %v774 = vpop.f32.mrb[0].mxu0
    %v775 = vpop.f32.mrb[0].mxu0
    %776 = vdwg.mxu0
    %v777 = vmax.f32 %v720, %v722
    %v778 = vmax.f32 %v771, %v773
    %v779 = vmax.f32 %v777, %v778
    %v780 = vmax.f32 %v779, 0.0
    %v781 = vpack.c.bf16 %v780, %v780
    %782 = vst [vmem:[#allocation2 + $0xc] sm:$0xf] %v781
    %v783 = vld [vmem:[%s0 + $0x4] sm:$0xff]
    %v784 = vld [vmem:[%s0 + $0xc] sm:$0xf]
    %v786 = vunpack.c.l.b16 %v783
    %v787 = vunpack.c.h.b16 %v783
    %v788 = vpack.c.b16 %v786, %v786
    %v789 = vpack.c.b16 %v787, %v787
    %790 = vrot.lane.b32.xlu0 %v788, 32
    %v791 = vpop.permute.xlu0 %790
    %792 = vrot.lane.b32.xlu0 %v789, 32
    %v793 = vpop.permute.xlu0 %792
    %vm794 = vcmask 261120
    %v795 = vsel %vm794, %v791, %v793
    %v798 = vsel %vm326, %v793, 0
    %800 = vmatprep.subr.bf16.mxu0 %v293
    %801 = vmatpush1.bf16.msra.mxu0 %v292
    %802 = vmatprep.subr.bf16.mxu0 %v295
    %803 = vmatpush1.bf16.msra.mxu0 %v294
    %804 = vmatprep.subr.bf16.mxu0 %v297
    %805 = vmatpush1.bf16.msra.mxu0 %v296
    %806 = vmatprep.subr.bf16.mxu0 %v299
    %807 = vmatpush1.bf16.msra.mxu0 %v298
    %808 = vmatprep.subr.bf16.mxu0 %v301
    %809 = vmatpush1.bf16.msra.mxu0 %v300
    %810 = vmatprep.subr.bf16.mxu0 %v303
    %811 = vmatpush1.bf16.msra.mxu0 %v302
    %812 = vmatprep.subr.bf16.mxu0 %v305
    %813 = vmatpush1.bf16.msra.mxu0 %v304
    %814 = vmatprep.subr.bf16.mxu0 %v307
    %815 = vmatpush1.bf16.msra.mxu0 %v306
    %816 = vmatprep.subr.bf16.mxu0 %v335
    %817 = vmatpush1.bf16.msra.mxu0 %v332
    %818 = vmatprep.subr.bf16.mxu0 0
    %819 = vmatpush1.bf16.msra.mxu0 0
    %820 = vmatprep.subr.bf16.mxu0 0
    %821 = vmatpush1.bf16.msra.mxu0 0
    %822 = vmatprep.subr.bf16.mxu0 0
    %823 = vmatpush1.bf16.msra.mxu0 0
    %824 = vmatprep.subr.bf16.mxu0 0
    %825 = vmatpush1.bf16.msra.mxu0 0
    %826 = vmatprep.subr.bf16.mxu0 0
    %827 = vmatpush1.bf16.msra.mxu0 0
    %828 = vmatprep.subr.bf16.mxu0 0
    %829 = vmatpush1.bf16.msra.mxu0 0
    %830 = vmatprep.subr.bf16.mxu0 0
    %831 = vmatpush1.bf16.msra.mxu0 0
    %832 = vmatprep.mubr.bf16.mxu0 %v798
    %833 = vmatmul.mubr.bf16.gmra.mrb[0].mxu0 %v795
    %v834 = vpop.f32.mrb[0].mxu0
    %v835 = vadd.f32 %v225, %v834
    %v836 = vpop.f32.mrb[0].mxu0
    %v837 = vadd.f32 %v229, %v836
    %v838 = vpop.f32.mrb[0].mxu0
    %v839 = vpop.f32.mrb[0].mxu0
    %840 = vdwg.mxu0
    %v842 = vunpack.c.l.b16 %v784
    %v843 = vpack.c.b16 %v842, %v842
    %844 = vrot.lane.b32.xlu0 %v788, 4
    %v845 = vpop.permute.xlu0 %844
    %846 = vrot.lane.b32.xlu0 %v789, 4
    %v847 = vpop.permute.xlu0 %846
    %848 = vrot.lane.b32.xlu0 %v843, 4
    %v849 = vpop.permute.xlu0 %848
    %vm850 = vcmask 31744
    %v851 = vsel %vm850, %v845, %v847
    %v852 = vsel %vm850, %v847, %v849
    %v855 = vsel %vm326, %v852, 0
    %857 = vmatprep.subr.bf16.mxu0 %v293
    %858 = vmatpush1.bf16.msra.mxu0 %v292
    %859 = vmatprep.subr.bf16.mxu0 %v295
    %860 = vmatpush1.bf16.msra.mxu0 %v294
    %861 = vmatprep.subr.bf16.mxu0 %v297
    %862 = vmatpush1.bf16.msra.mxu0 %v296
    %863 = vmatprep.subr.bf16.mxu0 %v299
    %864 = vmatpush1.bf16.msra.mxu0 %v298
    %865 = vmatprep.subr.bf16.mxu0 %v301
    %866 = vmatpush1.bf16.msra.mxu0 %v300
    %867 = vmatprep.subr.bf16.mxu0 %v303
    %868 = vmatpush1.bf16.msra.mxu0 %v302
    %869 = vmatprep.subr.bf16.mxu0 %v305
    %870 = vmatpush1.bf16.msra.mxu0 %v304
    %871 = vmatprep.subr.bf16.mxu0 %v307
    %872 = vmatpush1.bf16.msra.mxu0 %v306
    %873 = vmatprep.subr.bf16.mxu0 %v335
    %874 = vmatpush1.bf16.msra.mxu0 %v332
    %875 = vmatprep.subr.bf16.mxu0 0
    %876 = vmatpush1.bf16.msra.mxu0 0
    %877 = vmatprep.subr.bf16.mxu0 0
    %878 = vmatpush1.bf16.msra.mxu0 0
    %879 = vmatprep.subr.bf16.mxu0 0
    %880 = vmatpush1.bf16.msra.mxu0 0
    %881 = vmatprep.subr.bf16.mxu0 0
    %882 = vmatpush1.bf16.msra.mxu0 0
    %883 = vmatprep.subr.bf16.mxu0 0
    %884 = vmatpush1.bf16.msra.mxu0 0
    %885 = vmatprep.subr.bf16.mxu0 0
    %886 = vmatpush1.bf16.msra.mxu0 0
    %887 = vmatprep.subr.bf16.mxu0 0
    %888 = vmatpush1.bf16.msra.mxu0 0
    %889 = vmatprep.mubr.bf16.mxu0 %v855
    %890 = vmatmul.mubr.bf16.gmra.mrb[0].mxu0 %v851
    %v891 = vpop.f32.mrb[0].mxu0
    %v892 = vadd.f32 %v225, %v891
    %v893 = vpop.f32.mrb[0].mxu0
    %v894 = vadd.f32 %v229, %v893
    %v895 = vpop.f32.mrb[0].mxu0
    %v896 = vpop.f32.mrb[0].mxu0
    %897 = vdwg.mxu0
    %v898 = vmax.f32 %v835, %v837
    %v899 = vmax.f32 %v892, %v894
    %v900 = vmax.f32 %v898, %v899
    %v901 = vmax.f32 %v900, 0.0
    %v902 = vpack.c.bf16 %v901, %v901
    %903 = vst [vmem:[#allocation2 + $0x10] sm:$0xf] %v902
    %v904 = vld [vmem:[%s0 + $0x8] sm:$0xff]
    %v906 = vunpack.c.l.b16 %v904
    %v907 = vunpack.c.h.b16 %v904
    %v908 = vpack.c.b16 %v906, %v906
    %v909 = vpack.c.b16 %v907, %v907
    %910 = vrot.lane.b32.xlu0 %v908, 104
    %v911 = vpop.permute.xlu0 %910
    %912 = vrot.lane.b32.xlu0 %v909, 104
    %v913 = vpop.permute.xlu0 %912
    %vm914 = vcmask 850944
    %v915 = vsel %vm914, %v911, %v913
    %v918 = vsel %vm326, %v913, 0
    %920 = vmatprep.subr.bf16.mxu0 %v293
    %921 = vmatpush1.bf16.msra.mxu0 %v292
    %922 = vmatprep.subr.bf16.mxu0 %v295
    %923 = vmatpush1.bf16.msra.mxu0 %v294
    %924 = vmatprep.subr.bf16.mxu0 %v297
    %925 = vmatpush1.bf16.msra.mxu0 %v296
    %926 = vmatprep.subr.bf16.mxu0 %v299
    %927 = vmatpush1.bf16.msra.mxu0 %v298
    %928 = vmatprep.subr.bf16.mxu0 %v301
    %929 = vmatpush1.bf16.msra.mxu0 %v300
    %930 = vmatprep.subr.bf16.mxu0 %v303
    %931 = vmatpush1.bf16.msra.mxu0 %v302
    %932 = vmatprep.subr.bf16.mxu0 %v305
    %933 = vmatpush1.bf16.msra.mxu0 %v304
    %934 = vmatprep.subr.bf16.mxu0 %v307
    %935 = vmatpush1.bf16.msra.mxu0 %v306
    %936 = vmatprep.subr.bf16.mxu0 %v335
    %937 = vmatpush1.bf16.msra.mxu0 %v332
    %938 = vmatprep.subr.bf16.mxu0 0
    %939 = vmatpush1.bf16.msra.mxu0 0
    %940 = vmatprep.subr.bf16.mxu0 0
    %941 = vmatpush1.bf16.msra.mxu0 0
    %942 = vmatprep.subr.bf16.mxu0 0
    %943 = vmatpush1.bf16.msra.mxu0 0
    %944 = vmatprep.subr.bf16.mxu0 0
    %945 = vmatpush1.bf16.msra.mxu0 0
    %946 = vmatprep.subr.bf16.mxu0 0
    %947 = vmatpush1.bf16.msra.mxu0 0
    %948 = vmatprep.subr.bf16.mxu0 0
    %949 = vmatpush1.bf16.msra.mxu0 0
    %950 = vmatprep.subr.bf16.mxu0 0
    %951 = vmatpush1.bf16.msra.mxu0 0
    %952 = vmatprep.mubr.bf16.mxu0 %v918
    %953 = vmatmul.mubr.bf16.gmra.mrb[0].mxu0 %v915
    %v954 = vpop.f32.mrb[0].mxu0
    %v955 = vadd.f32 %v225, %v954
    %v956 = vpop.f32.mrb[0].mxu0
    %v957 = vadd.f32 %v229, %v956
    %v958 = vpop.f32.mrb[0].mxu0
    %v959 = vpop.f32.mrb[0].mxu0
    %960 = vdwg.mxu0
    %961 = vrot.lane.b32.xlu0 %v908, 76
    %v962 = vpop.permute.xlu0 %961
    %963 = vrot.lane.b32.xlu0 %v909, 76
    %v964 = vpop.permute.xlu0 %963
    %vm965 = vcmask 621568
    %v966 = vsel %vm965, %v962, %v964
    %v969 = vsel %vm326, %v964, 0
    %971 = vmatprep.subr.bf16.mxu0 %v293
    %972 = vmatpush1.bf16.msra.mxu0 %v292
    %973 = vmatprep.subr.bf16.mxu0 %v295
    %974 = vmatpush1.bf16.msra.mxu0 %v294
    %975 = vmatprep.subr.bf16.mxu0 %v297
    %976 = vmatpush1.bf16.msra.mxu0 %v296
    %977 = vmatprep.subr.bf16.mxu0 %v299
    %978 = vmatpush1.bf16.msra.mxu0 %v298
    %979 = vmatprep.subr.bf16.mxu0 %v301
    %980 = vmatpush1.bf16.msra.mxu0 %v300
    %981 = vmatprep.subr.bf16.mxu0 %v303
    %982 = vmatpush1.bf16.msra.mxu0 %v302
    %983 = vmatprep.subr.bf16.mxu0 %v305
    %984 = vmatpush1.bf16.msra.mxu0 %v304
    %985 = vmatprep.subr.bf16.mxu0 %v307
    %986 = vmatpush1.bf16.msra.mxu0 %v306
    %987 = vmatprep.subr.bf16.mxu0 %v335
    %988 = vmatpush1.bf16.msra.mxu0 %v332
    %989 = vmatprep.subr.bf16.mxu0 0
    %990 = vmatpush1.bf16.msra.mxu0 0
    %991 = vmatprep.subr.bf16.mxu0 0
    %992 = vmatpush1.bf16.msra.mxu0 0
    %993 = vmatprep.subr.bf16.mxu0 0
    %994 = vmatpush1.bf16.msra.mxu0 0
    %995 = vmatprep.subr.bf16.mxu0 0
    %996 = vmatpush1.bf16.msra.mxu0 0
    %997 = vmatprep.subr.bf16.mxu0 0
    %998 = vmatpush1.bf16.msra.mxu0 0
    %999 = vmatprep.subr.bf16.mxu0 0
    %1000 = vmatpush1.bf16.msra.mxu0 0
    %1001 = vmatprep.subr.bf16.mxu0 0
    %1002 = vmatpush1.bf16.msra.mxu0 0
    %1003 = vmatprep.mubr.bf16.mxu0 %v969
    %1004 = vmatmul.mubr.bf16.gmra.mrb[0].mxu0 %v966
    %v1005 = vpop.f32.mrb[0].mxu0
    %v1006 = vadd.f32 %v225, %v1005
    %v1007 = vpop.f32.mrb[0].mxu0
    %v1008 = vadd.f32 %v229, %v1007
    %v1009 = vpop.f32.mrb[0].mxu0
    %v1010 = vpop.f32.mrb[0].mxu0
    %1011 = vdwg.mxu0
    %v1012 = vmax.f32 %v955, %v957
    %v1013 = vmax.f32 %v1006, %v1008
    %v1014 = vmax.f32 %v1012, %v1013
    %v1015 = vmax.f32 %v1014, 0.0
    %v1016 = vpack.c.bf16 %v1015, %v1015
    %1017 = vst [vmem:[#allocation2 + $0x14] sm:$0xf] %v1016
    %v1018 = vld [vmem:[%s0 + $0x8] sm:$0xff]
    %v1020 = vunpack.c.l.b16 %v1018
    %v1021 = vunpack.c.h.b16 %v1018
    %v1022 = vpack.c.b16 %v1020, %v1020
    %v1023 = vpack.c.b16 %v1021, %v1021
    %1024 = vrot.lane.b32.xlu0 %v1022, 48
    %v1025 = vpop.permute.xlu0 %1024
    %1026 = vrot.lane.b32.xlu0 %v1023, 48
    %v1027 = vpop.permute.xlu0 %1026
    %vm1028 = vcmask 392192
    %v1029 = vsel %vm1028, %v1025, %v1027
    %v1032 = vsel %vm326, %v1027, 0
    %1034 = vmatprep.subr.bf16.mxu0 %v293
    %1035 = vmatpush1.bf16.msra.mxu0 %v292
    %1036 = vmatprep.subr.bf16.mxu0 %v295
    %1037 = vmatpush1.bf16.msra.mxu0 %v294
    %1038 = vmatprep.subr.bf16.mxu0 %v297
    %1039 = vmatpush1.bf16.msra.mxu0 %v296
    %1040 = vmatprep.subr.bf16.mxu0 %v299
    %1041 = vmatpush1.bf16.msra.mxu0 %v298
    %1042 = vmatprep.subr.bf16.mxu0 %v301
    %1043 = vmatpush1.bf16.msra.mxu0 %v300
    %1044 = vmatprep.subr.bf16.mxu0 %v303
    %1045 = vmatpush1.bf16.msra.mxu0 %v302
    %1046 = vmatprep.subr.bf16.mxu0 %v305
    %1047 = vmatpush1.bf16.msra.mxu0 %v304
    %1048 = vmatprep.subr.bf16.mxu0 %v307
    %1049 = vmatpush1.bf16.msra.mxu0 %v306
    %1050 = vmatprep.subr.bf16.mxu0 %v335
    %1051 = vmatpush1.bf16.msra.mxu0 %v332
    %1052 = vmatprep.subr.bf16.mxu0 0
    %1053 = vmatpush1.bf16.msra.mxu0 0
    %1054 = vmatprep.subr.bf16.mxu0 0
    %1055 = vmatpush1.bf16.msra.mxu0 0
    %1056 = vmatprep.subr.bf16.mxu0 0
    %1057 = vmatpush1.bf16.msra.mxu0 0
    %1058 = vmatprep.subr.bf16.mxu0 0
    %1059 = vmatpush1.bf16.msra.mxu0 0
    %1060 = vmatprep.subr.bf16.mxu0 0
    %1061 = vmatpush1.bf16.msra.mxu0 0
    %1062 = vmatprep.subr.bf16.mxu0 0
    %1063 = vmatpush1.bf16.msra.mxu0 0
    %1064 = vmatprep.subr.bf16.mxu0 0
    %1065 = vmatpush1.bf16.msra.mxu0 0
    %1066 = vmatprep.mubr.bf16.mxu0 %v1032
    %1067 = vmatmul.mubr.bf16.gmra.mrb[0].mxu0 %v1029
    %v1068 = vpop.f32.mrb[0].mxu0
    %v1069 = vadd.f32 %v225, %v1068
    %v1070 = vpop.f32.mrb[0].mxu0
    %v1071 = vadd.f32 %v229, %v1070
    %v1072 = vpop.f32.mrb[0].mxu0
    %v1073 = vpop.f32.mrb[0].mxu0
    %1074 = vdwg.mxu0
    %1075 = vrot.lane.b32.xlu0 %v1022, 20
    %v1076 = vpop.permute.xlu0 %1075
    %1077 = vrot.lane.b32.xlu0 %v1023, 20
    %v1078 = vpop.permute.xlu0 %1077
    %vm1079 = vcmask 162816
    %v1080 = vsel %vm1079, %v1076, %v1078
    %v1083 = vsel %vm326, %v1078, 0
    %1085 = vmatprep.subr.bf16.mxu0 %v293
    %1086 = vmatpush1.bf16.msra.mxu0 %v292
    %1087 = vmatprep.subr.bf16.mxu0 %v295
    %1088 = vmatpush1.bf16.msra.mxu0 %v294
    %1089 = vmatprep.subr.bf16.mxu0 %v297
    %1090 = vmatpush1.bf16.msra.mxu0 %v296
    %1091 = vmatprep.subr.bf16.mxu0 %v299
    %1092 = vmatpush1.bf16.msra.mxu0 %v298
    %1093 = vmatprep.subr.bf16.mxu0 %v301
    %1094 = vmatpush1.bf16.msra.mxu0 %v300
    %1095 = vmatprep.subr.bf16.mxu0 %v303
    %1096 = vmatpush1.bf16.msra.mxu0 %v302
    %1097 = vmatprep.subr.bf16.mxu0 %v305
    %1098 = vmatpush1.bf16.msra.mxu0 %v304
    %1099 = vmatprep.subr.bf16.mxu0 %v307
    %1100 = vmatpush1.bf16.msra.mxu0 %v306
    %1101 = vmatprep.subr.bf16.mxu0 %v335
    %1102 = vmatpush1.bf16.msra.mxu0 %v332
    %1103 = vmatprep.subr.bf16.mxu0 0
    %1104 = vmatpush1.bf16.msra.mxu0 0
    %1105 = vmatprep.subr.bf16.mxu0 0
    %1106 = vmatpush1.bf16.msra.mxu0 0
    %1107 = vmatprep.subr.bf16.mxu0 0
    %1108 = vmatpush1.bf16.msra.mxu0 0
    %1109 = vmatprep.subr.bf16.mxu0 0
    %1110 = vmatpush1.bf16.msra.mxu0 0
    %1111 = vmatprep.subr.bf16.mxu0 0
    %1112 = vmatpush1.bf16.msra.mxu0 0
    %1113 = vmatprep.subr.bf16.mxu0 0
    %1114 = vmatpush1.bf16.msra.mxu0 0
    %1115 = vmatprep.subr.bf16.mxu0 0
    %1116 = vmatpush1.bf16.msra.mxu0 0
    %1117 = vmatprep.mubr.bf16.mxu0 %v1083
    %1118 = vmatmul.mubr.bf16.gmra.mrb[0].mxu0 %v1080
    %v1119 = vpop.f32.mrb[0].mxu0
    %v1120 = vadd.f32 %v225, %v1119
    %v1121 = vpop.f32.mrb[0].mxu0
    %v1122 = vadd.f32 %v229, %v1121
    %v1123 = vpop.f32.mrb[0].mxu0
    %v1124 = vpop.f32.mrb[0].mxu0
    %1125 = vdwg.mxu0
    %v1126 = vmax.f32 %v1069, %v1071
    %v1127 = vmax.f32 %v1120, %v1122
    %v1128 = vmax.f32 %v1126, %v1127
    %v1129 = vmax.f32 %v1128, 0.0
    %v1130 = vpack.c.bf16 %v1129, %v1129
    %1131 = vst [vmem:[#allocation2 + $0x18] sm:$0xf] %v1130
    %v1132 = vld [vmem:[%s0 + $0xc] sm:$0xff]
    %v1134 = vunpack.c.l.b16 %v1132
    %v1135 = vunpack.c.h.b16 %v1132
    %v1136 = vpack.c.b16 %v1134, %v1134
    %v1137 = vpack.c.b16 %v1135, %v1135
    %1138 = vrot.lane.b32.xlu0 %v1136, 120
    %v1139 = vpop.permute.xlu0 %1138
    %1140 = vrot.lane.b32.xlu0 %v1137, 120
    %v1141 = vpop.permute.xlu0 %1140
    %vm1142 = vcmask 982016
    %v1143 = vsel %vm1142, %v1139, %v1141
    %v1146 = vsel %vm326, %v1141, 0
    %1148 = vmatprep.subr.bf16.mxu0 %v293
    %1149 = vmatpush1.bf16.msra.mxu0 %v292
    %1150 = vmatprep.subr.bf16.mxu0 %v295
    %1151 = vmatpush1.bf16.msra.mxu0 %v294
    %1152 = vmatprep.subr.bf16.mxu0 %v297
    %1153 = vmatpush1.bf16.msra.mxu0 %v296
    %1154 = vmatprep.subr.bf16.mxu0 %v299
    %1155 = vmatpush1.bf16.msra.mxu0 %v298
    %1156 = vmatprep.subr.bf16.mxu0 %v301
    %1157 = vmatpush1.bf16.msra.mxu0 %v300
    %1158 = vmatprep.subr.bf16.mxu0 %v303
    %1159 = vmatpush1.bf16.msra.mxu0 %v302
    %1160 = vmatprep.subr.bf16.mxu0 %v305
    %1161 = vmatpush1.bf16.msra.mxu0 %v304
    %1162 = vmatprep.subr.bf16.mxu0 %v307
    %1163 = vmatpush1.bf16.msra.mxu0 %v306
    %1164 = vmatprep.subr.bf16.mxu0 %v335
    %1165 = vmatpush1.bf16.msra.mxu0 %v332
    %1166 = vmatprep.subr.bf16.mxu0 0
    %1167 = vmatpush1.bf16.msra.mxu0 0
    %1168 = vmatprep.subr.bf16.mxu0 0
    %1169 = vmatpush1.bf16.msra.mxu0 0
    %1170 = vmatprep.subr.bf16.mxu0 0
    %1171 = vmatpush1.bf16.msra.mxu0 0
    %1172 = vmatprep.subr.bf16.mxu0 0
    %1173 = vmatpush1.bf16.msra.mxu0 0
    %1174 = vmatprep.subr.bf16.mxu0 0
    %1175 = vmatpush1.bf16.msra.mxu0 0
    %1176 = vmatprep.subr.bf16.mxu0 0
    %1177 = vmatpush1.bf16.msra.mxu0 0
    %1178 = vmatprep.subr.bf16.mxu0 0
    %1179 = vmatpush1.bf16.msra.mxu0 0
    %1180 = vmatprep.mubr.bf16.mxu0 %v1146
    %1181 = vmatmul.mubr.bf16.gmra.mrb[0].mxu0 %v1143
    %v1182 = vpop.f32.mrb[0].mxu0
    %v1183 = vadd.f32 %v225, %v1182
    %v1184 = vpop.f32.mrb[0].mxu0
    %v1185 = vadd.f32 %v229, %v1184
    %v1186 = vpop.f32.mrb[0].mxu0
    %v1187 = vpop.f32.mrb[0].mxu0
    %1188 = vdwg.mxu0
    %1189 = vrot.lane.b32.xlu0 %v1136, 92
    %v1190 = vpop.permute.xlu0 %1189
    %1191 = vrot.lane.b32.xlu0 %v1137, 92
    %v1192 = vpop.permute.xlu0 %1191
    %vm1193 = vcmask 752640
    %v1194 = vsel %vm1193, %v1190, %v1192
    %v1197 = vsel %vm326, %v1192, 0
    %1199 = vmatprep.subr.bf16.mxu0 %v293
    %1200 = vmatpush1.bf16.msra.mxu0 %v292
    %1201 = vmatprep.subr.bf16.mxu0 %v295
    %1202 = vmatpush1.bf16.msra.mxu0 %v294
    %1203 = vmatprep.subr.bf16.mxu0 %v297
    %1204 = vmatpush1.bf16.msra.mxu0 %v296
    %1205 = vmatprep.subr.bf16.mxu0 %v299
    %1206 = vmatpush1.bf16.msra.mxu0 %v298
    %1207 = vmatprep.subr.bf16.mxu0 %v301
    %1208 = vmatpush1.bf16.msra.mxu0 %v300
    %1209 = vmatprep.subr.bf16.mxu0 %v303
    %1210 = vmatpush1.bf16.msra.mxu0 %v302
    %1211 = vmatprep.subr.bf16.mxu0 %v305
    %1212 = vmatpush1.bf16.msra.mxu0 %v304
    %1213 = vmatprep.subr.bf16.mxu0 %v307
    %1214 = vmatpush1.bf16.msra.mxu0 %v306
    %1215 = vmatprep.subr.bf16.mxu0 %v335
    %1216 = vmatpush1.bf16.msra.mxu0 %v332
    %1217 = vmatprep.subr.bf16.mxu0 0
    %1218 = vmatpush1.bf16.msra.mxu0 0
    %1219 = vmatprep.subr.bf16.mxu0 0
    %1220 = vmatpush1.bf16.msra.mxu0 0
    %1221 = vmatprep.subr.bf16.mxu0 0
    %1222 = vmatpush1.bf16.msra.mxu0 0
    %1223 = vmatprep.subr.bf16.mxu0 0
    %1224 = vmatpush1.bf16.msra.mxu0 0
    %1225 = vmatprep.subr.bf16.mxu0 0
    %1226 = vmatpush1.bf16.msra.mxu0 0
    %1227 = vmatprep.subr.bf16.mxu0 0
    %1228 = vmatpush1.bf16.msra.mxu0 0
    %1229 = vmatprep.subr.bf16.mxu0 0
    %1230 = vmatpush1.bf16.msra.mxu0 0
    %1231 = vmatprep.mubr.bf16.mxu0 %v1197
    %1232 = vmatmul.mubr.bf16.gmra.mrb[0].mxu0 %v1194
    %v1233 = vpop.f32.mrb[0].mxu0
    %v1234 = vadd.f32 %v225, %v1233
    %v1235 = vpop.f32.mrb[0].mxu0
    %v1236 = vadd.f32 %v229, %v1235
    %v1237 = vpop.f32.mrb[0].mxu0
    %v1238 = vpop.f32.mrb[0].mxu0
    %1239 = vdwg.mxu0
    %v1240 = vmax.f32 %v1183, %v1185
    %v1241 = vmax.f32 %v1234, %v1236
    %v1242 = vmax.f32 %v1240, %v1241
    %v1243 = vmax.f32 %v1242, 0.0
    %v1244 = vpack.c.bf16 %v1243, %v1243
    %1245 = vst [vmem:[#allocation2 + $0x1c] sm:$0xf] %v1244
    %v1246 = vld [vmem:[%s0 + $0xc] sm:$0xff]
    %v1248 = vunpack.c.l.b16 %v1246
    %v1249 = vunpack.c.h.b16 %v1246
    %v1250 = vpack.c.b16 %v1248, %v1248
    %v1251 = vpack.c.b16 %v1249, %v1249
    %1252 = vrot.lane.b32.xlu0 %v1250, 64
    %v1253 = vpop.permute.xlu0 %1252
    %1254 = vrot.lane.b32.xlu0 %v1251, 64
    %v1255 = vpop.permute.xlu0 %1254
    %vm1256 = vcmask 523264
    %v1257 = vsel %vm1256, %v1253, %v1255
    %v1260 = vsel %vm326, %v1255, 0
    %1262 = vmatprep.subr.bf16.mxu0 %v293
    %1263 = vmatpush1.bf16.msra.mxu0 %v292
    %1264 = vmatprep.subr.bf16.mxu0 %v295
    %1265 = vmatpush1.bf16.msra.mxu0 %v294
    %1266 = vmatprep.subr.bf16.mxu0 %v297
    %1267 = vmatpush1.bf16.msra.mxu0 %v296
    %1268 = vmatprep.subr.bf16.mxu0 %v299
    %1269 = vmatpush1.bf16.msra.mxu0 %v298
    %1270 = vmatprep.subr.bf16.mxu0 %v301
    %1271 = vmatpush1.bf16.msra.mxu0 %v300
    %1272 = vmatprep.subr.bf16.mxu0 %v303
    %1273 = vmatpush1.bf16.msra.mxu0 %v302
    %1274 = vmatprep.subr.bf16.mxu0 %v305
    %1275 = vmatpush1.bf16.msra.mxu0 %v304
    %1276 = vmatprep.subr.bf16.mxu0 %v307
    %1277 = vmatpush1.bf16.msra.mxu0 %v306
    %1278 = vmatprep.subr.bf16.mxu0 %v335
    %1279 = vmatpush1.bf16.msra.mxu0 %v332
    %1280 = vmatprep.subr.bf16.mxu0 0
    %1281 = vmatpush1.bf16.msra.mxu0 0
    %1282 = vmatprep.subr.bf16.mxu0 0
    %1283 = vmatpush1.bf16.msra.mxu0 0
    %1284 = vmatprep.subr.bf16.mxu0 0
    %1285 = vmatpush1.bf16.msra.mxu0 0
    %1286 = vmatprep.subr.bf16.mxu0 0
    %1287 = vmatpush1.bf16.msra.mxu0 0
    %1288 = vmatprep.subr.bf16.mxu0 0
    %1289 = vmatpush1.bf16.msra.mxu0 0
    %1290 = vmatprep.subr.bf16.mxu0 0
    %1291 = vmatpush1.bf16.msra.mxu0 0
    %1292 = vmatprep.subr.bf16.mxu0 0
    %1293 = vmatpush1.bf16.msra.mxu0 0
    %1294 = vmatprep.mubr.bf16.mxu0 %v1260
    %1295 = vmatmul.mubr.bf16.gmra.mrb[0].mxu0 %v1257
    %v1296 = vpop.f32.mrb[0].mxu0
    %v1297 = vadd.f32 %v225, %v1296
    %v1298 = vpop.f32.mrb[0].mxu0
    %v1299 = vadd.f32 %v229, %v1298
    %v1300 = vpop.f32.mrb[0].mxu0
    %v1301 = vpop.f32.mrb[0].mxu0
    %1302 = vdwg.mxu0
    %1303 = vrot.lane.b32.xlu0 %v1250, 36
    %v1304 = vpop.permute.xlu0 %1303
    %1305 = vrot.lane.b32.xlu0 %v1251, 36
    %v1306 = vpop.permute.xlu0 %1305
    %vm1307 = vcmask 293888
    %v1308 = vsel %vm1307, %v1304, %v1306
    %v1311 = vsel %vm326, %v1306, 0
    %1313 = vmatprep.subr.bf16.mxu0 %v293
    %1314 = vmatpush1.bf16.msra.mxu0 %v292
    %1315 = vmatprep.subr.bf16.mxu0 %v295
    %1316 = vmatpush1.bf16.msra.mxu0 %v294
    %1317 = vmatprep.subr.bf16.mxu0 %v297
    %1318 = vmatpush1.bf16.msra.mxu0 %v296
    %1319 = vmatprep.subr.bf16.mxu0 %v299
    %1320 = vmatpush1.bf16.msra.mxu0 %v298
    %1321 = vmatprep.subr.bf16.mxu0 %v301
    %1322 = vmatpush1.bf16.msra.mxu0 %v300
    %1323 = vmatprep.subr.bf16.mxu0 %v303
    %1324 = vmatpush1.bf16.msra.mxu0 %v302
    %1325 = vmatprep.subr.bf16.mxu0 %v305
    %1326 = vmatpush1.bf16.msra.mxu0 %v304
    %1327 = vmatprep.subr.bf16.mxu0 %v307
    %1328 = vmatpush1.bf16.msra.mxu0 %v306
    %1329 = vmatprep.subr.bf16.mxu0 %v335
    %1330 = vmatpush1.bf16.msra.mxu0 %v332
    %1331 = vmatprep.subr.bf16.mxu0 0
    %1332 = vmatpush1.bf16.msra.mxu0 0
    %1333 = vmatprep.subr.bf16.mxu0 0
    %1334 = vmatpush1.bf16.msra.mxu0 0
    %1335 = vmatprep.subr.bf16.mxu0 0
    %1336 = vmatpush1.bf16.msra.mxu0 0
    %1337 = vmatprep.subr.bf16.mxu0 0
    %1338 = vmatpush1.bf16.msra.mxu0 0
    %1339 = vmatprep.subr.bf16.mxu0 0
    %1340 = vmatpush1.bf16.msra.mxu0 0
    %1341 = vmatprep.subr.bf16.mxu0 0
    %1342 = vmatpush1.bf16.msra.mxu0 0
    %1343 = vmatprep.subr.bf16.mxu0 0
    %1344 = vmatpush1.bf16.msra.mxu0 0
    %1345 = vmatprep.mubr.bf16.mxu0 %v1311
    %1346 = vmatmul.mubr.bf16.gmra.mrb[0].mxu0 %v1308
    %v1347 = vpop.f32.mrb[0].mxu0
    %v1348 = vadd.f32 %v225, %v1347
    %v1349 = vpop.f32.mrb[0].mxu0
    %v1350 = vadd.f32 %v229, %v1349
    %v1351 = vpop.f32.mrb[0].mxu0
    %v1352 = vpop.f32.mrb[0].mxu0
    %1353 = vdwg.mxu0
    %v1354 = vmax.f32 %v1297, %v1299
    %v1355 = vmax.f32 %v1348, %v1350
    %v1356 = vmax.f32 %v1354, %v1355
    %v1357 = vmax.f32 %v1356, 0.0
    %v1358 = vpack.c.bf16 %v1357, %v1357
    %1359 = vst [vmem:[#allocation2 + $0x20] sm:$0xf] %v1358
    %v1360 = vld [vmem:[%s0 + $0xc] sm:$0xff]
    %v1361 = vld [vmem:[%s0 + $0x14] sm:$0xf]
    %v1362 = vld [vmem:[%s0 + $0x10] sm:$0xff]
    %v1365 = vunpack.c.l.b16 %v1360
    %v1366 = vunpack.c.h.b16 %v1360
    %v1367 = vunpack.c.l.b16 %v1361
    %v1368 = vpack.c.b16 %v1365, %v1365
    %v1369 = vpack.c.b16 %v1366, %v1366
    %v1370 = vpack.c.b16 %v1367, %v1367
    %1371 = vrot.lane.b32.xlu0 %v1368, 8
    %v1372 = vpop.permute.xlu0 %1371
    %1373 = vrot.lane.b32.xlu0 %v1369, 8
    %v1374 = vpop.permute.xlu0 %1373
    %1375 = vrot.lane.b32.xlu0 %v1370, 8
    %v1376 = vpop.permute.xlu0 %1375
    %vm1377 = vcmask 64512
    %v1378 = vsel %vm1377, %v1372, %v1374
    %v1379 = vsel %vm1377, %v1374, %v1376
    %v1382 = vsel %vm326, %v1379, 0
    %1384 = vmatprep.subr.bf16.mxu0 %v293
    %1385 = vmatpush1.bf16.msra.mxu0 %v292
    %1386 = vmatprep.subr.bf16.mxu0 %v295
    %1387 = vmatpush1.bf16.msra.mxu0 %v294
    %1388 = vmatprep.subr.bf16.mxu0 %v297
    %1389 = vmatpush1.bf16.msra.mxu0 %v296
    %1390 = vmatprep.subr.bf16.mxu0 %v299
    %1391 = vmatpush1.bf16.msra.mxu0 %v298
    %1392 = vmatprep.subr.bf16.mxu0 %v301
    %1393 = vmatpush1.bf16.msra.mxu0 %v300
    %1394 = vmatprep.subr.bf16.mxu0 %v303
    %1395 = vmatpush1.bf16.msra.mxu0 %v302
    %1396 = vmatprep.subr.bf16.mxu0 %v305
    %1397 = vmatpush1.bf16.msra.mxu0 %v304
    %1398 = vmatprep.subr.bf16.mxu0 %v307
    %1399 = vmatpush1.bf16.msra.mxu0 %v306
    %1400 = vmatprep.subr.bf16.mxu0 %v335
    %1401 = vmatpush1.bf16.msra.mxu0 %v332
    %1402 = vmatprep.subr.bf16.mxu0 0
    %1403 = vmatpush1.bf16.msra.mxu0 0
    %1404 = vmatprep.subr.bf16.mxu0 0
    %1405 = vmatpush1.bf16.msra.mxu0 0
    %1406 = vmatprep.subr.bf16.mxu0 0
    %1407 = vmatpush1.bf16.msra.mxu0 0
    %1408 = vmatprep.subr.bf16.mxu0 0
    %1409 = vmatpush1.bf16.msra.mxu0 0
    %1410 = vmatprep.subr.bf16.mxu0 0
    %1411 = vmatpush1.bf16.msra.mxu0 0
    %1412 = vmatprep.subr.bf16.mxu0 0
    %1413 = vmatpush1.bf16.msra.mxu0 0
    %1414 = vmatprep.subr.bf16.mxu0 0
    %1415 = vmatpush1.bf16.msra.mxu0 0
    %1416 = vmatprep.mubr.bf16.mxu0 %v1382
    %1417 = vmatmul.mubr.bf16.gmra.mrb[0].mxu0 %v1378
    %v1418 = vpop.f32.mrb[0].mxu0
    %v1419 = vadd.f32 %v225, %v1418
    %v1420 = vpop.f32.mrb[0].mxu0
    %v1421 = vadd.f32 %v229, %v1420
    %v1422 = vpop.f32.mrb[0].mxu0
    %v1423 = vpop.f32.mrb[0].mxu0
    %1424 = vdwg.mxu0
    %v1426 = vunpack.c.l.b16 %v1362
    %v1427 = vunpack.c.h.b16 %v1362
    %v1428 = vpack.c.b16 %v1426, %v1426
    %v1429 = vpack.c.b16 %v1427, %v1427
    %1430 = vrot.lane.b32.xlu0 %v1428, 108
    %v1431 = vpop.permute.xlu0 %1430
    %1432 = vrot.lane.b32.xlu0 %v1429, 108
    %v1433 = vpop.permute.xlu0 %1432
    %vm1434 = vcmask 883712
    %v1435 = vsel %vm1434, %v1431, %v1433
    %v1438 = vsel %vm326, %v1433, 0
    %1440 = vmatprep.subr.bf16.mxu0 %v293
    %1441 = vmatpush1.bf16.msra.mxu0 %v292
    %1442 = vmatprep.subr.bf16.mxu0 %v295
    %1443 = vmatpush1.bf16.msra.mxu0 %v294
    %1444 = vmatprep.subr.bf16.mxu0 %v297
    %1445 = vmatpush1.bf16.msra.mxu0 %v296
    %1446 = vmatprep.subr.bf16.mxu0 %v299
    %1447 = vmatpush1.bf16.msra.mxu0 %v298
    %1448 = vmatprep.subr.bf16.mxu0 %v301
    %1449 = vmatpush1.bf16.msra.mxu0 %v300
    %1450 = vmatprep.subr.bf16.mxu0 %v303
    %1451 = vmatpush1.bf16.msra.mxu0 %v302
    %1452 = vmatprep.subr.bf16.mxu0 %v305
    %1453 = vmatpush1.bf16.msra.mxu0 %v304
    %1454 = vmatprep.subr.bf16.mxu0 %v307
    %1455 = vmatpush1.bf16.msra.mxu0 %v306
    %1456 = vmatprep.subr.bf16.mxu0 %v335
    %1457 = vmatpush1.bf16.msra.mxu0 %v332
    %1458 = vmatprep.subr.bf16.mxu0 0
    %1459 = vmatpush1.bf16.msra.mxu0 0
    %1460 = vmatprep.subr.bf16.mxu0 0
    %1461 = vmatpush1.bf16.msra.mxu0 0
    %1462 = vmatprep.subr.bf16.mxu0 0
    %1463 = vmatpush1.bf16.msra.mxu0 0
    %1464 = vmatprep.subr.bf16.mxu0 0
    %1465 = vmatpush1.bf16.msra.mxu0 0
    %1466 = vmatprep.subr.bf16.mxu0 0
    %1467 = vmatpush1.bf16.msra.mxu0 0
    %1468 = vmatprep.subr.bf16.mxu0 0
    %1469 = vmatpush1.bf16.msra.mxu0 0
    %1470 = vmatprep.subr.bf16.mxu0 0
    %1471 = vmatpush1.bf16.msra.mxu0 0
    %1472 = vmatprep.mubr.bf16.mxu0 %v1438
    %1473 = vmatmul.mubr.bf16.gmra.mrb[0].mxu0 %v1435
    %v1474 = vpop.f32.mrb[0].mxu0
    %v1475 = vadd.f32 %v225, %v1474
    %v1476 = vpop.f32.mrb[0].mxu0
    %v1477 = vadd.f32 %v229, %v1476
    %v1478 = vpop.f32.mrb[0].mxu0
    %v1479 = vpop.f32.mrb[0].mxu0
    %1480 = vdwg.mxu0
    %v1481 = vmax.f32 %v1419, %v1421
    %v1482 = vmax.f32 %v1475, %v1477
    %v1483 = vmax.f32 %v1481, %v1482
    %v1484 = vmax.f32 %v1483, 0.0
    %v1485 = vpack.c.bf16 %v1484, %v1484
    %1486 = vst [vmem:[#allocation2 + $0x24] sm:$0xf] %v1485
    %v1487 = vld [vmem:[%s0 + $0x10] sm:$0xff]
    %v1489 = vunpack.c.l.b16 %v1487
    %v1490 = vunpack.c.h.b16 %v1487
    %v1491 = vpack.c.b16 %v1489, %v1489
    %v1492 = vpack.c.b16 %v1490, %v1490
    %1493 = vrot.lane.b32.xlu0 %v1491, 80
    %v1494 = vpop.permute.xlu0 %1493
    %1495 = vrot.lane.b32.xlu0 %v1492, 80
    %v1496 = vpop.permute.xlu0 %1495
    %vm1497 = vcmask 654336
    %v1498 = vsel %vm1497, %v1494, %v1496
    %v1501 = vsel %vm326, %v1496, 0
    %1503 = vmatprep.subr.bf16.mxu0 %v293
    %1504 = vmatpush1.bf16.msra.mxu0 %v292
    %1505 = vmatprep.subr.bf16.mxu0 %v295
    %1506 = vmatpush1.bf16.msra.mxu0 %v294
    %1507 = vmatprep.subr.bf16.mxu0 %v297
    %1508 = vmatpush1.bf16.msra.mxu0 %v296
    %1509 = vmatprep.subr.bf16.mxu0 %v299
    %1510 = vmatpush1.bf16.msra.mxu0 %v298
    %1511 = vmatprep.subr.bf16.mxu0 %v301
    %1512 = vmatpush1.bf16.msra.mxu0 %v300
    %1513 = vmatprep.subr.bf16.mxu0 %v303
    %1514 = vmatpush1.bf16.msra.mxu0 %v302
    %1515 = vmatprep.subr.bf16.mxu0 %v305
    %1516 = vmatpush1.bf16.msra.mxu0 %v304
    %1517 = vmatprep.subr.bf16.mxu0 %v307
    %1518 = vmatpush1.bf16.msra.mxu0 %v306
    %1519 = vmatprep.subr.bf16.mxu0 %v335
    %1520 = vmatpush1.bf16.msra.mxu0 %v332
    %1521 = vmatprep.subr.bf16.mxu0 0
    %1522 = vmatpush1.bf16.msra.mxu0 0
    %1523 = vmatprep.subr.bf16.mxu0 0
    %1524 = vmatpush1.bf16.msra.mxu0 0
    %1525 = vmatprep.subr.bf16.mxu0 0
    %1526 = vmatpush1.bf16.msra.mxu0 0
    %1527 = vmatprep.subr.bf16.mxu0 0
    %1528 = vmatpush1.bf16.msra.mxu0 0
    %1529 = vmatprep.subr.bf16.mxu0 0
    %1530 = vmatpush1.bf16.msra.mxu0 0
    %1531 = vmatprep.subr.bf16.mxu0 0
    %1532 = vmatpush1.bf16.msra.mxu0 0
    %1533 = vmatprep.subr.bf16.mxu0 0
    %1534 = vmatpush1.bf16.msra.mxu0 0
    %1535 = vmatprep.mubr.bf16.mxu0 %v1501
    %1536 = vmatmul.mubr.bf16.gmra.mrb[0].mxu0 %v1498
    %v1537 = vpop.f32.mrb[0].mxu0
    %v1538 = vadd.f32 %v225, %v1537
    %v1539 = vpop.f32.mrb[0].mxu0
    %v1540 = vadd.f32 %v229, %v1539
    %v1541 = vpop.f32.mrb[0].mxu0
    %v1542 = vpop.f32.mrb[0].mxu0
    %1543 = vdwg.mxu0
    %1544 = vrot.lane.b32.xlu0 %v1491, 52
    %v1545 = vpop.permute.xlu0 %1544
    %1546 = vrot.lane.b32.xlu0 %v1492, 52
    %v1547 = vpop.permute.xlu0 %1546
    %vm1548 = vcmask 424960
    %v1549 = vsel %vm1548, %v1545, %v1547
    %v1552 = vsel %vm326, %v1547, 0
    %1554 = vmatprep.subr.bf16.mxu0 %v293
    %1555 = vmatpush1.bf16.msra.mxu0 %v292
    %1556 = vmatprep.subr.bf16.mxu0 %v295
    %1557 = vmatpush1.bf16.msra.mxu0 %v294
    %1558 = vmatprep.subr.bf16.mxu0 %v297
    %1559 = vmatpush1.bf16.msra.mxu0 %v296
    %1560 = vmatprep.subr.bf16.mxu0 %v299
    %1561 = vmatpush1.bf16.msra.mxu0 %v298
    %1562 = vmatprep.subr.bf16.mxu0 %v301
    %1563 = vmatpush1.bf16.msra.mxu0 %v300
    %1564 = vmatprep.subr.bf16.mxu0 %v303
    %1565 = vmatpush1.bf16.msra.mxu0 %v302
    %1566 = vmatprep.subr.bf16.mxu0 %v305
    %1567 = vmatpush1.bf16.msra.mxu0 %v304
    %1568 = vmatprep.subr.bf16.mxu0 %v307
    %1569 = vmatpush1.bf16.msra.mxu0 %v306
    %1570 = vmatprep.subr.bf16.mxu0 %v335
    %1571 = vmatpush1.bf16.msra.mxu0 %v332
    %1572 = vmatprep.subr.bf16.mxu0 0
    %1573 = vmatpush1.bf16.msra.mxu0 0
    %1574 = vmatprep.subr.bf16.mxu0 0
    %1575 = vmatpush1.bf16.msra.mxu0 0
    %1576 = vmatprep.subr.bf16.mxu0 0
    %1577 = vmatpush1.bf16.msra.mxu0 0
    %1578 = vmatprep.subr.bf16.mxu0 0
    %1579 = vmatpush1.bf16.msra.mxu0 0
    %1580 = vmatprep.subr.bf16.mxu0 0
    %1581 = vmatpush1.bf16.msra.mxu0 0
    %1582 = vmatprep.subr.bf16.mxu0 0
    %1583 = vmatpush1.bf16.msra.mxu0 0
    %1584 = vmatprep.subr.bf16.mxu0 0
    %1585 = vmatpush1.bf16.msra.mxu0 0
    %1586 = vmatprep.mubr.bf16.mxu0 %v1552
    %1587 = vmatmul.mubr.bf16.gmra.mrb[0].mxu0 %v1549
    %v1588 = vpop.f32.mrb[0].mxu0
    %v1589 = vadd.f32 %v225, %v1588
    %v1590 = vpop.f32.mrb[0].mxu0
    %v1591 = vadd.f32 %v229, %v1590
    %v1592 = vpop.f32.mrb[0].mxu0
    %v1593 = vpop.f32.mrb[0].mxu0
    %1594 = vdwg.mxu0
    %v1595 = vmax.f32 %v1538, %v1540
    %v1596 = vmax.f32 %v1589, %v1591
    %v1597 = vmax.f32 %v1595, %v1596
    %v1598 = vmax.f32 %v1597, 0.0
    %v1599 = vpack.c.bf16 %v1598, %v1598
    %1600 = vst [vmem:[#allocation2 + $0x28] sm:$0xf] %v1599
    %v1601 = vld [vmem:[%s0 + $0x10] sm:$0xff]
    %v1602 = vld [vmem:[%s0 + $0x14] sm:$0xff]
    %v1604 = vunpack.c.l.b16 %v1601
    %v1605 = vunpack.c.h.b16 %v1601
    %v1606 = vpack.c.b16 %v1604, %v1604
    %v1607 = vpack.c.b16 %v1605, %v1605
    %1608 = vrot.lane.b32.xlu0 %v1606, 24
    %v1609 = vpop.permute.xlu0 %1608
    %1610 = vrot.lane.b32.xlu0 %v1607, 24
    %v1611 = vpop.permute.xlu0 %1610
    %vm1612 = vcmask 195584
    %v1613 = vsel %vm1612, %v1609, %v1611
    %v1616 = vsel %vm326, %v1611, 0
    %1618 = vmatprep.subr.bf16.mxu0 %v293
    %1619 = vmatpush1.bf16.msra.mxu0 %v292
    %1620 = vmatprep.subr.bf16.mxu0 %v295
    %1621 = vmatpush1.bf16.msra.mxu0 %v294
    %1622 = vmatprep.subr.bf16.mxu0 %v297
    %1623 = vmatpush1.bf16.msra.mxu0 %v296
    %1624 = vmatprep.subr.bf16.mxu0 %v299
    %1625 = vmatpush1.bf16.msra.mxu0 %v298
    %1626 = vmatprep.subr.bf16.mxu0 %v301
    %1627 = vmatpush1.bf16.msra.mxu0 %v300
    %1628 = vmatprep.subr.bf16.mxu0 %v303
    %1629 = vmatpush1.bf16.msra.mxu0 %v302
    %1630 = vmatprep.subr.bf16.mxu0 %v305
    %1631 = vmatpush1.bf16.msra.mxu0 %v304
    %1632 = vmatprep.subr.bf16.mxu0 %v307
    %1633 = vmatpush1.bf16.msra.mxu0 %v306
    %1634 = vmatprep.subr.bf16.mxu0 %v335
    %1635 = vmatpush1.bf16.msra.mxu0 %v332
    %1636 = vmatprep.subr.bf16.mxu0 0
    %1637 = vmatpush1.bf16.msra.mxu0 0
    %1638 = vmatprep.subr.bf16.mxu0 0
    %1639 = vmatpush1.bf16.msra.mxu0 0
    %1640 = vmatprep.subr.bf16.mxu0 0
    %1641 = vmatpush1.bf16.msra.mxu0 0
    %1642 = vmatprep.subr.bf16.mxu0 0
    %1643 = vmatpush1.bf16.msra.mxu0 0
    %1644 = vmatprep.subr.bf16.mxu0 0
    %1645 = vmatpush1.bf16.msra.mxu0 0
    %1646 = vmatprep.subr.bf16.mxu0 0
    %1647 = vmatpush1.bf16.msra.mxu0 0
    %1648 = vmatprep.subr.bf16.mxu0 0
    %1649 = vmatpush1.bf16.msra.mxu0 0
    %1650 = vmatprep.mubr.bf16.mxu0 %v1616
    %1651 = vmatmul.mubr.bf16.gmra.mrb[0].mxu0 %v1613
    %v1652 = vpop.f32.mrb[0].mxu0
    %v1653 = vadd.f32 %v225, %v1652
    %v1654 = vpop.f32.mrb[0].mxu0
    %v1655 = vadd.f32 %v229, %v1654
    %v1656 = vpop.f32.mrb[0].mxu0
    %v1657 = vpop.f32.mrb[0].mxu0
    %1658 = vdwg.mxu0
    %v1660 = vunpack.c.l.b16 %v1602
    %v1661 = vunpack.c.h.b16 %v1602
    %v1662 = vpack.c.b16 %v1660, %v1660
    %v1663 = vpack.c.b16 %v1661, %v1661
    %1664 = vrot.lane.b32.xlu0 %v1662, 124
    %v1665 = vpop.permute.xlu0 %1664
    %1666 = vrot.lane.b32.xlu0 %v1663, 124
    %v1667 = vpop.permute.xlu0 %1666
    %vm1668 = vcmask 1014784
    %v1669 = vsel %vm1668, %v1665, %v1667
    %v1672 = vsel %vm326, %v1667, 0
    %1674 = vmatprep.subr.bf16.mxu0 %v293
    %1675 = vmatpush1.bf16.msra.mxu0 %v292
    %1676 = vmatprep.subr.bf16.mxu0 %v295
    %1677 = vmatpush1.bf16.msra.mxu0 %v294
    %1678 = vmatprep.subr.bf16.mxu0 %v297
    %1679 = vmatpush1.bf16.msra.mxu0 %v296
    %1680 = vmatprep.subr.bf16.mxu0 %v299
    %1681 = vmatpush1.bf16.msra.mxu0 %v298
    %1682 = vmatprep.subr.bf16.mxu0 %v301
    %1683 = vmatpush1.bf16.msra.mxu0 %v300
    %1684 = vmatprep.subr.bf16.mxu0 %v303
    %1685 = vmatpush1.bf16.msra.mxu0 %v302
    %1686 = vmatprep.subr.bf16.mxu0 %v305
    %1687 = vmatpush1.bf16.msra.mxu0 %v304
    %1688 = vmatprep.subr.bf16.mxu0 %v307
    %1689 = vmatpush1.bf16.msra.mxu0 %v306
    %1690 = vmatprep.subr.bf16.mxu0 %v335
    %1691 = vmatpush1.bf16.msra.mxu0 %v332
    %1692 = vmatprep.subr.bf16.mxu0 0
    %1693 = vmatpush1.bf16.msra.mxu0 0
    %1694 = vmatprep.subr.bf16.mxu0 0
    %1695 = vmatpush1.bf16.msra.mxu0 0
    %1696 = vmatprep.subr.bf16.mxu0 0
    %1697 = vmatpush1.bf16.msra.mxu0 0
    %1698 = vmatprep.subr.bf16.mxu0 0
    %1699 = vmatpush1.bf16.msra.mxu0 0
    %1700 = vmatprep.subr.bf16.mxu0 0
    %1701 = vmatpush1.bf16.msra.mxu0 0
    %1702 = vmatprep.subr.bf16.mxu0 0
    %1703 = vmatpush1.bf16.msra.mxu0 0
    %1704 = vmatprep.subr.bf16.mxu0 0
    %1705 = vmatpush1.bf16.msra.mxu0 0
    %1706 = vmatprep.mubr.bf16.mxu0 %v1672
    %1707 = vmatmul.mubr.bf16.gmra.mrb[0].mxu0 %v1669
    %v1708 = vpop.f32.mrb[0].mxu0
    %v1709 = vadd.f32 %v225, %v1708
    %v1710 = vpop.f32.mrb[0].mxu0
    %v1711 = vadd.f32 %v229, %v1710
    %v1712 = vpop.f32.mrb[0].mxu0
    %v1713 = vpop.f32.mrb[0].mxu0
    %1714 = vdwg.mxu0
    %v1715 = vmax.f32 %v1653, %v1655
    %v1716 = vmax.f32 %v1709, %v1711
    %v1717 = vmax.f32 %v1715, %v1716
    %v1718 = vmax.f32 %v1717, 0.0
    %v1719 = vpack.c.bf16 %v1718, %v1718
    %1720 = vst [vmem:[#allocation2 + $0x2c] sm:$0xf] %v1719
    %v1721 = vld [vmem:[#allocation2] sm:$0xff]
    %v1722 = vld [vmem:[#allocation2 + $0x8] sm:$0xff]
    %v1723 = vld [vmem:[#allocation2 + $0x10] sm:$0xf]
    %v1725 = vlaneseq
    %v1726 = vshrl.u32 %v1725, 7
    %v1727 = vsub.s32 0, %v1726
    %v1728 = vrot.slane %v217, %v1727
    %v1729 = vlaneseq
    %v1730 = vshrl.u32 %v1729, 7
    %v1731 = vsub.s32 1, %v1730
    %v1732 = vrot.slane %v217, %v1731
    %v1738 = vunpack.c.l.b16 %v1721
    %v1739 = vunpack.c.h.b16 %v1721
    %v1740 = vunpack.c.l.b16 %v1722
    %v1741 = vunpack.c.h.b16 %v1722
    %v1742 = vunpack.c.l.b16 %v1723
    %v1743 = vpack.c.b16 %v1738, %v1738
    %v1744 = vpack.c.b16 %v1739, %v1739
    %v1745 = vpack.c.b16 %v1740, %v1740
    %v1746 = vpack.c.b16 %v1741, %v1741
    %v1747 = vpack.c.b16 %v1742, %v1742
    %v1833 = vunpack.c.l.b16 %v65
    %v1834 = vunpack.c.h.b16 %v65
    %v1835 = vunpack.c.l.b16 %v66
    %v1836 = vunpack.c.h.b16 %v66
    %v1837 = vunpack.c.l.b16 %v67
    %v1838 = vunpack.c.h.b16 %v67
    %v1839 = vunpack.c.l.b16 %v68
    %v1840 = vunpack.c.h.b16 %v68
    %v1841 = vunpack.c.l.b16 %v69
    %v1842 = vunpack.c.h.b16 %v69
    %v1843 = vunpack.c.l.b16 %v70
    %v1844 = vunpack.c.h.b16 %v70
    %v1845 = vunpack.c.l.b16 %v71
    %v1846 = vunpack.c.h.b16 %v71
    %v1847 = vunpack.c.l.b16 %v72
    %v1848 = vunpack.c.h.b16 %v72
    %v1849 = vunpack.c.l.b16 %v73
    %v1850 = vunpack.c.h.b16 %v73
    %v1851 = vunpack.c.l.b16 %v74
    %v1852 = vunpack.c.h.b16 %v74
    %v1853 = vunpack.c.l.b16 %v75
    %v1854 = vunpack.c.h.b16 %v75
    %v1855 = vunpack.c.l.b16 %v76
    %v1856 = vunpack.c.h.b16 %v76
    %v1857 = vunpack.c.l.b16 %v77
    %v1858 = vunpack.c.h.b16 %v77
    %v1859 = vunpack.c.l.b16 %v78
    %v1860 = vunpack.c.h.b16 %v78
    %v1861 = vunpack.c.l.b16 %v79
    %v1862 = vunpack.c.h.b16 %v79
    %v1863 = vunpack.c.l.b16 %v80
    %v1864 = vunpack.c.h.b16 %v80
    %v1865 = vunpack.c.l.b16 %v81
    %v1866 = vunpack.c.h.b16 %v81
    %v1867 = vunpack.c.l.b16 %v82
    %v1868 = vunpack.c.h.b16 %v82
    %v1869 = vunpack.c.l.b16 %v83
    %v1870 = vunpack.c.h.b16 %v83
    %v1871 = vunpack.c.l.b16 %v84
    %v1872 = vunpack.c.h.b16 %v84
    %v1873 = vunpack.c.l.b16 %v85
    %v1874 = vunpack.c.h.b16 %v85
    %v1875 = vunpack.c.l.b16 %v86
    %v1876 = vunpack.c.h.b16 %v86
    %v1877 = vunpack.c.l.b16 %v87
    %v1878 = vunpack.c.h.b16 %v87
    %v1879 = vunpack.c.l.b16 %v88
    %v1880 = vunpack.c.h.b16 %v88
    %v1881 = vunpack.c.l.b16 %v89
    %v1882 = vunpack.c.h.b16 %v89
    %v1883 = vunpack.c.l.b16 %v90
    %v1884 = vunpack.c.h.b16 %v90
    %v1885 = vunpack.c.l.b16 %v91
    %v1886 = vunpack.c.h.b16 %v91
    %v1887 = vunpack.c.l.b16 %v92
    %v1888 = vunpack.c.h.b16 %v92
    %v1889 = vunpack.c.l.b16 %v93
    %v1890 = vunpack.c.h.b16 %v93
    %v1891 = vunpack.c.l.b16 %v94
    %v1892 = vunpack.c.h.b16 %v94
    %v1893 = vunpack.c.l.b16 %v95
    %v1894 = vunpack.c.h.b16 %v95
    %v1895 = vunpack.c.l.b16 %v96
    %v1896 = vunpack.c.h.b16 %v96
    %v1897 = vunpack.c.l.b16 %v97
    %v1898 = vunpack.c.h.b16 %v97
    %v1899 = vunpack.c.l.b16 %v98
    %v1900 = vunpack.c.h.b16 %v98
    %v1901 = vunpack.c.l.b16 %v99
    %v1902 = vunpack.c.h.b16 %v99
    %v1903 = vunpack.c.l.b16 %v100
    %v1904 = vunpack.c.h.b16 %v100
    %v1905 = vunpack.c.l.b16 %v101
    %v1906 = vunpack.c.h.b16 %v101
    %v1907 = vunpack.c.l.b16 %v102
    %v1908 = vunpack.c.h.b16 %v102
    %v1909 = vunpack.c.l.b16 %v103
    %v1910 = vunpack.c.h.b16 %v103
    %v1911 = vunpack.c.l.b16 %v104
    %v1912 = vunpack.c.h.b16 %v104
    %v1913 = vunpack.c.l.b16 %v105
    %v1914 = vunpack.c.h.b16 %v105
    %v1915 = vunpack.c.l.b16 %v106
    %v1916 = vunpack.c.h.b16 %v106
    %v1917 = vunpack.c.l.b16 %v107
    %v1918 = vunpack.c.h.b16 %v107
    %v1919 = vunpack.c.l.b16 %v108
    %v1920 = vunpack.c.h.b16 %v108
    %v1921 = vunpack.c.l.b16 %v109
    %v1922 = vunpack.c.h.b16 %v109
    %v1923 = vunpack.c.l.b16 %v110
    %v1924 = vunpack.c.h.b16 %v110
    %v1925 = vunpack.c.l.b16 %v111
    %v1926 = vunpack.c.h.b16 %v111
    %v1927 = vunpack.c.l.b16 %v112
    %v1928 = vunpack.c.h.b16 %v112
    %v1929 = vunpack.c.l.b16 %v113
    %v1930 = vunpack.c.h.b16 %v113
    %v1931 = vunpack.c.l.b16 %v114
    %v1932 = vunpack.c.h.b16 %v114
    %v1933 = vunpack.c.l.b16 %v115
    %v1934 = vunpack.c.h.b16 %v115
    %v1935 = vunpack.c.l.b16 %v116
    %v1936 = vunpack.c.h.b16 %v116
    %v1937 = vunpack.c.l.b16 %v117
    %v1938 = vunpack.c.h.b16 %v117
    %v1939 = vunpack.c.l.b16 %v118
    %v1940 = vunpack.c.h.b16 %v118
    %v1941 = vunpack.c.l.b16 %v119
    %v1942 = vunpack.c.h.b16 %v119
    %v1943 = vunpack.c.l.b16 %v120
    %v1944 = vunpack.c.h.b16 %v120
    %v1945 = vunpack.c.l.b16 %v121
    %v1946 = vunpack.c.h.b16 %v121
    %v1947 = vunpack.c.l.b16 %v122
    %v1948 = vunpack.c.h.b16 %v122
    %v1949 = vunpack.c.l.b16 %v123
    %v1950 = vunpack.c.h.b16 %v123
    %v1951 = vunpack.c.l.b16 %v124
    %v1952 = vunpack.c.h.b16 %v124
    %v1953 = vunpack.c.l.b16 %v125
    %v1954 = vunpack.c.h.b16 %v125
    %v1955 = vunpack.c.l.b16 %v126
    %v1956 = vunpack.c.h.b16 %v126
    %v1957 = vunpack.c.l.b16 %v127
    %v1958 = vunpack.c.h.b16 %v127
    %v1959 = vunpack.c.l.b16 %v128
    %v1960 = vunpack.c.h.b16 %v128
    %v1961 = vunpack.c.l.b16 %v129
    %v1962 = vunpack.c.h.b16 %v129
    %v1963 = vunpack.c.l.b16 %v130
    %v1964 = vunpack.c.h.b16 %v130
    %v1965 = vunpack.c.l.b16 %v131
    %v1966 = vunpack.c.h.b16 %v131
    %v1967 = vunpack.c.l.b16 %v132
    %v1968 = vunpack.c.h.b16 %v132
    %v1969 = vunpack.c.l.b16 %v133
    %v1970 = vunpack.c.h.b16 %v133
    %v1971 = vunpack.c.l.b16 %v134
    %v1972 = vunpack.c.h.b16 %v134
    %v1973 = vunpack.c.l.b16 %v135
    %v1974 = vunpack.c.h.b16 %v135
    %v1975 = vunpack.c.l.b16 %v136
    %v1976 = vunpack.c.h.b16 %v136
    %v1977 = vunpack.c.l.b16 %v137
    %v1978 = vunpack.c.h.b16 %v137
    %v1979 = vunpack.c.l.b16 %v138
    %v1980 = vunpack.c.h.b16 %v138
    %v1981 = vunpack.c.l.b16 %v139
    %v1982 = vunpack.c.h.b16 %v139
    %v1983 = vunpack.c.l.b16 %v140
    %v1984 = vunpack.c.h.b16 %v140
    %v1985 = vunpack.c.l.b16 %v141
    %v1986 = vunpack.c.h.b16 %v141
    %v1987 = vunpack.c.l.b16 %v142
    %v1988 = vunpack.c.h.b16 %v142
    %v1989 = vunpack.c.l.b16 %v143
    %v1990 = vunpack.c.h.b16 %v143
    %v1991 = vunpack.c.l.b16 %v144
    %v1992 = vunpack.c.h.b16 %v144
    %v1993 = vpack.c.b16 %v1835, %v1833
    %v1994 = vpack.c.b16 %v1836, %v1834
    %v1995 = vpack.c.b16 %v1839, %v1837
    %v1996 = vpack.c.b16 %v1840, %v1838
    %v1997 = vpack.c.b16 %v1843, %v1841
    %v1998 = vpack.c.b16 %v1844, %v1842
    %v1999 = vpack.c.b16 %v1847, %v1845
    %v2000 = vpack.c.b16 %v1848, %v1846
    %v2001 = vpack.c.b16 %v1851, %v1849
    %v2002 = vpack.c.b16 %v1852, %v1850
    %v2003 = vpack.c.b16 %v1855, %v1853
    %v2004 = vpack.c.b16 %v1856, %v1854
    %v2005 = vpack.c.b16 %v1859, %v1857
    %v2006 = vpack.c.b16 %v1860, %v1858
    %v2007 = vpack.c.b16 %v1863, %v1861
    %v2008 = vpack.c.b16 %v1864, %v1862
    %v2009 = vpack.c.b16 %v1867, %v1865
    %v2010 = vpack.c.b16 %v1868, %v1866
    %v2011 = vpack.c.b16 %v1871, %v1869
    %v2012 = vpack.c.b16 %v1872, %v1870
    %v2013 = vpack.c.b16 %v1875, %v1873
    %v2014 = vpack.c.b16 %v1876, %v1874
    %v2015 = vpack.c.b16 %v1879, %v1877
    %v2016 = vpack.c.b16 %v1880, %v1878
    %v2017 = vpack.c.b16 %v1883, %v1881
    %v2018 = vpack.c.b16 %v1884, %v1882
    %v2019 = vpack.c.b16 %v1887, %v1885
    %v2020 = vpack.c.b16 %v1888, %v1886
    %v2021 = vpack.c.b16 %v1891, %v1889
    %v2022 = vpack.c.b16 %v1892, %v1890
    %v2023 = vpack.c.b16 %v1895, %v1893
    %v2024 = vpack.c.b16 %v1896, %v1894
    %v2025 = vpack.c.b16 %v1899, %v1897
    %v2026 = vpack.c.b16 %v1900, %v1898
    %v2027 = vpack.c.b16 %v1903, %v1901
    %v2028 = vpack.c.b16 %v1904, %v1902
    %v2029 = vpack.c.b16 %v1907, %v1905
    %v2030 = vpack.c.b16 %v1908, %v1906
    %v2031 = vpack.c.b16 %v1911, %v1909
    %v2032 = vpack.c.b16 %v1912, %v1910
    %v2033 = vpack.c.b16 %v1915, %v1913
    %v2034 = vpack.c.b16 %v1916, %v1914
    %v2035 = vpack.c.b16 %v1919, %v1917
    %v2036 = vpack.c.b16 %v1920, %v1918
    %v2037 = vpack.c.b16 %v1923, %v1921
    %v2038 = vpack.c.b16 %v1924, %v1922
    %v2039 = vpack.c.b16 %v1927, %v1925
    %v2040 = vpack.c.b16 %v1928, %v1926
    %v2041 = vpack.c.b16 %v1931, %v1929
    %v2042 = vpack.c.b16 %v1932, %v1930
    %v2043 = vpack.c.b16 %v1935, %v1933
    %v2044 = vpack.c.b16 %v1936, %v1934
    %v2045 = vpack.c.b16 %v1939, %v1937
    %v2046 = vpack.c.b16 %v1940, %v1938
    %v2047 = vpack.c.b16 %v1943, %v1941
    %v2048 = vpack.c.b16 %v1944, %v1942
    %v2049 = vpack.c.b16 %v1947, %v1945
    %v2050 = vpack.c.b16 %v1948, %v1946
    %v2051 = vpack.c.b16 %v1951, %v1949
    %v2052 = vpack.c.b16 %v1952, %v1950
    %v2053 = vpack.c.b16 %v1955, %v1953
    %v2054 = vpack.c.b16 %v1956, %v1954
    %v2055 = vpack.c.b16 %v1959, %v1957
    %v2056 = vpack.c.b16 %v1960, %v1958
    %v2057 = vpack.c.b16 %v1963, %v1961
    %v2058 = vpack.c.b16 %v1964, %v1962
    %v2059 = vpack.c.b16 %v1967, %v1965
    %v2060 = vpack.c.b16 %v1968, %v1966
    %v2061 = vpack.c.b16 %v1971, %v1969
    %v2062 = vpack.c.b16 %v1972, %v1970
    %v2063 = vpack.c.b16 %v1975, %v1973
    %v2064 = vpack.c.b16 %v1976, %v1974
    %v2065 = vpack.c.b16 %v1979, %v1977
    %v2066 = vpack.c.b16 %v1980, %v1978
    %v2067 = vpack.c.b16 %v1983, %v1981
    %v2068 = vpack.c.b16 %v1984, %v1982
    %v2069 = vpack.c.b16 %v1987, %v1985
    %v2070 = vpack.c.b16 %v1988, %v1986
    %v2071 = vpack.c.b16 %v1991, %v1989
    %v2072 = vpack.c.b16 %v1992, %v1990
    %2153 = vmatprep.subr.bf16.mxu0 %v1994
    %2154 = vmatpush1.bf16.msra.mxu0 %v1993
    %2155 = vmatprep.subr.bf16.mxu0 %v1996
    %2156 = vmatpush1.bf16.msra.mxu0 %v1995
    %2157 = vmatprep.subr.bf16.mxu0 %v1998
    %2158 = vmatpush1.bf16.msra.mxu0 %v1997
    %2159 = vmatprep.subr.bf16.mxu0 %v2000
    %2160 = vmatpush1.bf16.msra.mxu0 %v1999
    %2161 = vmatprep.subr.bf16.mxu0 %v2002
    %2162 = vmatpush1.bf16.msra.mxu0 %v2001
    %2163 = vmatprep.subr.bf16.mxu0 %v2004
    %2164 = vmatpush1.bf16.msra.mxu0 %v2003
    %2165 = vmatprep.subr.bf16.mxu0 %v2006
    %2166 = vmatpush1.bf16.msra.mxu0 %v2005
    %2167 = vmatprep.subr.bf16.mxu0 %v2008
    %2168 = vmatpush1.bf16.msra.mxu0 %v2007
    %2169 = vmatprep.subr.bf16.mxu0 %v2010
    %2170 = vmatpush1.bf16.msra.mxu0 %v2009
    %2171 = vmatprep.subr.bf16.mxu0 %v2012
    %2172 = vmatpush1.bf16.msra.mxu0 %v2011
    %2173 = vmatprep.subr.bf16.mxu0 %v2014
    %2174 = vmatpush1.bf16.msra.mxu0 %v2013
    %2175 = vmatprep.subr.bf16.mxu0 %v2016
    %2176 = vmatpush1.bf16.msra.mxu0 %v2015
    %2177 = vmatprep.subr.bf16.mxu0 %v2018
    %2178 = vmatpush1.bf16.msra.mxu0 %v2017
    %2179 = vmatprep.subr.bf16.mxu0 %v2020
    %2180 = vmatpush1.bf16.msra.mxu0 %v2019
    %2181 = vmatprep.subr.bf16.mxu0 %v2022
    %2182 = vmatpush1.bf16.msra.mxu0 %v2021
    %2183 = vmatprep.subr.bf16.mxu0 %v2024
    %2184 = vmatpush1.bf16.msra.mxu0 %v2023
    %2185 = vmatprep.mubr.bf16.mxu0 %v1744
    %2186 = vmatmul.mubr.bf16.gmra.mrb[0].mxu0 %v1743
    %v2187 = vpop.f32.mrb[0].mxu0
    %v2188 = vadd.f32 %v1728, %v2187
    %v2189 = vpop.f32.mrb[0].mxu0
    %v2190 = vadd.f32 %v1732, %v2189
    %v2191 = vpop.f32.mrb[0].mxu0
    %v2192 = vpop.f32.mrb[0].mxu0
    %2193 = vdwg.mxu0
    %2194 = vmatprep.subr.bf16.mxu0 %v2026
    %2195 = vmatpush1.bf16.msra.mxu0 %v2025
    %2196 = vmatprep.subr.bf16.mxu0 %v2028
    %2197 = vmatpush1.bf16.msra.mxu0 %v2027
    %2198 = vmatprep.subr.bf16.mxu0 %v2030
    %2199 = vmatpush1.bf16.msra.mxu0 %v2029
    %2200 = vmatprep.subr.bf16.mxu0 %v2032
    %2201 = vmatpush1.bf16.msra.mxu0 %v2031
    %2202 = vmatprep.subr.bf16.mxu0 %v2034
    %2203 = vmatpush1.bf16.msra.mxu0 %v2033
    %2204 = vmatprep.subr.bf16.mxu0 %v2036
    %2205 = vmatpush1.bf16.msra.mxu0 %v2035
    %2206 = vmatprep.subr.bf16.mxu0 %v2038
    %2207 = vmatpush1.bf16.msra.mxu0 %v2037
    %2208 = vmatprep.subr.bf16.mxu0 %v2040
    %2209 = vmatpush1.bf16.msra.mxu0 %v2039
    %2210 = vmatprep.subr.bf16.mxu0 %v2042
    %2211 = vmatpush1.bf16.msra.mxu0 %v2041
    %2212 = vmatprep.subr.bf16.mxu0 %v2044
    %2213 = vmatpush1.bf16.msra.mxu0 %v2043
    %2214 = vmatprep.subr.bf16.mxu0 %v2046
    %2215 = vmatpush1.bf16.msra.mxu0 %v2045
    %2216 = vmatprep.subr.bf16.mxu0 %v2048
    %2217 = vmatpush1.bf16.msra.mxu0 %v2047
    %2218 = vmatprep.subr.bf16.mxu0 %v2050
    %2219 = vmatpush1.bf16.msra.mxu0 %v2049
    %2220 = vmatprep.subr.bf16.mxu0 %v2052
    %2221 = vmatpush1.bf16.msra.mxu0 %v2051
    %2222 = vmatprep.subr.bf16.mxu0 %v2054
    %2223 = vmatpush1.bf16.msra.mxu0 %v2053
    %2224 = vmatprep.subr.bf16.mxu0 %v2056
    %2225 = vmatpush1.bf16.msra.mxu0 %v2055
    %2226 = vmatprep.mubr.bf16.mxu0 %v1746
    %2227 = vmatmul.mubr.bf16.gmra.mrb[0].mxu0 %v1745
    %v2228 = vpop.f32.mrb[0].mxu0
    %v2229 = vadd.f32 %v2188, %v2228
    %v2230 = vpop.f32.mrb[0].mxu0
    %v2231 = vadd.f32 %v2190, %v2230
    %v2232 = vpop.f32.mrb[0].mxu0
    %v2233 = vpop.f32.mrb[0].mxu0
    %2234 = vdwg.mxu0
    %2235 = vmatprep.subr.bf16.mxu0 %v2058
    %2236 = vmatpush1.bf16.msra.mxu0 %v2057
    %2237 = vmatprep.subr.bf16.mxu0 %v2060
    %2238 = vmatpush1.bf16.msra.mxu0 %v2059
    %2239 = vmatprep.subr.bf16.mxu0 %v2062
    %2240 = vmatpush1.bf16.msra.mxu0 %v2061
    %2241 = vmatprep.subr.bf16.mxu0 %v2064
    %2242 = vmatpush1.bf16.msra.mxu0 %v2063
    %2243 = vmatprep.subr.bf16.mxu0 %v2066
    %2244 = vmatpush1.bf16.msra.mxu0 %v2065
    %2245 = vmatprep.subr.bf16.mxu0 %v2068
    %2246 = vmatpush1.bf16.msra.mxu0 %v2067
    %2247 = vmatprep.subr.bf16.mxu0 %v2070
    %2248 = vmatpush1.bf16.msra.mxu0 %v2069
    %2249 = vmatprep.subr.bf16.mxu0 %v2072
    %2250 = vmatpush1.bf16.msra.mxu0 %v2071
    %2251 = vmatprep.subr.bf16.mxu0 0
    %2252 = vmatpush1.bf16.msra.mxu0 0
    %2253 = vmatprep.subr.bf16.mxu0 0
    %2254 = vmatpush1.bf16.msra.mxu0 0
    %2255 = vmatprep.subr.bf16.mxu0 0
    %2256 = vmatpush1.bf16.msra.mxu0 0
    %2257 = vmatprep.subr.bf16.mxu0 0
    %2258 = vmatpush1.bf16.msra.mxu0 0
    %2259 = vmatprep.subr.bf16.mxu0 0
    %2260 = vmatpush1.bf16.msra.mxu0 0
    %2261 = vmatprep.subr.bf16.mxu0 0
    %2262 = vmatpush1.bf16.msra.mxu0 0
    %2263 = vmatprep.subr.bf16.mxu0 0
    %2264 = vmatpush1.bf16.msra.mxu0 0
    %2265 = vmatprep.subr.bf16.mxu0 0
    %2266 = vmatpush1.bf16.msra.mxu0 0
    %2267 = vmatprep.mubr.bf16.mxu0 0
    %2268 = vmatmul.mubr.bf16.gmra.mrb[0].mxu0 %v1747
    %v2269 = vpop.f32.mrb[0].mxu0
    %v2270 = vadd.f32 %v2229, %v2269
    %v2271 = vpop.f32.mrb[0].mxu0
    %v2272 = vadd.f32 %v2231, %v2271
    %v2273 = vpop.f32.mrb[0].mxu0
    %v2274 = vpop.f32.mrb[0].mxu0
    %2275 = vdwg.mxu0
    %v2276 = vmax.f32 %v2270, %v2272
    %v2277 = vld [vmem:[#allocation2 + $0x4] sm:$0xff]
    %v2278 = vld [vmem:[#allocation2 + $0xc] sm:$0xff]
    %v2279 = vld [vmem:[#allocation2 + $0x14] sm:$0xf]
    %v2283 = vunpack.c.l.b16 %v2277
    %v2284 = vunpack.c.h.b16 %v2277
    %v2285 = vunpack.c.l.b16 %v2278
    %v2286 = vunpack.c.h.b16 %v2278
    %v2287 = vunpack.c.l.b16 %v2279
    %v2288 = vpack.c.b16 %v2283, %v2283
    %v2289 = vpack.c.b16 %v2284, %v2284
    %v2290 = vpack.c.b16 %v2285, %v2285
    %v2291 = vpack.c.b16 %v2286, %v2286
    %v2292 = vpack.c.b16 %v2287, %v2287
    %2298 = vmatprep.subr.bf16.mxu0 %v1994
    %2299 = vmatpush1.bf16.msra.mxu0 %v1993
    %2300 = vmatprep.subr.bf16.mxu0 %v1996
    %2301 = vmatpush1.bf16.msra.mxu0 %v1995
    %2302 = vmatprep.subr.bf16.mxu0 %v1998
    %2303 = vmatpush1.bf16.msra.mxu0 %v1997
    %2304 = vmatprep.subr.bf16.mxu0 %v2000
    %2305 = vmatpush1.bf16.msra.mxu0 %v1999
    %2306 = vmatprep.subr.bf16.mxu0 %v2002
    %2307 = vmatpush1.bf16.msra.mxu0 %v2001
    %2308 = vmatprep.subr.bf16.mxu0 %v2004
    %2309 = vmatpush1.bf16.msra.mxu0 %v2003
    %2310 = vmatprep.subr.bf16.mxu0 %v2006
    %2311 = vmatpush1.bf16.msra.mxu0 %v2005
    %2312 = vmatprep.subr.bf16.mxu0 %v2008
    %2313 = vmatpush1.bf16.msra.mxu0 %v2007
    %2314 = vmatprep.subr.bf16.mxu0 %v2010
    %2315 = vmatpush1.bf16.msra.mxu0 %v2009
    %2316 = vmatprep.subr.bf16.mxu0 %v2012
    %2317 = vmatpush1.bf16.msra.mxu0 %v2011
    %2318 = vmatprep.subr.bf16.mxu0 %v2014
    %2319 = vmatpush1.bf16.msra.mxu0 %v2013
    %2320 = vmatprep.subr.bf16.mxu0 %v2016
    %2321 = vmatpush1.bf16.msra.mxu0 %v2015
    %2322 = vmatprep.subr.bf16.mxu0 %v2018
    %2323 = vmatpush1.bf16.msra.mxu0 %v2017
    %2324 = vmatprep.subr.bf16.mxu0 %v2020
    %2325 = vmatpush1.bf16.msra.mxu0 %v2019
    %2326 = vmatprep.subr.bf16.mxu0 %v2022
    %2327 = vmatpush1.bf16.msra.mxu0 %v2021
    %2328 = vmatprep.subr.bf16.mxu0 %v2024
    %2329 = vmatpush1.bf16.msra.mxu0 %v2023
    %2330 = vmatprep.mubr.bf16.mxu0 %v2289
    %2331 = vmatmul.mubr.bf16.gmra.mrb[0].mxu0 %v2288
    %v2332 = vpop.f32.mrb[0].mxu0
    %v2333 = vadd.f32 %v1728, %v2332
    %v2334 = vpop.f32.mrb[0].mxu0
    %v2335 = vadd.f32 %v1732, %v2334
    %v2336 = vpop.f32.mrb[0].mxu0
    %v2337 = vpop.f32.mrb[0].mxu0
    %2338 = vdwg.mxu0
    %2339 = vmatprep.subr.bf16.mxu0 %v2026
    %2340 = vmatpush1.bf16.msra.mxu0 %v2025
    %2341 = vmatprep.subr.bf16.mxu0 %v2028
    %2342 = vmatpush1.bf16.msra.mxu0 %v2027
    %2343 = vmatprep.subr.bf16.mxu0 %v2030
    %2344 = vmatpush1.bf16.msra.mxu0 %v2029
    %2345 = vmatprep.subr.bf16.mxu0 %v2032
    %2346 = vmatpush1.bf16.msra.mxu0 %v2031
    %2347 = vmatprep.subr.bf16.mxu0 %v2034
    %2348 = vmatpush1.bf16.msra.mxu0 %v2033
    %2349 = vmatprep.subr.bf16.mxu0 %v2036
    %2350 = vmatpush1.bf16.msra.mxu0 %v2035
    %2351 = vmatprep.subr.bf16.mxu0 %v2038
    %2352 = vmatpush1.bf16.msra.mxu0 %v2037
    %2353 = vmatprep.subr.bf16.mxu0 %v2040
    %2354 = vmatpush1.bf16.msra.mxu0 %v2039
    %2355 = vmatprep.subr.bf16.mxu0 %v2042
    %2356 = vmatpush1.bf16.msra.mxu0 %v2041
    %2357 = vmatprep.subr.bf16.mxu0 %v2044
    %2358 = vmatpush1.bf16.msra.mxu0 %v2043
    %2359 = vmatprep.subr.bf16.mxu0 %v2046
    %2360 = vmatpush1.bf16.msra.mxu0 %v2045
    %2361 = vmatprep.subr.bf16.mxu0 %v2048
    %2362 = vmatpush1.bf16.msra.mxu0 %v2047
    %2363 = vmatprep.subr.bf16.mxu0 %v2050
    %2364 = vmatpush1.bf16.msra.mxu0 %v2049
    %2365 = vmatprep.subr.bf16.mxu0 %v2052
    %2366 = vmatpush1.bf16.msra.mxu0 %v2051
    %2367 = vmatprep.subr.bf16.mxu0 %v2054
    %2368 = vmatpush1.bf16.msra.mxu0 %v2053
    %2369 = vmatprep.subr.bf16.mxu0 %v2056
    %2370 = vmatpush1.bf16.msra.mxu0 %v2055
    %2371 = vmatprep.mubr.bf16.mxu0 %v2291
    %2372 = vmatmul.mubr.bf16.gmra.mrb[0].mxu0 %v2290
    %v2373 = vpop.f32.mrb[0].mxu0
    %v2374 = vadd.f32 %v2333, %v2373
    %v2375 = vpop.f32.mrb[0].mxu0
    %v2376 = vadd.f32 %v2335, %v2375
    %v2377 = vpop.f32.mrb[0].mxu0
    %v2378 = vpop.f32.mrb[0].mxu0
    %2379 = vdwg.mxu0
    %2380 = vmatprep.subr.bf16.mxu0 %v2058
    %2381 = vmatpush1.bf16.msra.mxu0 %v2057
    %2382 = vmatprep.subr.bf16.mxu0 %v2060
    %2383 = vmatpush1.bf16.msra.mxu0 %v2059
    %2384 = vmatprep.subr.bf16.mxu0 %v2062
    %2385 = vmatpush1.bf16.msra.mxu0 %v2061
    %2386 = vmatprep.subr.bf16.mxu0 %v2064
    %2387 = vmatpush1.bf16.msra.mxu0 %v2063
    %2388 = vmatprep.subr.bf16.mxu0 %v2066
    %2389 = vmatpush1.bf16.msra.mxu0 %v2065
    %2390 = vmatprep.subr.bf16.mxu0 %v2068
    %2391 = vmatpush1.bf16.msra.mxu0 %v2067
    %2392 = vmatprep.subr.bf16.mxu0 %v2070
    %2393 = vmatpush1.bf16.msra.mxu0 %v2069
    %2394 = vmatprep.subr.bf16.mxu0 %v2072
    %2395 = vmatpush1.bf16.msra.mxu0 %v2071
    %2396 = vmatprep.subr.bf16.mxu0 0
    %2397 = vmatpush1.bf16.msra.mxu0 0
    %2398 = vmatprep.subr.bf16.mxu0 0
    %2399 = vmatpush1.bf16.msra.mxu0 0
    %2400 = vmatprep.subr.bf16.mxu0 0
    %2401 = vmatpush1.bf16.msra.mxu0 0
    %2402 = vmatprep.subr.bf16.mxu0 0
    %2403 = vmatpush1.bf16.msra.mxu0 0
    %2404 = vmatprep.subr.bf16.mxu0 0
    %2405 = vmatpush1.bf16.msra.mxu0 0
    %2406 = vmatprep.subr.bf16.mxu0 0
    %2407 = vmatpush1.bf16.msra.mxu0 0
    %2408 = vmatprep.subr.bf16.mxu0 0
    %2409 = vmatpush1.bf16.msra.mxu0 0
    %2410 = vmatprep.subr.bf16.mxu0 0
    %2411 = vmatpush1.bf16.msra.mxu0 0
    %2412 = vmatprep.mubr.bf16.mxu0 0
    %2413 = vmatmul.mubr.bf16.gmra.mrb[0].mxu0 %v2292
    %v2414 = vpop.f32.mrb[0].mxu0
    %v2415 = vadd.f32 %v2374, %v2414
    %v2416 = vpop.f32.mrb[0].mxu0
    %v2417 = vadd.f32 %v2376, %v2416
    %v2418 = vpop.f32.mrb[0].mxu0
    %v2419 = vpop.f32.mrb[0].mxu0
    %2420 = vdwg.mxu0
    %v2421 = vmax.f32 %v2415, %v2417
    %v2422 = vmax.f32 %v2276, %v2421
    %v2423 = vmax.f32 %v2422, 0.0
    %v2424 = vpack.c.bf16 %v2423, %v2423
    %2425 = vst [vmem:[#allocation3] sm:$0xf] %v2424
    %v2426 = vld [vmem:[#allocation2 + $0x8] sm:$0xff]
    %v2427 = vld [vmem:[#allocation2 + $0x10] sm:$0xff]
    %v2428 = vld [vmem:[#allocation2 + $0x18] sm:$0xf]
    %v2432 = vunpack.c.l.b16 %v2426
    %v2433 = vunpack.c.h.b16 %v2426
    %v2434 = vunpack.c.l.b16 %v2427
    %v2435 = vunpack.c.h.b16 %v2427
    %v2436 = vunpack.c.l.b16 %v2428
    %v2437 = vpack.c.b16 %v2432, %v2432
    %v2438 = vpack.c.b16 %v2433, %v2433
    %v2439 = vpack.c.b16 %v2434, %v2434
    %v2440 = vpack.c.b16 %v2435, %v2435
    %v2441 = vpack.c.b16 %v2436, %v2436
    %2447 = vmatprep.subr.bf16.mxu0 %v1994
    %2448 = vmatpush1.bf16.msra.mxu0 %v1993
    %2449 = vmatprep.subr.bf16.mxu0 %v1996
    %2450 = vmatpush1.bf16.msra.mxu0 %v1995
    %2451 = vmatprep.subr.bf16.mxu0 %v1998
    %2452 = vmatpush1.bf16.msra.mxu0 %v1997
    %2453 = vmatprep.subr.bf16.mxu0 %v2000
    %2454 = vmatpush1.bf16.msra.mxu0 %v1999
    %2455 = vmatprep.subr.bf16.mxu0 %v2002
    %2456 = vmatpush1.bf16.msra.mxu0 %v2001
    %2457 = vmatprep.subr.bf16.mxu0 %v2004
    %2458 = vmatpush1.bf16.msra.mxu0 %v2003
    %2459 = vmatprep.subr.bf16.mxu0 %v2006
    %2460 = vmatpush1.bf16.msra.mxu0 %v2005
    %2461 = vmatprep.subr.bf16.mxu0 %v2008
    %2462 = vmatpush1.bf16.msra.mxu0 %v2007
    %2463 = vmatprep.subr.bf16.mxu0 %v2010
    %2464 = vmatpush1.bf16.msra.mxu0 %v2009
    %2465 = vmatprep.subr.bf16.mxu0 %v2012
    %2466 = vmatpush1.bf16.msra.mxu0 %v2011
    %2467 = vmatprep.subr.bf16.mxu0 %v2014
    %2468 = vmatpush1.bf16.msra.mxu0 %v2013
    %2469 = vmatprep.subr.bf16.mxu0 %v2016
    %2470 = vmatpush1.bf16.msra.mxu0 %v2015
    %2471 = vmatprep.subr.bf16.mxu0 %v2018
    %2472 = vmatpush1.bf16.msra.mxu0 %v2017
    %2473 = vmatprep.subr.bf16.mxu0 %v2020
    %2474 = vmatpush1.bf16.msra.mxu0 %v2019
    %2475 = vmatprep.subr.bf16.mxu0 %v2022
    %2476 = vmatpush1.bf16.msra.mxu0 %v2021
    %2477 = vmatprep.subr.bf16.mxu0 %v2024
    %2478 = vmatpush1.bf16.msra.mxu0 %v2023
    %2479 = vmatprep.mubr.bf16.mxu0 %v2438
    %2480 = vmatmul.mubr.bf16.gmra.mrb[0].mxu0 %v2437
    %v2481 = vpop.f32.mrb[0].mxu0
    %v2482 = vadd.f32 %v1728, %v2481
    %v2483 = vpop.f32.mrb[0].mxu0
    %v2484 = vadd.f32 %v1732, %v2483
    %v2485 = vpop.f32.mrb[0].mxu0
    %v2486 = vpop.f32.mrb[0].mxu0
    %2487 = vdwg.mxu0
    %2488 = vmatprep.subr.bf16.mxu0 %v2026
    %2489 = vmatpush1.bf16.msra.mxu0 %v2025
    %2490 = vmatprep.subr.bf16.mxu0 %v2028
    %2491 = vmatpush1.bf16.msra.mxu0 %v2027
    %2492 = vmatprep.subr.bf16.mxu0 %v2030
    %2493 = vmatpush1.bf16.msra.mxu0 %v2029
    %2494 = vmatprep.subr.bf16.mxu0 %v2032
    %2495 = vmatpush1.bf16.msra.mxu0 %v2031
    %2496 = vmatprep.subr.bf16.mxu0 %v2034
    %2497 = vmatpush1.bf16.msra.mxu0 %v2033
    %2498 = vmatprep.subr.bf16.mxu0 %v2036
    %2499 = vmatpush1.bf16.msra.mxu0 %v2035
    %2500 = vmatprep.subr.bf16.mxu0 %v2038
    %2501 = vmatpush1.bf16.msra.mxu0 %v2037
    %2502 = vmatprep.subr.bf16.mxu0 %v2040
    %2503 = vmatpush1.bf16.msra.mxu0 %v2039
    %2504 = vmatprep.subr.bf16.mxu0 %v2042
    %2505 = vmatpush1.bf16.msra.mxu0 %v2041
    %2506 = vmatprep.subr.bf16.mxu0 %v2044
    %2507 = vmatpush1.bf16.msra.mxu0 %v2043
    %2508 = vmatprep.subr.bf16.mxu0 %v2046
    %2509 = vmatpush1.bf16.msra.mxu0 %v2045
    %2510 = vmatprep.subr.bf16.mxu0 %v2048
    %2511 = vmatpush1.bf16.msra.mxu0 %v2047
    %2512 = vmatprep.subr.bf16.mxu0 %v2050
    %2513 = vmatpush1.bf16.msra.mxu0 %v2049
    %2514 = vmatprep.subr.bf16.mxu0 %v2052
    %2515 = vmatpush1.bf16.msra.mxu0 %v2051
    %2516 = vmatprep.subr.bf16.mxu0 %v2054
    %2517 = vmatpush1.bf16.msra.mxu0 %v2053
    %2518 = vmatprep.subr.bf16.mxu0 %v2056
    %2519 = vmatpush1.bf16.msra.mxu0 %v2055
    %2520 = vmatprep.mubr.bf16.mxu0 %v2440
    %2521 = vmatmul.mubr.bf16.gmra.mrb[0].mxu0 %v2439
    %v2522 = vpop.f32.mrb[0].mxu0
    %v2523 = vadd.f32 %v2482, %v2522
    %v2524 = vpop.f32.mrb[0].mxu0
    %v2525 = vadd.f32 %v2484, %v2524
    %v2526 = vpop.f32.mrb[0].mxu0
    %v2527 = vpop.f32.mrb[0].mxu0
    %2528 = vdwg.mxu0
    %2529 = vmatprep.subr.bf16.mxu0 %v2058
    %2530 = vmatpush1.bf16.msra.mxu0 %v2057
    %2531 = vmatprep.subr.bf16.mxu0 %v2060
    %2532 = vmatpush1.bf16.msra.mxu0 %v2059
    %2533 = vmatprep.subr.bf16.mxu0 %v2062
    %2534 = vmatpush1.bf16.msra.mxu0 %v2061
    %2535 = vmatprep.subr.bf16.mxu0 %v2064
    %2536 = vmatpush1.bf16.msra.mxu0 %v2063
    %2537 = vmatprep.subr.bf16.mxu0 %v2066
    %2538 = vmatpush1.bf16.msra.mxu0 %v2065
    %2539 = vmatprep.subr.bf16.mxu0 %v2068
    %2540 = vmatpush1.bf16.msra.mxu0 %v2067
    %2541 = vmatprep.subr.bf16.mxu0 %v2070
    %2542 = vmatpush1.bf16.msra.mxu0 %v2069
    %2543 = vmatprep.subr.bf16.mxu0 %v2072
    %2544 = vmatpush1.bf16.msra.mxu0 %v2071
    %2545 = vmatprep.subr.bf16.mxu0 0
    %2546 = vmatpush1.bf16.msra.mxu0 0
    %2547 = vmatprep.subr.bf16.mxu0 0
    %2548 = vmatpush1.bf16.msra.mxu0 0
    %2549 = vmatprep.subr.bf16.mxu0 0
    %2550 = vmatpush1.bf16.msra.mxu0 0
    %2551 = vmatprep.subr.bf16.mxu0 0
    %2552 = vmatpush1.bf16.msra.mxu0 0
    %2553 = vmatprep.subr.bf16.mxu0 0
    %2554 = vmatpush1.bf16.msra.mxu0 0
    %2555 = vmatprep.subr.bf16.mxu0 0
    %2556 = vmatpush1.bf16.msra.mxu0 0
    %2557 = vmatprep.subr.bf16.mxu0 0
    %2558 = vmatpush1.bf16.msra.mxu0 0
    %2559 = vmatprep.subr.bf16.mxu0 0
    %2560 = vmatpush1.bf16.msra.mxu0 0
    %2561 = vmatprep.mubr.bf16.mxu0 0
    %2562 = vmatmul.mubr.bf16.gmra.mrb[0].mxu0 %v2441
    %v2563 = vpop.f32.mrb[0].mxu0
    %v2564 = vadd.f32 %v2523, %v2563
    %v2565 = vpop.f32.mrb[0].mxu0
    %v2566 = vadd.f32 %v2525, %v2565
    %v2567 = vpop.f32.mrb[0].mxu0
    %v2568 = vpop.f32.mrb[0].mxu0
    %2569 = vdwg.mxu0
    %v2570 = vmax.f32 %v2564, %v2566
    %v2571 = vld [vmem:[#allocation2 + $0xc] sm:$0xff]
    %v2572 = vld [vmem:[#allocation2 + $0x14] sm:$0xff]
    %v2573 = vld [vmem:[#allocation2 + $0x1c] sm:$0xf]
    %v2577 = vunpack.c.l.b16 %v2571
    %v2578 = vunpack.c.h.b16 %v2571
    %v2579 = vunpack.c.l.b16 %v2572
    %v2580 = vunpack.c.h.b16 %v2572
    %v2581 = vunpack.c.l.b16 %v2573
    %v2582 = vpack.c.b16 %v2577, %v2577
    %v2583 = vpack.c.b16 %v2578, %v2578
    %v2584 = vpack.c.b16 %v2579, %v2579
    %v2585 = vpack.c.b16 %v2580, %v2580
    %v2586 = vpack.c.b16 %v2581, %v2581
    %2592 = vmatprep.subr.bf16.mxu0 %v1994
    %2593 = vmatpush1.bf16.msra.mxu0 %v1993
    %2594 = vmatprep.subr.bf16.mxu0 %v1996
    %2595 = vmatpush1.bf16.msra.mxu0 %v1995
    %2596 = vmatprep.subr.bf16.mxu0 %v1998
    %2597 = vmatpush1.bf16.msra.mxu0 %v1997
    %2598 = vmatprep.subr.bf16.mxu0 %v2000
    %2599 = vmatpush1.bf16.msra.mxu0 %v1999
    %2600 = vmatprep.subr.bf16.mxu0 %v2002
    %2601 = vmatpush1.bf16.msra.mxu0 %v2001
    %2602 = vmatprep.subr.bf16.mxu0 %v2004
    %2603 = vmatpush1.bf16.msra.mxu0 %v2003
    %2604 = vmatprep.subr.bf16.mxu0 %v2006
    %2605 = vmatpush1.bf16.msra.mxu0 %v2005
    %2606 = vmatprep.subr.bf16.mxu0 %v2008
    %2607 = vmatpush1.bf16.msra.mxu0 %v2007
    %2608 = vmatprep.subr.bf16.mxu0 %v2010
    %2609 = vmatpush1.bf16.msra.mxu0 %v2009
    %2610 = vmatprep.subr.bf16.mxu0 %v2012
    %2611 = vmatpush1.bf16.msra.mxu0 %v2011
    %2612 = vmatprep.subr.bf16.mxu0 %v2014
    %2613 = vmatpush1.bf16.msra.mxu0 %v2013
    %2614 = vmatprep.subr.bf16.mxu0 %v2016
    %2615 = vmatpush1.bf16.msra.mxu0 %v2015
    %2616 = vmatprep.subr.bf16.mxu0 %v2018
    %2617 = vmatpush1.bf16.msra.mxu0 %v2017
    %2618 = vmatprep.subr.bf16.mxu0 %v2020
    %2619 = vmatpush1.bf16.msra.mxu0 %v2019
    %2620 = vmatprep.subr.bf16.mxu0 %v2022
    %2621 = vmatpush1.bf16.msra.mxu0 %v2021
    %2622 = vmatprep.subr.bf16.mxu0 %v2024
    %2623 = vmatpush1.bf16.msra.mxu0 %v2023
    %2624 = vmatprep.mubr.bf16.mxu0 %v2583
    %2625 = vmatmul.mubr.bf16.gmra.mrb[0].mxu0 %v2582
    %v2626 = vpop.f32.mrb[0].mxu0
    %v2627 = vadd.f32 %v1728, %v2626
    %v2628 = vpop.f32.mrb[0].mxu0
    %v2629 = vadd.f32 %v1732, %v2628
    %v2630 = vpop.f32.mrb[0].mxu0
    %v2631 = vpop.f32.mrb[0].mxu0
    %2632 = vdwg.mxu0
    %2633 = vmatprep.subr.bf16.mxu0 %v2026
    %2634 = vmatpush1.bf16.msra.mxu0 %v2025
    %2635 = vmatprep.subr.bf16.mxu0 %v2028
    %2636 = vmatpush1.bf16.msra.mxu0 %v2027
    %2637 = vmatprep.subr.bf16.mxu0 %v2030
    %2638 = vmatpush1.bf16.msra.mxu0 %v2029
    %2639 = vmatprep.subr.bf16.mxu0 %v2032
    %2640 = vmatpush1.bf16.msra.mxu0 %v2031
    %2641 = vmatprep.subr.bf16.mxu0 %v2034
    %2642 = vmatpush1.bf16.msra.mxu0 %v2033
    %2643 = vmatprep.subr.bf16.mxu0 %v2036
    %2644 = vmatpush1.bf16.msra.mxu0 %v2035
    %2645 = vmatprep.subr.bf16.mxu0 %v2038
    %2646 = vmatpush1.bf16.msra.mxu0 %v2037
    %2647 = vmatprep.subr.bf16.mxu0 %v2040
    %2648 = vmatpush1.bf16.msra.mxu0 %v2039
    %2649 = vmatprep.subr.bf16.mxu0 %v2042
    %2650 = vmatpush1.bf16.msra.mxu0 %v2041
    %2651 = vmatprep.subr.bf16.mxu0 %v2044
    %2652 = vmatpush1.bf16.msra.mxu0 %v2043
    %2653 = vmatprep.subr.bf16.mxu0 %v2046
    %2654 = vmatpush1.bf16.msra.mxu0 %v2045
    %2655 = vmatprep.subr.bf16.mxu0 %v2048
    %2656 = vmatpush1.bf16.msra.mxu0 %v2047
    %2657 = vmatprep.subr.bf16.mxu0 %v2050
    %2658 = vmatpush1.bf16.msra.mxu0 %v2049
    %2659 = vmatprep.subr.bf16.mxu0 %v2052
    %2660 = vmatpush1.bf16.msra.mxu0 %v2051
    %2661 = vmatprep.subr.bf16.mxu0 %v2054
    %2662 = vmatpush1.bf16.msra.mxu0 %v2053
    %2663 = vmatprep.subr.bf16.mxu0 %v2056
    %2664 = vmatpush1.bf16.msra.mxu0 %v2055
    %2665 = vmatprep.mubr.bf16.mxu0 %v2585
    %2666 = vmatmul.mubr.bf16.gmra.mrb[0].mxu0 %v2584
    %v2667 = vpop.f32.mrb[0].mxu0
    %v2668 = vadd.f32 %v2627, %v2667
    %v2669 = vpop.f32.mrb[0].mxu0
    %v2670 = vadd.f32 %v2629, %v2669
    %v2671 = vpop.f32.mrb[0].mxu0
    %v2672 = vpop.f32.mrb[0].mxu0
    %2673 = vdwg.mxu0
    %2674 = vmatprep.subr.bf16.mxu0 %v2058
    %2675 = vmatpush1.bf16.msra.mxu0 %v2057
    %2676 = vmatprep.subr.bf16.mxu0 %v2060
    %2677 = vmatpush1.bf16.msra.mxu0 %v2059
    %2678 = vmatprep.subr.bf16.mxu0 %v2062
    %2679 = vmatpush1.bf16.msra.mxu0 %v2061
    %2680 = vmatprep.subr.bf16.mxu0 %v2064
    %2681 = vmatpush1.bf16.msra.mxu0 %v2063
    %2682 = vmatprep.subr.bf16.mxu0 %v2066
    %2683 = vmatpush1.bf16.msra.mxu0 %v2065
    %2684 = vmatprep.subr.bf16.mxu0 %v2068
    %2685 = vmatpush1.bf16.msra.mxu0 %v2067
    %2686 = vmatprep.subr.bf16.mxu0 %v2070
    %2687 = vmatpush1.bf16.msra.mxu0 %v2069
    %2688 = vmatprep.subr.bf16.mxu0 %v2072
    %2689 = vmatpush1.bf16.msra.mxu0 %v2071
    %2690 = vmatprep.subr.bf16.mxu0 0
    %2691 = vmatpush1.bf16.msra.mxu0 0
    %2692 = vmatprep.subr.bf16.mxu0 0
    %2693 = vmatpush1.bf16.msra.mxu0 0
    %2694 = vmatprep.subr.bf16.mxu0 0
    %2695 = vmatpush1.bf16.msra.mxu0 0
    %2696 = vmatprep.subr.bf16.mxu0 0
    %2697 = vmatpush1.bf16.msra.mxu0 0
    %2698 = vmatprep.subr.bf16.mxu0 0
    %2699 = vmatpush1.bf16.msra.mxu0 0
    %2700 = vmatprep.subr.bf16.mxu0 0
    %2701 = vmatpush1.bf16.msra.mxu0 0
    %2702 = vmatprep.subr.bf16.mxu0 0
    %2703 = vmatpush1.bf16.msra.mxu0 0
    %2704 = vmatprep.subr.bf16.mxu0 0
    %2705 = vmatpush1.bf16.msra.mxu0 0
    %2706 = vmatprep.mubr.bf16.mxu0 0
    %2707 = vmatmul.mubr.bf16.gmra.mrb[0].mxu0 %v2586
    %v2708 = vpop.f32.mrb[0].mxu0
    %v2709 = vadd.f32 %v2668, %v2708
    %v2710 = vpop.f32.mrb[0].mxu0
    %v2711 = vadd.f32 %v2670, %v2710
    %v2712 = vpop.f32.mrb[0].mxu0
    %v2713 = vpop.f32.mrb[0].mxu0
    %2714 = vdwg.mxu0
    %v2715 = vmax.f32 %v2709, %v2711
    %v2716 = vmax.f32 %v2570, %v2715
    %v2717 = vmax.f32 %v2716, 0.0
    %v2718 = vpack.c.bf16 %v2717, %v2717
    %2719 = vst [vmem:[#allocation3 + $0x4] sm:$0xf] %v2718
    %v2720 = vld [vmem:[#allocation2 + $0x10] sm:$0xff]
    %v2721 = vld [vmem:[#allocation2 + $0x18] sm:$0xff]
    %v2722 = vld [vmem:[#allocation2 + $0x20] sm:$0xf]
    %v2726 = vunpack.c.l.b16 %v2720
    %v2727 = vunpack.c.h.b16 %v2720
    %v2728 = vunpack.c.l.b16 %v2721
    %v2729 = vunpack.c.h.b16 %v2721
    %v2730 = vunpack.c.l.b16 %v2722
    %v2731 = vpack.c.b16 %v2726, %v2726
    %v2732 = vpack.c.b16 %v2727, %v2727
    %v2733 = vpack.c.b16 %v2728, %v2728
    %v2734 = vpack.c.b16 %v2729, %v2729
    %v2735 = vpack.c.b16 %v2730, %v2730
    %2741 = vmatprep.subr.bf16.mxu0 %v1994
    %2742 = vmatpush1.bf16.msra.mxu0 %v1993
    %2743 = vmatprep.subr.bf16.mxu0 %v1996
    %2744 = vmatpush1.bf16.msra.mxu0 %v1995
    %2745 = vmatprep.subr.bf16.mxu0 %v1998
    %2746 = vmatpush1.bf16.msra.mxu0 %v1997
    %2747 = vmatprep.subr.bf16.mxu0 %v2000
    %2748 = vmatpush1.bf16.msra.mxu0 %v1999
    %2749 = vmatprep.subr.bf16.mxu0 %v2002
    %2750 = vmatpush1.bf16.msra.mxu0 %v2001
    %2751 = vmatprep.subr.bf16.mxu0 %v2004
    %2752 = vmatpush1.bf16.msra.mxu0 %v2003
    %2753 = vmatprep.subr.bf16.mxu0 %v2006
    %2754 = vmatpush1.bf16.msra.mxu0 %v2005
    %2755 = vmatprep.subr.bf16.mxu0 %v2008
    %2756 = vmatpush1.bf16.msra.mxu0 %v2007
    %2757 = vmatprep.subr.bf16.mxu0 %v2010
    %2758 = vmatpush1.bf16.msra.mxu0 %v2009
    %2759 = vmatprep.subr.bf16.mxu0 %v2012
    %2760 = vmatpush1.bf16.msra.mxu0 %v2011
    %2761 = vmatprep.subr.bf16.mxu0 %v2014
    %2762 = vmatpush1.bf16.msra.mxu0 %v2013
    %2763 = vmatprep.subr.bf16.mxu0 %v2016
    %2764 = vmatpush1.bf16.msra.mxu0 %v2015
    %2765 = vmatprep.subr.bf16.mxu0 %v2018
    %2766 = vmatpush1.bf16.msra.mxu0 %v2017
    %2767 = vmatprep.subr.bf16.mxu0 %v2020
    %2768 = vmatpush1.bf16.msra.mxu0 %v2019
    %2769 = vmatprep.subr.bf16.mxu0 %v2022
    %2770 = vmatpush1.bf16.msra.mxu0 %v2021
    %2771 = vmatprep.subr.bf16.mxu0 %v2024
    %2772 = vmatpush1.bf16.msra.mxu0 %v2023
    %2773 = vmatprep.mubr.bf16.mxu0 %v2732
    %2774 = vmatmul.mubr.bf16.gmra.mrb[0].mxu0 %v2731
    %v2775 = vpop.f32.mrb[0].mxu0
    %v2776 = vadd.f32 %v1728, %v2775
    %v2777 = vpop.f32.mrb[0].mxu0
    %v2778 = vadd.f32 %v1732, %v2777
    %v2779 = vpop.f32.mrb[0].mxu0
    %v2780 = vpop.f32.mrb[0].mxu0
    %2781 = vdwg.mxu0
    %2782 = vmatprep.subr.bf16.mxu0 %v2026
    %2783 = vmatpush1.bf16.msra.mxu0 %v2025
    %2784 = vmatprep.subr.bf16.mxu0 %v2028
    %2785 = vmatpush1.bf16.msra.mxu0 %v2027
    %2786 = vmatprep.subr.bf16.mxu0 %v2030
    %2787 = vmatpush1.bf16.msra.mxu0 %v2029
    %2788 = vmatprep.subr.bf16.mxu0 %v2032
    %2789 = vmatpush1.bf16.msra.mxu0 %v2031
    %2790 = vmatprep.subr.bf16.mxu0 %v2034
    %2791 = vmatpush1.bf16.msra.mxu0 %v2033
    %2792 = vmatprep.subr.bf16.mxu0 %v2036
    %2793 = vmatpush1.bf16.msra.mxu0 %v2035
    %2794 = vmatprep.subr.bf16.mxu0 %v2038
    %2795 = vmatpush1.bf16.msra.mxu0 %v2037
    %2796 = vmatprep.subr.bf16.mxu0 %v2040
    %2797 = vmatpush1.bf16.msra.mxu0 %v2039
    %2798 = vmatprep.subr.bf16.mxu0 %v2042
    %2799 = vmatpush1.bf16.msra.mxu0 %v2041
    %2800 = vmatprep.subr.bf16.mxu0 %v2044
    %2801 = vmatpush1.bf16.msra.mxu0 %v2043
    %2802 = vmatprep.subr.bf16.mxu0 %v2046
    %2803 = vmatpush1.bf16.msra.mxu0 %v2045
    %2804 = vmatprep.subr.bf16.mxu0 %v2048
    %2805 = vmatpush1.bf16.msra.mxu0 %v2047
    %2806 = vmatprep.subr.bf16.mxu0 %v2050
    %2807 = vmatpush1.bf16.msra.mxu0 %v2049
    %2808 = vmatprep.subr.bf16.mxu0 %v2052
    %2809 = vmatpush1.bf16.msra.mxu0 %v2051
    %2810 = vmatprep.subr.bf16.mxu0 %v2054
    %2811 = vmatpush1.bf16.msra.mxu0 %v2053
    %2812 = vmatprep.subr.bf16.mxu0 %v2056
    %2813 = vmatpush1.bf16.msra.mxu0 %v2055
    %2814 = vmatprep.mubr.bf16.mxu0 %v2734
    %2815 = vmatmul.mubr.bf16.gmra.mrb[0].mxu0 %v2733
    %v2816 = vpop.f32.mrb[0].mxu0
    %v2817 = vadd.f32 %v2776, %v2816
    %v2818 = vpop.f32.mrb[0].mxu0
    %v2819 = vadd.f32 %v2778, %v2818
    %v2820 = vpop.f32.mrb[0].mxu0
    %v2821 = vpop.f32.mrb[0].mxu0
    %2822 = vdwg.mxu0
    %2823 = vmatprep.subr.bf16.mxu0 %v2058
    %2824 = vmatpush1.bf16.msra.mxu0 %v2057
    %2825 = vmatprep.subr.bf16.mxu0 %v2060
    %2826 = vmatpush1.bf16.msra.mxu0 %v2059
    %2827 = vmatprep.subr.bf16.mxu0 %v2062
    %2828 = vmatpush1.bf16.msra.mxu0 %v2061
    %2829 = vmatprep.subr.bf16.mxu0 %v2064
    %2830 = vmatpush1.bf16.msra.mxu0 %v2063
    %2831 = vmatprep.subr.bf16.mxu0 %v2066
    %2832 = vmatpush1.bf16.msra.mxu0 %v2065
    %2833 = vmatprep.subr.bf16.mxu0 %v2068
    %2834 = vmatpush1.bf16.msra.mxu0 %v2067
    %2835 = vmatprep.subr.bf16.mxu0 %v2070
    %2836 = vmatpush1.bf16.msra.mxu0 %v2069
    %2837 = vmatprep.subr.bf16.mxu0 %v2072
    %2838 = vmatpush1.bf16.msra.mxu0 %v2071
    %2839 = vmatprep.subr.bf16.mxu0 0
    %2840 = vmatpush1.bf16.msra.mxu0 0
    %2841 = vmatprep.subr.bf16.mxu0 0
    %2842 = vmatpush1.bf16.msra.mxu0 0
    %2843 = vmatprep.subr.bf16.mxu0 0
    %2844 = vmatpush1.bf16.msra.mxu0 0
    %2845 = vmatprep.subr.bf16.mxu0 0
    %2846 = vmatpush1.bf16.msra.mxu0 0
    %2847 = vmatprep.subr.bf16.mxu0 0
    %2848 = vmatpush1.bf16.msra.mxu0 0
    %2849 = vmatprep.subr.bf16.mxu0 0
    %2850 = vmatpush1.bf16.msra.mxu0 0
    %2851 = vmatprep.subr.bf16.mxu0 0
    %2852 = vmatpush1.bf16.msra.mxu0 0
    %2853 = vmatprep.subr.bf16.mxu0 0
    %2854 = vmatpush1.bf16.msra.mxu0 0
    %2855 = vmatprep.mubr.bf16.mxu0 0
    %2856 = vmatmul.mubr.bf16.gmra.mrb[0].mxu0 %v2735
    %v2857 = vpop.f32.mrb[0].mxu0
    %v2858 = vadd.f32 %v2817, %v2857
    %v2859 = vpop.f32.mrb[0].mxu0
    %v2860 = vadd.f32 %v2819, %v2859
    %v2861 = vpop.f32.mrb[0].mxu0
    %v2862 = vpop.f32.mrb[0].mxu0
    %2863 = vdwg.mxu0
    %v2864 = vmax.f32 %v2858, %v2860
    %v2865 = vld [vmem:[#allocation2 + $0x14] sm:$0xff]
    %v2866 = vld [vmem:[#allocation2 + $0x1c] sm:$0xff]
    %v2867 = vld [vmem:[#allocation2 + $0x24] sm:$0xf]
    %v2871 = vunpack.c.l.b16 %v2865
    %v2872 = vunpack.c.h.b16 %v2865
    %v2873 = vunpack.c.l.b16 %v2866
    %v2874 = vunpack.c.h.b16 %v2866
    %v2875 = vunpack.c.l.b16 %v2867
    %v2876 = vpack.c.b16 %v2871, %v2871
    %v2877 = vpack.c.b16 %v2872, %v2872
    %v2878 = vpack.c.b16 %v2873, %v2873
    %v2879 = vpack.c.b16 %v2874, %v2874
    %v2880 = vpack.c.b16 %v2875, %v2875
    %2886 = vmatprep.subr.bf16.mxu0 %v1994
    %2887 = vmatpush1.bf16.msra.mxu0 %v1993
    %2888 = vmatprep.subr.bf16.mxu0 %v1996
    %2889 = vmatpush1.bf16.msra.mxu0 %v1995
    %2890 = vmatprep.subr.bf16.mxu0 %v1998
    %2891 = vmatpush1.bf16.msra.mxu0 %v1997
    %2892 = vmatprep.subr.bf16.mxu0 %v2000
    %2893 = vmatpush1.bf16.msra.mxu0 %v1999
    %2894 = vmatprep.subr.bf16.mxu0 %v2002
    %2895 = vmatpush1.bf16.msra.mxu0 %v2001
    %2896 = vmatprep.subr.bf16.mxu0 %v2004
    %2897 = vmatpush1.bf16.msra.mxu0 %v2003
    %2898 = vmatprep.subr.bf16.mxu0 %v2006
    %2899 = vmatpush1.bf16.msra.mxu0 %v2005
    %2900 = vmatprep.subr.bf16.mxu0 %v2008
    %2901 = vmatpush1.bf16.msra.mxu0 %v2007
    %2902 = vmatprep.subr.bf16.mxu0 %v2010
    %2903 = vmatpush1.bf16.msra.mxu0 %v2009
    %2904 = vmatprep.subr.bf16.mxu0 %v2012
    %2905 = vmatpush1.bf16.msra.mxu0 %v2011
    %2906 = vmatprep.subr.bf16.mxu0 %v2014
    %2907 = vmatpush1.bf16.msra.mxu0 %v2013
    %2908 = vmatprep.subr.bf16.mxu0 %v2016
    %2909 = vmatpush1.bf16.msra.mxu0 %v2015
    %2910 = vmatprep.subr.bf16.mxu0 %v2018
    %2911 = vmatpush1.bf16.msra.mxu0 %v2017
    %2912 = vmatprep.subr.bf16.mxu0 %v2020
    %2913 = vmatpush1.bf16.msra.mxu0 %v2019
    %2914 = vmatprep.subr.bf16.mxu0 %v2022
    %2915 = vmatpush1.bf16.msra.mxu0 %v2021
    %2916 = vmatprep.subr.bf16.mxu0 %v2024
    %2917 = vmatpush1.bf16.msra.mxu0 %v2023
    %2918 = vmatprep.mubr.bf16.mxu0 %v2877
    %2919 = vmatmul.mubr.bf16.gmra.mrb[0].mxu0 %v2876
    %v2920 = vpop.f32.mrb[0].mxu0
    %v2921 = vadd.f32 %v1728, %v2920
    %v2922 = vpop.f32.mrb[0].mxu0
    %v2923 = vadd.f32 %v1732, %v2922
    %v2924 = vpop.f32.mrb[0].mxu0
    %v2925 = vpop.f32.mrb[0].mxu0
    %2926 = vdwg.mxu0
    %2927 = vmatprep.subr.bf16.mxu0 %v2026
    %2928 = vmatpush1.bf16.msra.mxu0 %v2025
    %2929 = vmatprep.subr.bf16.mxu0 %v2028
    %2930 = vmatpush1.bf16.msra.mxu0 %v2027
    %2931 = vmatprep.subr.bf16.mxu0 %v2030
    %2932 = vmatpush1.bf16.msra.mxu0 %v2029
    %2933 = vmatprep.subr.bf16.mxu0 %v2032
    %2934 = vmatpush1.bf16.msra.mxu0 %v2031
    %2935 = vmatprep.subr.bf16.mxu0 %v2034
    %2936 = vmatpush1.bf16.msra.mxu0 %v2033
    %2937 = vmatprep.subr.bf16.mxu0 %v2036
    %2938 = vmatpush1.bf16.msra.mxu0 %v2035
    %2939 = vmatprep.subr.bf16.mxu0 %v2038
    %2940 = vmatpush1.bf16.msra.mxu0 %v2037
    %2941 = vmatprep.subr.bf16.mxu0 %v2040
    %2942 = vmatpush1.bf16.msra.mxu0 %v2039
    %2943 = vmatprep.subr.bf16.mxu0 %v2042
    %2944 = vmatpush1.bf16.msra.mxu0 %v2041
    %2945 = vmatprep.subr.bf16.mxu0 %v2044
    %2946 = vmatpush1.bf16.msra.mxu0 %v2043
    %2947 = vmatprep.subr.bf16.mxu0 %v2046
    %2948 = vmatpush1.bf16.msra.mxu0 %v2045
    %2949 = vmatprep.subr.bf16.mxu0 %v2048
    %2950 = vmatpush1.bf16.msra.mxu0 %v2047
    %2951 = vmatprep.subr.bf16.mxu0 %v2050
    %2952 = vmatpush1.bf16.msra.mxu0 %v2049
    %2953 = vmatprep.subr.bf16.mxu0 %v2052
    %2954 = vmatpush1.bf16.msra.mxu0 %v2051
    %2955 = vmatprep.subr.bf16.mxu0 %v2054
    %2956 = vmatpush1.bf16.msra.mxu0 %v2053
    %2957 = vmatprep.subr.bf16.mxu0 %v2056
    %2958 = vmatpush1.bf16.msra.mxu0 %v2055
    %2959 = vmatprep.mubr.bf16.mxu0 %v2879
    %2960 = vmatmul.mubr.bf16.gmra.mrb[0].mxu0 %v2878
    %v2961 = vpop.f32.mrb[0].mxu0
    %v2962 = vadd.f32 %v2921, %v2961
    %v2963 = vpop.f32.mrb[0].mxu0
    %v2964 = vadd.f32 %v2923, %v2963
    %v2965 = vpop.f32.mrb[0].mxu0
    %v2966 = vpop.f32.mrb[0].mxu0
    %2967 = vdwg.mxu0
    %2968 = vmatprep.subr.bf16.mxu0 %v2058
    %2969 = vmatpush1.bf16.msra.mxu0 %v2057
    %2970 = vmatprep.subr.bf16.mxu0 %v2060
    %2971 = vmatpush1.bf16.msra.mxu0 %v2059
    %2972 = vmatprep.subr.bf16.mxu0 %v2062
    %2973 = vmatpush1.bf16.msra.mxu0 %v2061
    %2974 = vmatprep.subr.bf16.mxu0 %v2064
    %2975 = vmatpush1.bf16.msra.mxu0 %v2063
    %2976 = vmatprep.subr.bf16.mxu0 %v2066
    %2977 = vmatpush1.bf16.msra.mxu0 %v2065
    %2978 = vmatprep.subr.bf16.mxu0 %v2068
    %2979 = vmatpush1.bf16.msra.mxu0 %v2067
    %2980 = vmatprep.subr.bf16.mxu0 %v2070
    %2981 = vmatpush1.bf16.msra.mxu0 %v2069
    %2982 = vmatprep.subr.bf16.mxu0 %v2072
    %2983 = vmatpush1.bf16.msra.mxu0 %v2071
    %2984 = vmatprep.subr.bf16.mxu0 0
    %2985 = vmatpush1.bf16.msra.mxu0 0
    %2986 = vmatprep.subr.bf16.mxu0 0
    %2987 = vmatpush1.bf16.msra.mxu0 0
    %2988 = vmatprep.subr.bf16.mxu0 0
    %2989 = vmatpush1.bf16.msra.mxu0 0
    %2990 = vmatprep.subr.bf16.mxu0 0
    %2991 = vmatpush1.bf16.msra.mxu0 0
    %2992 = vmatprep.subr.bf16.mxu0 0
    %2993 = vmatpush1.bf16.msra.mxu0 0
    %2994 = vmatprep.subr.bf16.mxu0 0
    %2995 = vmatpush1.bf16.msra.mxu0 0
    %2996 = vmatprep.subr.bf16.mxu0 0
    %2997 = vmatpush1.bf16.msra.mxu0 0
    %2998 = vmatprep.subr.bf16.mxu0 0
    %2999 = vmatpush1.bf16.msra.mxu0 0
    %3000 = vmatprep.mubr.bf16.mxu0 0
    %3001 = vmatmul.mubr.bf16.gmra.mrb[0].mxu0 %v2880
    %v3002 = vpop.f32.mrb[0].mxu0
    %v3003 = vadd.f32 %v2962, %v3002
    %v3004 = vpop.f32.mrb[0].mxu0
    %v3005 = vadd.f32 %v2964, %v3004
    %v3006 = vpop.f32.mrb[0].mxu0
    %v3007 = vpop.f32.mrb[0].mxu0
    %3008 = vdwg.mxu0
    %v3009 = vmax.f32 %v3003, %v3005
    %v3010 = vmax.f32 %v2864, %v3009
    %v3011 = vmax.f32 %v3010, 0.0
    %v3012 = vpack.c.bf16 %v3011, %v3011
    %3013 = vst [vmem:[#allocation3 + $0x8] sm:$0xf] %v3012
    %v3014 = vld [vmem:[#allocation2 + $0x18] sm:$0xff]
    %v3015 = vld [vmem:[#allocation2 + $0x20] sm:$0xff]
    %v3016 = vld [vmem:[#allocation2 + $0x28] sm:$0xf]
    %v3020 = vunpack.c.l.b16 %v3014
    %v3021 = vunpack.c.h.b16 %v3014
    %v3022 = vunpack.c.l.b16 %v3015
    %v3023 = vunpack.c.h.b16 %v3015
    %v3024 = vunpack.c.l.b16 %v3016
    %v3025 = vpack.c.b16 %v3020, %v3020
    %v3026 = vpack.c.b16 %v3021, %v3021
    %v3027 = vpack.c.b16 %v3022, %v3022
    %v3028 = vpack.c.b16 %v3023, %v3023
    %v3029 = vpack.c.b16 %v3024, %v3024
    %3035 = vmatprep.subr.bf16.mxu0 %v1994
    %3036 = vmatpush1.bf16.msra.mxu0 %v1993
    %3037 = vmatprep.subr.bf16.mxu0 %v1996
    %3038 = vmatpush1.bf16.msra.mxu0 %v1995
    %3039 = vmatprep.subr.bf16.mxu0 %v1998
    %3040 = vmatpush1.bf16.msra.mxu0 %v1997
    %3041 = vmatprep.subr.bf16.mxu0 %v2000
    %3042 = vmatpush1.bf16.msra.mxu0 %v1999
    %3043 = vmatprep.subr.bf16.mxu0 %v2002
    %3044 = vmatpush1.bf16.msra.mxu0 %v2001
    %3045 = vmatprep.subr.bf16.mxu0 %v2004
    %3046 = vmatpush1.bf16.msra.mxu0 %v2003
    %3047 = vmatprep.subr.bf16.mxu0 %v2006
    %3048 = vmatpush1.bf16.msra.mxu0 %v2005
    %3049 = vmatprep.subr.bf16.mxu0 %v2008
    %3050 = vmatpush1.bf16.msra.mxu0 %v2007
    %3051 = vmatprep.subr.bf16.mxu0 %v2010
    %3052 = vmatpush1.bf16.msra.mxu0 %v2009
    %3053 = vmatprep.subr.bf16.mxu0 %v2012
    %3054 = vmatpush1.bf16.msra.mxu0 %v2011
    %3055 = vmatprep.subr.bf16.mxu0 %v2014
    %3056 = vmatpush1.bf16.msra.mxu0 %v2013
    %3057 = vmatprep.subr.bf16.mxu0 %v2016
    %3058 = vmatpush1.bf16.msra.mxu0 %v2015
    %3059 = vmatprep.subr.bf16.mxu0 %v2018
    %3060 = vmatpush1.bf16.msra.mxu0 %v2017
    %3061 = vmatprep.subr.bf16.mxu0 %v2020
    %3062 = vmatpush1.bf16.msra.mxu0 %v2019
    %3063 = vmatprep.subr.bf16.mxu0 %v2022
    %3064 = vmatpush1.bf16.msra.mxu0 %v2021
    %3065 = vmatprep.subr.bf16.mxu0 %v2024
    %3066 = vmatpush1.bf16.msra.mxu0 %v2023
    %3067 = vmatprep.mubr.bf16.mxu0 %v3026
    %3068 = vmatmul.mubr.bf16.gmra.mrb[0].mxu0 %v3025
    %v3069 = vpop.f32.mrb[0].mxu0
    %v3070 = vadd.f32 %v1728, %v3069
    %v3071 = vpop.f32.mrb[0].mxu0
    %v3072 = vadd.f32 %v1732, %v3071
    %v3073 = vpop.f32.mrb[0].mxu0
    %v3074 = vpop.f32.mrb[0].mxu0
    %3075 = vdwg.mxu0
    %3076 = vmatprep.subr.bf16.mxu0 %v2026
    %3077 = vmatpush1.bf16.msra.mxu0 %v2025
    %3078 = vmatprep.subr.bf16.mxu0 %v2028
    %3079 = vmatpush1.bf16.msra.mxu0 %v2027
    %3080 = vmatprep.subr.bf16.mxu0 %v2030
    %3081 = vmatpush1.bf16.msra.mxu0 %v2029
    %3082 = vmatprep.subr.bf16.mxu0 %v2032
    %3083 = vmatpush1.bf16.msra.mxu0 %v2031
    %3084 = vmatprep.subr.bf16.mxu0 %v2034
    %3085 = vmatpush1.bf16.msra.mxu0 %v2033
    %3086 = vmatprep.subr.bf16.mxu0 %v2036
    %3087 = vmatpush1.bf16.msra.mxu0 %v2035
    %3088 = vmatprep.subr.bf16.mxu0 %v2038
    %3089 = vmatpush1.bf16.msra.mxu0 %v2037
    %3090 = vmatprep.subr.bf16.mxu0 %v2040
    %3091 = vmatpush1.bf16.msra.mxu0 %v2039
    %3092 = vmatprep.subr.bf16.mxu0 %v2042
    %3093 = vmatpush1.bf16.msra.mxu0 %v2041
    %3094 = vmatprep.subr.bf16.mxu0 %v2044
    %3095 = vmatpush1.bf16.msra.mxu0 %v2043
    %3096 = vmatprep.subr.bf16.mxu0 %v2046
    %3097 = vmatpush1.bf16.msra.mxu0 %v2045
    %3098 = vmatprep.subr.bf16.mxu0 %v2048
    %3099 = vmatpush1.bf16.msra.mxu0 %v2047
    %3100 = vmatprep.subr.bf16.mxu0 %v2050
    %3101 = vmatpush1.bf16.msra.mxu0 %v2049
    %3102 = vmatprep.subr.bf16.mxu0 %v2052
    %3103 = vmatpush1.bf16.msra.mxu0 %v2051
    %3104 = vmatprep.subr.bf16.mxu0 %v2054
    %3105 = vmatpush1.bf16.msra.mxu0 %v2053
    %3106 = vmatprep.subr.bf16.mxu0 %v2056
    %3107 = vmatpush1.bf16.msra.mxu0 %v2055
    %3108 = vmatprep.mubr.bf16.mxu0 %v3028
    %3109 = vmatmul.mubr.bf16.gmra.mrb[0].mxu0 %v3027
    %v3110 = vpop.f32.mrb[0].mxu0
    %v3111 = vadd.f32 %v3070, %v3110
    %v3112 = vpop.f32.mrb[0].mxu0
    %v3113 = vadd.f32 %v3072, %v3112
    %v3114 = vpop.f32.mrb[0].mxu0
    %v3115 = vpop.f32.mrb[0].mxu0
    %3116 = vdwg.mxu0
    %3117 = vmatprep.subr.bf16.mxu0 %v2058
    %3118 = vmatpush1.bf16.msra.mxu0 %v2057
    %3119 = vmatprep.subr.bf16.mxu0 %v2060
    %3120 = vmatpush1.bf16.msra.mxu0 %v2059
    %3121 = vmatprep.subr.bf16.mxu0 %v2062
    %3122 = vmatpush1.bf16.msra.mxu0 %v2061
    %3123 = vmatprep.subr.bf16.mxu0 %v2064
    %3124 = vmatpush1.bf16.msra.mxu0 %v2063
    %3125 = vmatprep.subr.bf16.mxu0 %v2066
    %3126 = vmatpush1.bf16.msra.mxu0 %v2065
    %3127 = vmatprep.subr.bf16.mxu0 %v2068
    %3128 = vmatpush1.bf16.msra.mxu0 %v2067
    %3129 = vmatprep.subr.bf16.mxu0 %v2070
    %3130 = vmatpush1.bf16.msra.mxu0 %v2069
    %3131 = vmatprep.subr.bf16.mxu0 %v2072
    %3132 = vmatpush1.bf16.msra.mxu0 %v2071
    %3133 = vmatprep.subr.bf16.mxu0 0
    %3134 = vmatpush1.bf16.msra.mxu0 0
    %3135 = vmatprep.subr.bf16.mxu0 0
    %3136 = vmatpush1.bf16.msra.mxu0 0
    %3137 = vmatprep.subr.bf16.mxu0 0
    %3138 = vmatpush1.bf16.msra.mxu0 0
    %3139 = vmatprep.subr.bf16.mxu0 0
    %3140 = vmatpush1.bf16.msra.mxu0 0
    %3141 = vmatprep.subr.bf16.mxu0 0
    %3142 = vmatpush1.bf16.msra.mxu0 0
    %3143 = vmatprep.subr.bf16.mxu0 0
    %3144 = vmatpush1.bf16.msra.mxu0 0
    %3145 = vmatprep.subr.bf16.mxu0 0
    %3146 = vmatpush1.bf16.msra.mxu0 0
    %3147 = vmatprep.subr.bf16.mxu0 0
    %3148 = vmatpush1.bf16.msra.mxu0 0
    %3149 = vmatprep.mubr.bf16.mxu0 0
    %3150 = vmatmul.mubr.bf16.gmra.mrb[0].mxu0 %v3029
    %v3151 = vpop.f32.mrb[0].mxu0
    %v3152 = vadd.f32 %v3111, %v3151
    %v3153 = vpop.f32.mrb[0].mxu0
    %v3154 = vadd.f32 %v3113, %v3153
    %v3155 = vpop.f32.mrb[0].mxu0
    %v3156 = vpop.f32.mrb[0].mxu0
    %3157 = vdwg.mxu0
    %v3158 = vmax.f32 %v3152, %v3154
    %v3159 = vld [vmem:[#allocation2 + $0x1c] sm:$0xff]
    %v3160 = vld [vmem:[#allocation2 + $0x24] sm:$0xff]
    %v3161 = vld [vmem:[#allocation2 + $0x2c] sm:$0xf]
    %v3165 = vunpack.c.l.b16 %v3159
    %v3166 = vunpack.c.h.b16 %v3159
    %v3167 = vunpack.c.l.b16 %v3160
    %v3168 = vunpack.c.h.b16 %v3160
    %v3169 = vunpack.c.l.b16 %v3161
    %v3170 = vpack.c.b16 %v3165, %v3165
    %v3171 = vpack.c.b16 %v3166, %v3166
    %v3172 = vpack.c.b16 %v3167, %v3167
    %v3173 = vpack.c.b16 %v3168, %v3168
    %v3174 = vpack.c.b16 %v3169, %v3169
    %3180 = vmatprep.subr.bf16.mxu0 %v1994
    %3181 = vmatpush1.bf16.msra.mxu0 %v1993
    %3182 = vmatprep.subr.bf16.mxu0 %v1996
    %3183 = vmatpush1.bf16.msra.mxu0 %v1995
    %3184 = vmatprep.subr.bf16.mxu0 %v1998
    %3185 = vmatpush1.bf16.msra.mxu0 %v1997
    %3186 = vmatprep.subr.bf16.mxu0 %v2000
    %3187 = vmatpush1.bf16.msra.mxu0 %v1999
    %3188 = vmatprep.subr.bf16.mxu0 %v2002
    %3189 = vmatpush1.bf16.msra.mxu0 %v2001
    %3190 = vmatprep.subr.bf16.mxu0 %v2004
    %3191 = vmatpush1.bf16.msra.mxu0 %v2003
    %3192 = vmatprep.subr.bf16.mxu0 %v2006
    %3193 = vmatpush1.bf16.msra.mxu0 %v2005
    %3194 = vmatprep.subr.bf16.mxu0 %v2008
    %3195 = vmatpush1.bf16.msra.mxu0 %v2007
    %3196 = vmatprep.subr.bf16.mxu0 %v2010
    %3197 = vmatpush1.bf16.msra.mxu0 %v2009
    %3198 = vmatprep.subr.bf16.mxu0 %v2012
    %3199 = vmatpush1.bf16.msra.mxu0 %v2011
    %3200 = vmatprep.subr.bf16.mxu0 %v2014
    %3201 = vmatpush1.bf16.msra.mxu0 %v2013
    %3202 = vmatprep.subr.bf16.mxu0 %v2016
    %3203 = vmatpush1.bf16.msra.mxu0 %v2015
    %3204 = vmatprep.subr.bf16.mxu0 %v2018
    %3205 = vmatpush1.bf16.msra.mxu0 %v2017
    %3206 = vmatprep.subr.bf16.mxu0 %v2020
    %3207 = vmatpush1.bf16.msra.mxu0 %v2019
    %3208 = vmatprep.subr.bf16.mxu0 %v2022
    %3209 = vmatpush1.bf16.msra.mxu0 %v2021
    %3210 = vmatprep.subr.bf16.mxu0 %v2024
    %3211 = vmatpush1.bf16.msra.mxu0 %v2023
    %3212 = vmatprep.mubr.bf16.mxu0 %v3171
    %3213 = vmatmul.mubr.bf16.gmra.mrb[0].mxu0 %v3170
    %v3214 = vpop.f32.mrb[0].mxu0
    %v3215 = vadd.f32 %v1728, %v3214
    %v3216 = vpop.f32.mrb[0].mxu0
    %v3217 = vadd.f32 %v1732, %v3216
    %v3218 = vpop.f32.mrb[0].mxu0
    %v3219 = vpop.f32.mrb[0].mxu0
    %3220 = vdwg.mxu0
    %3221 = vmatprep.subr.bf16.mxu0 %v2026
    %3222 = vmatpush1.bf16.msra.mxu0 %v2025
    %3223 = vmatprep.subr.bf16.mxu0 %v2028
    %3224 = vmatpush1.bf16.msra.mxu0 %v2027
    %3225 = vmatprep.subr.bf16.mxu0 %v2030
    %3226 = vmatpush1.bf16.msra.mxu0 %v2029
    %3227 = vmatprep.subr.bf16.mxu0 %v2032
    %3228 = vmatpush1.bf16.msra.mxu0 %v2031
    %3229 = vmatprep.subr.bf16.mxu0 %v2034
    %3230 = vmatpush1.bf16.msra.mxu0 %v2033
    %3231 = vmatprep.subr.bf16.mxu0 %v2036
    %3232 = vmatpush1.bf16.msra.mxu0 %v2035
    %3233 = vmatprep.subr.bf16.mxu0 %v2038
    %3234 = vmatpush1.bf16.msra.mxu0 %v2037
    %3235 = vmatprep.subr.bf16.mxu0 %v2040
    %3236 = vmatpush1.bf16.msra.mxu0 %v2039
    %3237 = vmatprep.subr.bf16.mxu0 %v2042
    %3238 = vmatpush1.bf16.msra.mxu0 %v2041
    %3239 = vmatprep.subr.bf16.mxu0 %v2044
    %3240 = vmatpush1.bf16.msra.mxu0 %v2043
    %3241 = vmatprep.subr.bf16.mxu0 %v2046
    %3242 = vmatpush1.bf16.msra.mxu0 %v2045
    %3243 = vmatprep.subr.bf16.mxu0 %v2048
    %3244 = vmatpush1.bf16.msra.mxu0 %v2047
    %3245 = vmatprep.subr.bf16.mxu0 %v2050
    %3246 = vmatpush1.bf16.msra.mxu0 %v2049
    %3247 = vmatprep.subr.bf16.mxu0 %v2052
    %3248 = vmatpush1.bf16.msra.mxu0 %v2051
    %3249 = vmatprep.subr.bf16.mxu0 %v2054
    %3250 = vmatpush1.bf16.msra.mxu0 %v2053
    %3251 = vmatprep.subr.bf16.mxu0 %v2056
    %3252 = vmatpush1.bf16.msra.mxu0 %v2055
    %3253 = vmatprep.mubr.bf16.mxu0 %v3173
    %3254 = vmatmul.mubr.bf16.gmra.mrb[0].mxu0 %v3172
    %v3255 = vpop.f32.mrb[0].mxu0
    %v3256 = vadd.f32 %v3215, %v3255
    %v3257 = vpop.f32.mrb[0].mxu0
    %v3258 = vadd.f32 %v3217, %v3257
    %v3259 = vpop.f32.mrb[0].mxu0
    %v3260 = vpop.f32.mrb[0].mxu0
    %3261 = vdwg.mxu0
    %3262 = vmatprep.subr.bf16.mxu0 %v2058
    %3263 = vmatpush1.bf16.msra.mxu0 %v2057
    %3264 = vmatprep.subr.bf16.mxu0 %v2060
    %3265 = vmatpush1.bf16.msra.mxu0 %v2059
    %3266 = vmatprep.subr.bf16.mxu0 %v2062
    %3267 = vmatpush1.bf16.msra.mxu0 %v2061
    %3268 = vmatprep.subr.bf16.mxu0 %v2064
    %3269 = vmatpush1.bf16.msra.mxu0 %v2063
    %3270 = vmatprep.subr.bf16.mxu0 %v2066
    %3271 = vmatpush1.bf16.msra.mxu0 %v2065
    %3272 = vmatprep.subr.bf16.mxu0 %v2068
    %3273 = vmatpush1.bf16.msra.mxu0 %v2067
    %3274 = vmatprep.subr.bf16.mxu0 %v2070
    %3275 = vmatpush1.bf16.msra.mxu0 %v2069
    %3276 = vmatprep.subr.bf16.mxu0 %v2072
    %3277 = vmatpush1.bf16.msra.mxu0 %v2071
    %3278 = vmatprep.subr.bf16.mxu0 0
    %3279 = vmatpush1.bf16.msra.mxu0 0
    %3280 = vmatprep.subr.bf16.mxu0 0
    %3281 = vmatpush1.bf16.msra.mxu0 0
    %3282 = vmatprep.subr.bf16.mxu0 0
    %3283 = vmatpush1.bf16.msra.mxu0 0
    %3284 = vmatprep.subr.bf16.mxu0 0
    %3285 = vmatpush1.bf16.msra.mxu0 0
    %3286 = vmatprep.subr.bf16.mxu0 0
    %3287 = vmatpush1.bf16.msra.mxu0 0
    %3288 = vmatprep.subr.bf16.mxu0 0
    %3289 = vmatpush1.bf16.msra.mxu0 0
    %3290 = vmatprep.subr.bf16.mxu0 0
    %3291 = vmatpush1.bf16.msra.mxu0 0
    %3292 = vmatprep.subr.bf16.mxu0 0
    %3293 = vmatpush1.bf16.msra.mxu0 0
    %3294 = vmatprep.mubr.bf16.mxu0 0
    %3295 = vmatmul.mubr.bf16.gmra.mrb[0].mxu0 %v3174
    %v3296 = vpop.f32.mrb[0].mxu0
    %v3297 = vadd.f32 %v3256, %v3296
    %v3298 = vpop.f32.mrb[0].mxu0
    %v3299 = vadd.f32 %v3258, %v3298
    %v3300 = vpop.f32.mrb[0].mxu0
    %v3301 = vpop.f32.mrb[0].mxu0
    %3302 = vdwg.mxu0
    %v3303 = vmax.f32 %v3297, %v3299
    %v3304 = vmax.f32 %v3158, %v3303
    %v3305 = vmax.f32 %v3304, 0.0
    %v3306 = vpack.c.bf16 %v3305, %v3305
    %3307 = vst [vmem:[#allocation3 + $0xc] sm:$0xf] %v3306
    %v3308 = vld [vmem:[#allocation3] sm:$0xff]
    %v3309 = vld [vmem:[#allocation3 + $0x8] sm:$0xff]
    %v3311 = vlaneseq
    %v3312 = vshrl.u32 %v3311, 7
    %v3313 = vsub.s32 0, %v3312
    %v3314 = vrot.slane %v218, %v3313
    %v3318 = vunpack.c.l.b16 %v3308
    %v3319 = vunpack.c.h.b16 %v3308
    %v3320 = vunpack.c.l.b16 %v3309
    %v3321 = vunpack.c.h.b16 %v3309
    %v3322 = vpack.c.b16 %v3318, %v3318
    %v3323 = vpack.c.b16 %v3319, %v3319
    %v3324 = vpack.c.b16 %v3320, %v3320
    %v3325 = vpack.c.b16 %v3321, %v3321
    %v3394 = vunpack.c.l.b16 %v145
    %v3395 = vunpack.c.l.b16 %v146
    %v3396 = vunpack.c.l.b16 %v147
    %v3397 = vunpack.c.l.b16 %v148
    %v3398 = vunpack.c.l.b16 %v149
    %v3399 = vunpack.c.l.b16 %v150
    %v3400 = vunpack.c.l.b16 %v151
    %v3401 = vunpack.c.l.b16 %v152
    %v3402 = vunpack.c.l.b16 %v153
    %v3403 = vunpack.c.l.b16 %v154
    %v3404 = vunpack.c.l.b16 %v155
    %v3405 = vunpack.c.l.b16 %v156
    %v3406 = vunpack.c.l.b16 %v157
    %v3407 = vunpack.c.l.b16 %v158
    %v3408 = vunpack.c.l.b16 %v159
    %v3409 = vunpack.c.l.b16 %v160
    %v3410 = vunpack.c.l.b16 %v161
    %v3411 = vunpack.c.l.b16 %v162
    %v3412 = vunpack.c.l.b16 %v163
    %v3413 = vunpack.c.l.b16 %v164
    %v3414 = vunpack.c.l.b16 %v165
    %v3415 = vunpack.c.l.b16 %v166
    %v3416 = vunpack.c.l.b16 %v167
    %v3417 = vunpack.c.l.b16 %v168
    %v3418 = vunpack.c.l.b16 %v169
    %v3419 = vunpack.c.l.b16 %v170
    %v3420 = vunpack.c.l.b16 %v171
    %v3421 = vunpack.c.l.b16 %v172
    %v3422 = vunpack.c.l.b16 %v173
    %v3423 = vunpack.c.l.b16 %v174
    %v3424 = vunpack.c.l.b16 %v175
    %v3425 = vunpack.c.l.b16 %v176
    %v3426 = vunpack.c.l.b16 %v177
    %v3427 = vunpack.c.l.b16 %v178
    %v3428 = vunpack.c.l.b16 %v179
    %v3429 = vunpack.c.l.b16 %v180
    %v3430 = vunpack.c.l.b16 %v181
    %v3431 = vunpack.c.l.b16 %v182
    %v3432 = vunpack.c.l.b16 %v183
    %v3433 = vunpack.c.l.b16 %v184
    %v3434 = vunpack.c.l.b16 %v185
    %v3435 = vunpack.c.l.b16 %v186
    %v3436 = vunpack.c.l.b16 %v187
    %v3437 = vunpack.c.l.b16 %v188
    %v3438 = vunpack.c.l.b16 %v189
    %v3439 = vunpack.c.l.b16 %v190
    %v3440 = vunpack.c.l.b16 %v191
    %v3441 = vunpack.c.l.b16 %v192
    %v3442 = vunpack.c.l.b16 %v193
    %v3443 = vunpack.c.l.b16 %v194
    %v3444 = vunpack.c.l.b16 %v195
    %v3445 = vunpack.c.l.b16 %v196
    %v3446 = vunpack.c.l.b16 %v197
    %v3447 = vunpack.c.l.b16 %v198
    %v3448 = vunpack.c.l.b16 %v199
    %v3449 = vunpack.c.l.b16 %v200
    %v3450 = vunpack.c.l.b16 %v201
    %v3451 = vunpack.c.l.b16 %v202
    %v3452 = vunpack.c.l.b16 %v203
    %v3453 = vunpack.c.l.b16 %v204
    %v3454 = vunpack.c.l.b16 %v205
    %v3455 = vunpack.c.l.b16 %v206
    %v3456 = vunpack.c.l.b16 %v207
    %v3457 = vunpack.c.l.b16 %v208
    %v3458 = vpack.c.b16 %v3395, %v3394
    %v3459 = vpack.c.b16 %v3397, %v3396
    %v3460 = vpack.c.b16 %v3399, %v3398
    %v3461 = vpack.c.b16 %v3401, %v3400
    %v3462 = vpack.c.b16 %v3403, %v3402
    %v3463 = vpack.c.b16 %v3405, %v3404
    %v3464 = vpack.c.b16 %v3407, %v3406
    %v3465 = vpack.c.b16 %v3409, %v3408
    %v3466 = vpack.c.b16 %v3411, %v3410
    %v3467 = vpack.c.b16 %v3413, %v3412
    %v3468 = vpack.c.b16 %v3415, %v3414
    %v3469 = vpack.c.b16 %v3417, %v3416
    %v3470 = vpack.c.b16 %v3419, %v3418
    %v3471 = vpack.c.b16 %v3421, %v3420
    %v3472 = vpack.c.b16 %v3423, %v3422
    %v3473 = vpack.c.b16 %v3425, %v3424
    %v3474 = vpack.c.b16 %v3427, %v3426
    %v3475 = vpack.c.b16 %v3429, %v3428
    %v3476 = vpack.c.b16 %v3431, %v3430
    %v3477 = vpack.c.b16 %v3433, %v3432
    %v3478 = vpack.c.b16 %v3435, %v3434
    %v3479 = vpack.c.b16 %v3437, %v3436
    %v3480 = vpack.c.b16 %v3439, %v3438
    %v3481 = vpack.c.b16 %v3441, %v3440
    %v3482 = vpack.c.b16 %v3443, %v3442
    %v3483 = vpack.c.b16 %v3445, %v3444
    %v3484 = vpack.c.b16 %v3447, %v3446
    %v3485 = vpack.c.b16 %v3449, %v3448
    %v3486 = vpack.c.b16 %v3451, %v3450
    %v3487 = vpack.c.b16 %v3453, %v3452
    %v3488 = vpack.c.b16 %v3455, %v3454
    %v3489 = vpack.c.b16 %v3457, %v3456
    %3522 = vmatprep.subr.bf16.mxu0 0
    %3523 = vmatpush1.bf16.msra.mxu0 %v3458
    %3524 = vmatprep.subr.bf16.mxu0 0
    %3525 = vmatpush1.bf16.msra.mxu0 %v3459
    %3526 = vmatprep.subr.bf16.mxu0 0
    %3527 = vmatpush1.bf16.msra.mxu0 %v3460
    %3528 = vmatprep.subr.bf16.mxu0 0
    %3529 = vmatpush1.bf16.msra.mxu0 %v3461
    %3530 = vmatprep.subr.bf16.mxu0 0
    %3531 = vmatpush1.bf16.msra.mxu0 %v3462
    %3532 = vmatprep.subr.bf16.mxu0 0
    %3533 = vmatpush1.bf16.msra.mxu0 %v3463
    %3534 = vmatprep.subr.bf16.mxu0 0
    %3535 = vmatpush1.bf16.msra.mxu0 %v3464
    %3536 = vmatprep.subr.bf16.mxu0 0
    %3537 = vmatpush1.bf16.msra.mxu0 %v3465
    %3538 = vmatprep.subr.bf16.mxu0 0
    %3539 = vmatpush1.bf16.msra.mxu0 %v3466
    %3540 = vmatprep.subr.bf16.mxu0 0
    %3541 = vmatpush1.bf16.msra.mxu0 %v3467
    %3542 = vmatprep.subr.bf16.mxu0 0
    %3543 = vmatpush1.bf16.msra.mxu0 %v3468
    %3544 = vmatprep.subr.bf16.mxu0 0
    %3545 = vmatpush1.bf16.msra.mxu0 %v3469
    %3546 = vmatprep.subr.bf16.mxu0 0
    %3547 = vmatpush1.bf16.msra.mxu0 %v3470
    %3548 = vmatprep.subr.bf16.mxu0 0
    %3549 = vmatpush1.bf16.msra.mxu0 %v3471
    %3550 = vmatprep.subr.bf16.mxu0 0
    %3551 = vmatpush1.bf16.msra.mxu0 %v3472
    %3552 = vmatprep.subr.bf16.mxu0 0
    %3553 = vmatpush1.bf16.msra.mxu0 %v3473
    %3554 = vmatprep.mubr.bf16.mxu0 %v3323
    %3555 = vmatmul.mubr.bf16.gmra.mrb[0].mxu0 %v3322
    %v3556 = vpop.f32.mrb[0].mxu0
    %v3557 = vadd.f32 %v3314, %v3556
    %v3558 = vpop.f32.mrb[0].mxu0
    %v3559 = vpop.f32.mrb[0].mxu0
    %v3560 = vpop.f32.mrb[0].mxu0
    %3561 = vdwg.mxu0
    %3562 = vmatprep.subr.bf16.mxu0 0
    %3563 = vmatpush1.bf16.msra.mxu0 %v3474
    %3564 = vmatprep.subr.bf16.mxu0 0
    %3565 = vmatpush1.bf16.msra.mxu0 %v3475
    %3566 = vmatprep.subr.bf16.mxu0 0
    %3567 = vmatpush1.bf16.msra.mxu0 %v3476
    %3568 = vmatprep.subr.bf16.mxu0 0
    %3569 = vmatpush1.bf16.msra.mxu0 %v3477
    %3570 = vmatprep.subr.bf16.mxu0 0
    %3571 = vmatpush1.bf16.msra.mxu0 %v3478
    %3572 = vmatprep.subr.bf16.mxu0 0
    %3573 = vmatpush1.bf16.msra.mxu0 %v3479
    %3574 = vmatprep.subr.bf16.mxu0 0
    %3575 = vmatpush1.bf16.msra.mxu0 %v3480
    %3576 = vmatprep.subr.bf16.mxu0 0
    %3577 = vmatpush1.bf16.msra.mxu0 %v3481
    %3578 = vmatprep.subr.bf16.mxu0 0
    %3579 = vmatpush1.bf16.msra.mxu0 %v3482
    %3580 = vmatprep.subr.bf16.mxu0 0
    %3581 = vmatpush1.bf16.msra.mxu0 %v3483
    %3582 = vmatprep.subr.bf16.mxu0 0
    %3583 = vmatpush1.bf16.msra.mxu0 %v3484
    %3584 = vmatprep.subr.bf16.mxu0 0
    %3585 = vmatpush1.bf16.msra.mxu0 %v3485
    %3586 = vmatprep.subr.bf16.mxu0 0
    %3587 = vmatpush1.bf16.msra.mxu0 %v3486
    %3588 = vmatprep.subr.bf16.mxu0 0
    %3589 = vmatpush1.bf16.msra.mxu0 %v3487
    %3590 = vmatprep.subr.bf16.mxu0 0
    %3591 = vmatpush1.bf16.msra.mxu0 %v3488
    %3592 = vmatprep.subr.bf16.mxu0 0
    %3593 = vmatpush1.bf16.msra.mxu0 %v3489
    %3594 = vmatprep.mubr.bf16.mxu0 %v3325
    %3595 = vmatmul.mubr.bf16.gmra.mrb[0].mxu0 %v3324
    %v3596 = vpop.f32.mrb[0].mxu0
    %v3597 = vadd.f32 %v3557, %v3596
    %v3598 = vpop.f32.mrb[0].mxu0
    %v3599 = vpop.f32.mrb[0].mxu0
    %v3600 = vpop.f32.mrb[0].mxu0
    %3601 = vdwg.mxu0
    %v3602 = vmax.f32 %v3597, 0.0
    %v3603 = vpack.c.bf16 %v3602, %v3602
    %v3605 = vlaneseq
    %v3606 = vshrl.u32 %v3605, 7
    %v3607 = vsub.s32 0, %v3606
    %v3608 = vrot.slane %v219, %v3607
    %v3617 = vunpack.c.l.b16 %v209
    %v3618 = vunpack.c.l.b16 %v210
    %v3619 = vunpack.c.l.b16 %v211
    %v3620 = vunpack.c.l.b16 %v212
    %v3621 = vunpack.c.l.b16 %v213
    %v3622 = vunpack.c.l.b16 %v214
    %v3623 = vunpack.c.l.b16 %v215
    %v3624 = vpack.c.b16 %v3618, %v3617
    %v3625 = vpack.c.b16 %v3620, %v3619
    %v3626 = vpack.c.b16 %v3622, %v3621
    %v3627 = vpack.c.b16 %v3623, %v3623
    %vm3631 = vcmask 408576
    %v3633 = vsel %vm3631, %v3603, 0
    %vm3635 = vcmask 1040384
    %v3637 = vsel %vm3635, %v3627, 0
    %3639 = vmatprep.subr.bf16.mxu0 0
    %3640 = vmatpush1.bf16.msra.mxu0 %v3624
    %3641 = vmatprep.subr.bf16.mxu0 0
    %3642 = vmatpush1.bf16.msra.mxu0 %v3625
    %3643 = vmatprep.subr.bf16.mxu0 0
    %3644 = vmatpush1.bf16.msra.mxu0 %v3626
    %3645 = vmatprep.subr.bf16.mxu0 0
    %3646 = vmatpush1.bf16.msra.mxu0 %v3637
    %3647 = vmatprep.subr.bf16.mxu0 0
    %3648 = vmatpush1.bf16.msra.mxu0 0
    %3649 = vmatprep.subr.bf16.mxu0 0
    %3650 = vmatpush1.bf16.msra.mxu0 0
    %3651 = vmatprep.subr.bf16.mxu0 0
    %3652 = vmatpush1.bf16.msra.mxu0 0
    %3653 = vmatprep.subr.bf16.mxu0 0
    %3654 = vmatpush1.bf16.msra.mxu0 0
    %3655 = vmatprep.subr.bf16.mxu0 0
    %3656 = vmatpush1.bf16.msra.mxu0 0
    %3657 = vmatprep.subr.bf16.mxu0 0
    %3658 = vmatpush1.bf16.msra.mxu0 0
    %3659 = vmatprep.subr.bf16.mxu0 0
    %3660 = vmatpush1.bf16.msra.mxu0 0
    %3661 = vmatprep.subr.bf16.mxu0 0
    %3662 = vmatpush1.bf16.msra.mxu0 0
    %3663 = vmatprep.subr.bf16.mxu0 0
    %3664 = vmatpush1.bf16.msra.mxu0 0
    %3665 = vmatprep.subr.bf16.mxu0 0
    %3666 = vmatpush1.bf16.msra.mxu0 0
    %3667 = vmatprep.subr.bf16.mxu0 0
    %3668 = vmatpush1.bf16.msra.mxu0 0
    %3669 = vmatprep.subr.bf16.mxu0 0
    %3670 = vmatpush1.bf16.msra.mxu0 0
    %3671 = vmatprep.mubr.bf16.mxu0 0
    %3672 = vmatmul.mubr.bf16.gmra.mrb[0].mxu0 %v3633
    %v3673 = vpop.f32.mrb[0].mxu0
    %v3674 = vadd.f32 %v3608, %v3673
    %v3675 = vpop.f32.mrb[0].mxu0
    %v3676 = vpop.f32.mrb[0].mxu0
    %v3677 = vpop.f32.mrb[0].mxu0
    %3678 = vdwg.mxu0
    %3679 = vmax.xlane.f32.xlu0 %v3674
    %v3680 = vpop.xlane.xlu0 %3679
    %v3681 = vsub.f32 %v3674, %v3680
    %v3682 = vmul.f32 %v3681, 1.442695
    %v3683 = vpow.pop %v3682
    %3684 = vadd.xlane.f32.xlu0 %v3683
    %v3685 = vpop.xlane.xlu0 %3684
    %v3686 = vlog2.pop %v3685
    %v3687 = vmul.f32 %v3686, 0.6931472
    %v3688 = vsub.f32 %v3681, %v3687
    %3689 = vst [vmem:[%s9] sm:$0xff] %v3688
    // Predicated region
    $region42: #{net_forward.1} parent=1 // pred_check
      _
    $region43: #{net_forward.1} parent=1 // pred_check_branch
      %3691 = sbr.rel (0) target = $region45
    $region44: #{net_forward.1} parent=1 // pred_region
      _
    $region45: #{net_forward.1} parent=1 // pred_fallthru
      _
    // Predicated region
    $region46: #{net_forward.1} parent=1 // pred_check
      _
    $region47: #{net_forward.1} parent=1 // pred_check_branch
      %3693 = sbr.rel (0) target = $region49
    $region48: #{net_forward.1} parent=1 // pred_region
      _
    $region49: #{net_forward.1} parent=1 // pred_fallthru
      _
    %3694 = vsyncpa [#allocation5], 1

</llo_original>
